<compile_context>
chip_gen: v7x
topology: tpu7x:2x2x1
jax: 0.10.0
libtpu: 0.0.40
codegen_flags: <defaults>
</compile_context>

<pallas_src>
from functools import partial

import jax
import jax.numpy as jnp
from jax.experimental import pallas as pl
from jax.experimental.pallas import tpu as pltpu

NUM_CLASSES = 10
CAPS_DIM = 16
IN_DIM = NUM_CLASSES * CAPS_DIM            # 160
H1 = 512
H2 = 1024
MASK_PAD = 128                             # lane-dense one-hot output width


# ------------------------------ fused kernel ---------------------------------
def _decoder_kernel(x_ref, cmax_ref, cinv_ref, s_ref, e_ref,
                    w1_ref, b1_ref, w2_ref, b2_ref, w3_ref, b3_ref,
                    masked_ref, recon_ref):
    f32 = jnp.float32
    bf16 = jnp.bfloat16

    x_t = x_ref[...]                                             # (TM, 160) f32

    # Per-class capsule norms via a tiny selection matmul (stays lane-dense).
    cls_t = jnp.sqrt(jnp.dot(x_t * x_t, s_ref[...],
                             preferred_element_type=f32))        # (TM, 10)

    # softmax over dim=0 (batch): column stats precomputed in the wrapper.
    sm_t = jnp.exp(cls_t - cmax_ref[...]) * cinv_ref[...]        # (TM, 10)

    # argmax over classes (dim=1) with first-max tie break (matches torch.max).
    col = jax.lax.broadcasted_iota(jnp.int32, sm_t.shape, 1)
    row_max = jnp.max(sm_t, axis=1, keepdims=True)
    cand = jnp.where(sm_t == row_max, col, NUM_CLASSES)
    idx = jnp.min(cand, axis=1, keepdims=True)                   # (TM, 1)

    # Lane-dense one-hot (padded to 128 lanes; columns >= 10 stay zero).
    col128 = jax.lax.broadcasted_iota(jnp.int32, (x_t.shape[0], MASK_PAD), 1)
    masked128 = (col128 == idx).astype(f32)                      # (TM, 128)
    masked_ref[...] = masked128

    # One-hot -> 160-lane mask via a small bf16 matmul (exact for 0/1 values).
    mask160 = jnp.dot(masked128.astype(bf16), e_ref[...],
                      preferred_element_type=f32)                # (TM, 160)
    t = (x_t * mask160).astype(bf16)

    # Reconstruction MLP: 160 -> 512 -> 1024 -> out_pad, bf16 MXU / f32 acc.
    h1 = jnp.dot(t, w1_ref[...], preferred_element_type=f32) + b1_ref[...]
    h1 = jnp.maximum(h1, 0.0).astype(bf16)
    h2 = jnp.dot(h1, w2_ref[...], preferred_element_type=f32) + b2_ref[...]
    h2 = jnp.maximum(h2, 0.0).astype(bf16)
    h3 = jnp.dot(h2, w3_ref[...], preferred_element_type=f32) + b3_ref[...]
    # Sigmoid as a single EUP op: sigmoid(x) = 0.5 * tanh(0.5 * x) + 0.5.
    recon_ref[...] = 0.5 * jnp.tanh(0.5 * h3) + 0.5


# --------------------------------- helpers ------------------------------------
def _pick_tiling(batch, max_tile=512):
    """Batch tile (multiple of 8) and padded batch size.

    Batches >= 16 are split into >= 2 tiles so both v7x TensorCores get work;
    batches larger than max_tile are capped (pl.cdiv-style padded grid)."""
    b8 = ((batch + 7) // 8) * 8
    if b8 > max_tile:
        tm = max_tile
    elif b8 >= 16:
        tm = ((b8 // 2 + 7) // 8) * 8
    else:
        tm = b8
    b_pad = ((batch + tm - 1) // tm) * tm
    return tm, b_pad


def make_decoder_params(key, input_width, input_height, input_channel):
    out_dim = input_width * input_height * input_channel
    k1, k2, k3, k4, k5, k6 = jax.random.split(key, 6)
    scale = 0.05
    return {
        "w1": jax.random.normal(k1, (IN_DIM, H1), jnp.float32) * scale,
        "b1": jax.random.normal(k2, (1, H1), jnp.float32) * scale,
        "w2": jax.random.normal(k3, (H1, H2), jnp.float32) * scale,
        "b2": jax.random.normal(k4, (1, H2), jnp.float32) * scale,
        "w3": jax.random.normal(k5, (H2, out_dim), jnp.float32) * scale,
        "b3": jax.random.normal(k6, (1, out_dim), jnp.float32) * scale,
    }


# --------------------------------- wrapper ------------------------------------
@partial(jax.jit, static_argnames=("input_width", "input_height", "input_channel"))
def decoder_forward(x, data, params, *, input_width, input_height, input_channel):
    del data                                             # unused by the reference
    B = x.shape[0]
    x2d = x.reshape(B, IN_DIM).astype(jnp.float32)       # lane-dense (B, 160)

    # softmax(dim=0) column statistics, computed once over the *real* batch
    # (cheap (B,10) XLA ops; keeps the grid axis fully parallel & pad-safe).
    cls = jnp.sqrt(jnp.sum(x2d.reshape(B, NUM_CLASSES, CAPS_DIM) ** 2, axis=2))
    col_max = jnp.max(cls, axis=0, keepdims=True)                    # (1, 10)
    col_inv = 1.0 / jnp.sum(jnp.exp(cls - col_max), axis=0, keepdims=True)

    out_dim = input_width * input_height * input_channel
    out_pad = ((out_dim + 127) // 128) * 128             # unmasked 128-lane stores

    tm, b_pad = _pick_tiling(B)
    n_tiles = b_pad // tm
    if b_pad != B:
        x2d = jnp.pad(x2d, ((0, b_pad - B), (0, 0)))

    # Selection matrices (hoisted out of the kernel; constant-folded by XLA).
    lane = jnp.arange(IN_DIM)
    S = (lane[:, None] // CAPS_DIM
         == jnp.arange(NUM_CLASSES)[None, :]).astype(jnp.float32)       # (160, 10)
    E = (jnp.arange(MASK_PAD)[:, None]
         == (lane[None, :] // CAPS_DIM)).astype(jnp.bfloat16)            # (128, 160)

    bf16 = jnp.bfloat16
    w1 = params["w1"].astype(bf16)
    b1 = params["b1"]
    w2 = params["w2"].astype(bf16)
    b2 = params["b2"]
    w3, b3 = params["w3"], params["b3"]
    if out_pad != out_dim:
        w3 = jnp.pad(w3, ((0, 0), (0, out_pad - out_dim)))
        b3 = jnp.pad(b3, ((0, 0), (0, out_pad - out_dim)))
    w3 = w3.astype(bf16)

    const = lambda i: (0, 0)
    tiled = lambda i: (i, 0)
    resident = lambda shape: pl.BlockSpec(shape, const,
                                          pipeline_mode=pl.Buffered(1))

    flops = (2 * b_pad * (IN_DIM * H1 + H1 * H2 + H2 * out_pad)
             + 2 * b_pad * IN_DIM * (NUM_CLASSES + MASK_PAD))
    transcendentals = b_pad * (out_pad + 2 * NUM_CLASSES)
    bytes_accessed = (2 * (IN_DIM * H1 + H1 * H2 + H2 * out_pad + MASK_PAD * IN_DIM)
                      + 4 * (H1 + H2 + out_pad + IN_DIM * NUM_CLASSES)
                      + 4 * b_pad * (IN_DIM + out_pad + MASK_PAD))

    # VMEM budget: single-buffered weights + double-buffered activation tiles
    # + live f32 intermediates; capped safely below v7x's 64 MiB physical VMEM.
    weight_bytes = (2 * (IN_DIM * H1 + H1 * H2 + H2 * out_pad + MASK_PAD * IN_DIM)
                    + 4 * (H1 + H2 + out_pad + IN_DIM * NUM_CLASSES
                           + 2 * NUM_CLASSES))
    act_bytes = 4 * (2 * tm * IN_DIM + 2 * tm * (out_pad + MASK_PAD)
                     + tm * (H1 + H2 + out_pad + IN_DIM))
    try:
        phys_vmem = pltpu.get_tpu_info().vmem_capacity_bytes
    except Exception:
        phys_vmem = 64 * 1024 * 1024
    vmem_cap = min(48 * 1024 * 1024, int(phys_vmem * 3 // 4))
    vmem_limit = int(min(vmem_cap,
                         max(16 * 1024 * 1024,
                             weight_bytes + act_bytes + (8 << 20))))

    masked_pad, recon_pad = pl.pallas_call(
        _decoder_kernel,
        out_shape=(
            jax.ShapeDtypeStruct((b_pad, MASK_PAD), jnp.float32),
            jax.ShapeDtypeStruct((b_pad, out_pad), jnp.float32),
        ),
        grid=(n_tiles,),
        in_specs=[
            pl.BlockSpec((tm, IN_DIM), tiled),        # x tile (pipelined)
            resident((1, NUM_CLASSES)),               # col_max
            resident((1, NUM_CLASSES)),               # 1 / col_den
            resident((IN_DIM, NUM_CLASSES)),          # S  (f32 norm selector)
            resident((MASK_PAD, IN_DIM)),             # E  (bf16 mask expander)
            resident((IN_DIM, H1)),                   # w1 (bf16, resident)
            resident((1, H1)),                        # b1 (f32)
            resident((H1, H2)),                       # w2 (bf16, resident)
            resident((1, H2)),                        # b2 (f32)
            resident((H2, out_pad)),                  # w3 (bf16, padded, resident)
            resident((1, out_pad)),                   # b3 (f32, padded)
        ],
        out_specs=(
            pl.BlockSpec((tm, MASK_PAD), tiled),
            pl.BlockSpec((tm, out_pad), tiled),
        ),
        compiler_params=pltpu.CompilerParams(
            dimension_semantics=("parallel",),
            vmem_limit_bytes=vmem_limit),
        cost_estimate=pl.CostEstimate(
            flops=flops, transcendentals=transcendentals,
            bytes_accessed=bytes_accessed),
    )(x2d, col_max, col_inv, S, E, w1, b1, w2, b2, w3, b3)

    masked = masked_pad[:B, :NUM_CLASSES]
    recon = recon_pad[:B, :out_dim].reshape(-1, input_channel,
                                            input_width, input_height)
    return recon, masked


# --------------------------- pure-JAX reference -------------------------------
def _decoder_reference(x, params, *, input_width, input_height, input_channel):
    B = x.shape[0]
    x3 = x[..., 0]                                               # (B, 10, 16)
    cls = jnp.sqrt(jnp.sum(x3 * x3, axis=2))                     # (B, 10)
    sm = jax.nn.softmax(cls, axis=0)                             # softmax over batch
    idx = jnp.argmax(sm, axis=1)
    masked = jax.nn.one_hot(idx, NUM_CLASSES, dtype=jnp.float32)
    t = (x3 * masked[:, :, None]).reshape(B, IN_DIM)
    h1 = jax.nn.relu(t @ params["w1"] + params["b1"])
    h2 = jax.nn.relu(h1 @ params["w2"] + params["b2"])
    recon = jax.nn.sigmoid(h2 @ params["w3"] + params["b3"])
    recon = recon.reshape(-1, input_channel, input_width, input_height)
    return recon, masked


if __name__ == "__main__":
    # Small, module-consistent shapes: batch=2, 10 capsule classes of dim 16,
    # image 16x16x1 -> MLP 160 -> 512 -> 1024 -> 256.
    INPUT_W, INPUT_H, INPUT_C = 16, 16, 1
    B = 2

    key = jax.random.PRNGKey(0)
    k_params, k_x = jax.random.split(key)
    params = make_decoder_params(k_params, INPUT_W, INPUT_H, INPUT_C)

    x = jax.random.normal(k_x, (B, NUM_CLASSES, CAPS_DIM, 1), jnp.float32)
    data = jnp.zeros((B, INPUT_C, INPUT_W, INPUT_H), jnp.float32)  # unused (parity)

    recon, masked = decoder_forward(
        x, data, params,
        input_width=INPUT_W, input_height=INPUT_H, input_channel=INPUT_C)
    jax.block_until_ready((recon, masked))

    assert recon.shape == (B, INPUT_C, INPUT_W, INPUT_H)
    assert masked.shape == (B, NUM_CLASSES)

    # Correctness check against a pure-JAX f32 reference (bf16 MXU inputs in
    # the kernel -> small, well-bounded deviation; accumulation stays f32).
    recon_ref, masked_ref = _decoder_reference(
        x, params, input_width=INPUT_W, input_height=INPUT_H, input_channel=INPUT_C)
    assert jnp.allclose(masked, masked_ref)
    assert jnp.allclose(recon, recon_ref, atol=1e-2, rtol=1e-2)

    print("KERNEL_OK")
</pallas_src>

<mosaic_0001>
module attributes {stable_mosaic.version = 11 : i64} {
  func.func @_decoder_kernel(%arg0: i32, %arg1: memref<8x160xf32, #tpu.memory_space<vmem>>, %arg2: memref<1x10xf32, #tpu.memory_space<vmem>>, %arg3: memref<1x10xf32, #tpu.memory_space<vmem>>, %arg4: memref<160x10xf32, #tpu.memory_space<vmem>>, %arg5: memref<128x160xbf16, #tpu.memory_space<vmem>>, %arg6: memref<160x512xbf16, #tpu.memory_space<vmem>>, %arg7: memref<1x512xf32, #tpu.memory_space<vmem>>, %arg8: memref<512x1024xbf16, #tpu.memory_space<vmem>>, %arg9: memref<1x1024xf32, #tpu.memory_space<vmem>>, %arg10: memref<1024x256xbf16, #tpu.memory_space<vmem>>, %arg11: memref<1x256xf32, #tpu.memory_space<vmem>>, %arg12: memref<8x128xf32, #tpu.memory_space<vmem>>, %arg13: memref<8x256xf32, #tpu.memory_space<vmem>>) attributes {dimension_semantics = [#tpu.dimension_semantics<parallel>], iteration_bounds = array<i64: 1>, scalar_prefetch = 0 : i64, scratch_operands = 0 : i64, tpu.core_type = #tpu.core_type<tc>, window_params = [{transform_indices = @transform_0, window_bounds = array<i64: 8, 160>}, {pipeline_mode = #tpu.pipeline_mode<synchronous>, transform_indices = @transform_1, window_bounds = array<i64: 1, 10>}, {pipeline_mode = #tpu.pipeline_mode<synchronous>, transform_indices = @transform_2, window_bounds = array<i64: 1, 10>}, {pipeline_mode = #tpu.pipeline_mode<synchronous>, transform_indices = @transform_3, window_bounds = array<i64: 160, 10>}, {pipeline_mode = #tpu.pipeline_mode<synchronous>, transform_indices = @transform_4, window_bounds = array<i64: 128, 160>}, {pipeline_mode = #tpu.pipeline_mode<synchronous>, transform_indices = @transform_5, window_bounds = array<i64: 160, 512>}, {pipeline_mode = #tpu.pipeline_mode<synchronous>, transform_indices = @transform_6, window_bounds = array<i64: 1, 512>}, {pipeline_mode = #tpu.pipeline_mode<synchronous>, transform_indices = @transform_7, window_bounds = array<i64: 512, 1024>}, {pipeline_mode = #tpu.pipeline_mode<synchronous>, transform_indices = @transform_8, window_bounds = array<i64: 1, 1024>}, {pipeline_mode = #tpu.pipeline_mode<synchronous>, transform_indices = @transform_9, window_bounds = array<i64: 1024, 256>}, {pipeline_mode = #tpu.pipeline_mode<synchronous>, transform_indices = @transform_10, window_bounds = array<i64: 1, 256>}, {transform_indices = @transform_11, window_bounds = array<i64: 8, 128>}, {transform_indices = @transform_12, window_bounds = array<i64: 8, 256>}]} {
    %c0 = arith.constant 0 : index
    %c0_0 = arith.constant 0 : index
    %0 = vector.load %arg1[%c0, %c0_0] : memref<8x160xf32, #tpu.memory_space<vmem>>, vector<8x160xf32>
    %1 = arith.mulf %0, %0 : vector<8x160xf32>
    %c0_1 = arith.constant 0 : index
    %c0_2 = arith.constant 0 : index
    %2 = vector.load %arg4[%c0_1, %c0_2] : memref<160x10xf32, #tpu.memory_space<vmem>>, vector<160x10xf32>
    %cst = arith.constant dense<0.000000e+00> : vector<8x10xf32>
    %3 = tpu.matmul %1, %2, %cst {dimension_numbers = #tpu.dot_dimension_numbers<[1], [0], [0], [1], [0, 0, 1, 1], [], []>} : vector<8x160xf32>, vector<160x10xf32>, vector<8x10xf32> -> vector<8x10xf32>
    %4 = math.sqrt %3 : vector<8x10xf32>
    %c0_3 = arith.constant 0 : index
    %c0_4 = arith.constant 0 : index
    %5 = vector.load %arg2[%c0_3, %c0_4] : memref<1x10xf32, #tpu.memory_space<vmem>>, vector<1x10xf32>
    %6 = vector.broadcast %5 : vector<1x10xf32> to vector<8x10xf32>
    %7 = arith.subf %4, %6 : vector<8x10xf32>
    %8 = math.exp %7 : vector<8x10xf32>
    %c0_5 = arith.constant 0 : index
    %c0_6 = arith.constant 0 : index
    %9 = vector.load %arg3[%c0_5, %c0_6] : memref<1x10xf32, #tpu.memory_space<vmem>>, vector<1x10xf32>
    %10 = vector.broadcast %9 : vector<1x10xf32> to vector<8x10xf32>
    %11 = arith.mulf %8, %10 : vector<8x10xf32>
    %12 = tpu.iota {dimensions = array<i32: 1>} : vector<8x10xi32>
    %cst_7 = arith.constant dense<0xFF800000> : vector<8xf32>
    %13 = vector.multi_reduction <maximumf>, %11, %cst_7 [1] : vector<8x10xf32> to vector<8xf32>
    %14 = vector.shape_cast %13 : vector<8xf32> to vector<8x1xf32>
    %15 = vector.broadcast %14 : vector<8x1xf32> to vector<8x10xf32>
    %16 = arith.cmpf oeq, %11, %15 : vector<8x10xf32>
    %c10_i32 = arith.constant 10 : i32
    %17 = vector.broadcast %c10_i32 : i32 to vector<8x10xi32>
    %18 = arith.select %16, %12, %17 : vector<8x10xi1>, vector<8x10xi32>
    %cst_8 = arith.constant dense<2147483647> : vector<8xi32>
    %19 = vector.multi_reduction <minsi>, %18, %cst_8 [1] : vector<8x10xi32> to vector<8xi32>
    %20 = vector.shape_cast %19 : vector<8xi32> to vector<8x1xi32>
    %21 = tpu.iota {dimensions = array<i32: 1>} : vector<8x128xi32>
    %22 = vector.broadcast %20 : vector<8x1xi32> to vector<8x128xi32>
    %23 = arith.cmpi eq, %21, %22 : vector<8x128xi32>
    %24 = arith.extui %23 : vector<8x128xi1> to vector<8x128xi32>
    %25 = arith.sitofp %24 : vector<8x128xi32> to vector<8x128xf32>
    %c0_9 = arith.constant 0 : index
    %c0_10 = arith.constant 0 : index
    %26 = vector.load %arg12[%c0_9, %c0_10] : memref<8x128xf32, #tpu.memory_space<vmem>>, vector<8x128xf32>
    tpu.vector_store %arg12[%c0_9, %c0_10], %25 {strides = array<i32>} : memref<8x128xf32, #tpu.memory_space<vmem>>, vector<8x128xf32>,
    %27 = arith.truncf %25 : vector<8x128xf32> to vector<8x128xbf16>
    %c0_11 = arith.constant 0 : index
    %c0_12 = arith.constant 0 : index
    %28 = vector.load %arg5[%c0_11, %c0_12] : memref<128x160xbf16, #tpu.memory_space<vmem>>, vector<128x160xbf16>
    %cst_13 = arith.constant dense<0.000000e+00> : vector<8x160xf32>
    %29 = tpu.matmul %27, %28, %cst_13 {dimension_numbers = #tpu.dot_dimension_numbers<[1], [0], [0], [1], [0, 0, 1, 1], [], []>} : vector<8x128xbf16>, vector<128x160xbf16>, vector<8x160xf32> -> vector<8x160xf32>
    %30 = arith.mulf %0, %29 : vector<8x160xf32>
    %31 = arith.truncf %30 : vector<8x160xf32> to vector<8x160xbf16>
    %c0_14 = arith.constant 0 : index
    %c0_15 = arith.constant 0 : index
    %32 = vector.load %arg6[%c0_14, %c0_15] : memref<160x512xbf16, #tpu.memory_space<vmem>>, vector<160x512xbf16>
    %cst_16 = arith.constant dense<0.000000e+00> : vector<8x512xf32>
    %33 = tpu.matmul %31, %32, %cst_16 {dimension_numbers = #tpu.dot_dimension_numbers<[1], [0], [0], [1], [0, 0, 1, 1], [], []>} : vector<8x160xbf16>, vector<160x512xbf16>, vector<8x512xf32> -> vector<8x512xf32>
    %c0_17 = arith.constant 0 : index
    %c0_18 = arith.constant 0 : index
    %34 = vector.load %arg7[%c0_17, %c0_18] : memref<1x512xf32, #tpu.memory_space<vmem>>, vector<1x512xf32>
    %35 = vector.broadcast %34 : vector<1x512xf32> to vector<8x512xf32>
    %36 = arith.addf %33, %35 : vector<8x512xf32>
    %cst_19 = arith.constant 0.000000e+00 : f32
    %37 = vector.broadcast %cst_19 : f32 to vector<8x512xf32>
    %38 = arith.maximumf %36, %37 : vector<8x512xf32>
    %39 = arith.truncf %38 : vector<8x512xf32> to vector<8x512xbf16>
    %c0_20 = arith.constant 0 : index
    %c0_21 = arith.constant 0 : index
    %40 = vector.load %arg8[%c0_20, %c0_21] : memref<512x1024xbf16, #tpu.memory_space<vmem>>, vector<512x1024xbf16>
    %cst_22 = arith.constant dense<0.000000e+00> : vector<8x1024xf32>
    %41 = tpu.matmul %39, %40, %cst_22 {dimension_numbers = #tpu.dot_dimension_numbers<[1], [0], [0], [1], [0, 0, 1, 1], [], []>} : vector<8x512xbf16>, vector<512x1024xbf16>, vector<8x1024xf32> -> vector<8x1024xf32>
    %c0_23 = arith.constant 0 : index
    %c0_24 = arith.constant 0 : index
    %42 = vector.load %arg9[%c0_23, %c0_24] : memref<1x1024xf32, #tpu.memory_space<vmem>>, vector<1x1024xf32>
    %43 = vector.broadcast %42 : vector<1x1024xf32> to vector<8x1024xf32>
    %44 = arith.addf %41, %43 : vector<8x1024xf32>
    %cst_25 = arith.constant 0.000000e+00 : f32
    %45 = vector.broadcast %cst_25 : f32 to vector<8x1024xf32>
    %46 = arith.maximumf %44, %45 : vector<8x1024xf32>
    %47 = arith.truncf %46 : vector<8x1024xf32> to vector<8x1024xbf16>
    %c0_26 = arith.constant 0 : index
    %c0_27 = arith.constant 0 : index
    %48 = vector.load %arg10[%c0_26, %c0_27] : memref<1024x256xbf16, #tpu.memory_space<vmem>>, vector<1024x256xbf16>
    %cst_28 = arith.constant dense<0.000000e+00> : vector<8x256xf32>
    %49 = tpu.matmul %47, %48, %cst_28 {dimension_numbers = #tpu.dot_dimension_numbers<[1], [0], [0], [1], [0, 0, 1, 1], [], []>} : vector<8x1024xbf16>, vector<1024x256xbf16>, vector<8x256xf32> -> vector<8x256xf32>
    %c0_29 = arith.constant 0 : index
    %c0_30 = arith.constant 0 : index
    %50 = vector.load %arg11[%c0_29, %c0_30] : memref<1x256xf32, #tpu.memory_space<vmem>>, vector<1x256xf32>
    %51 = vector.broadcast %50 : vector<1x256xf32> to vector<8x256xf32>
    %52 = arith.addf %49, %51 : vector<8x256xf32>
    %cst_31 = arith.constant 5.000000e-01 : f32
    %53 = vector.broadcast %cst_31 : f32 to vector<8x256xf32>
    %54 = arith.mulf %53, %52 : vector<8x256xf32>
    %55 = math.tanh %54 : vector<8x256xf32>
    %cst_32 = arith.constant 5.000000e-01 : f32
    %56 = vector.broadcast %cst_32 : f32 to vector<8x256xf32>
    %57 = arith.mulf %56, %55 : vector<8x256xf32>
    %cst_33 = arith.constant 5.000000e-01 : f32
    %58 = vector.broadcast %cst_33 : f32 to vector<8x256xf32>
    %59 = arith.addf %57, %58 : vector<8x256xf32>
    %c0_34 = arith.constant 0 : index
    %c0_35 = arith.constant 0 : index
    %60 = vector.load %arg13[%c0_34, %c0_35] : memref<8x256xf32, #tpu.memory_space<vmem>>, vector<8x256xf32>
    tpu.vector_store %arg13[%c0_34, %c0_35], %59 {strides = array<i32>} : memref<8x256xf32, #tpu.memory_space<vmem>>, vector<8x256xf32>,
    return
  }
  func.func @transform_0(%arg0: i32) -> (i32, i32) {
    %c0_i32 = arith.constant 0 : i32
    %c0_i32_0 = arith.constant 0 : i32
    return %arg0, %c0_i32 : i32, i32
  }
  func.func @transform_1(%arg0: i32) -> (i32, i32) {
    %c0_i32 = arith.constant 0 : i32
    %c0_i32_0 = arith.constant 0 : i32
    %c0_i32_1 = arith.constant 0 : i32
    return %c0_i32, %c0_i32_0 : i32, i32
  }
  func.func @transform_2(%arg0: i32) -> (i32, i32) {
    %c0_i32 = arith.constant 0 : i32
    %c0_i32_0 = arith.constant 0 : i32
    %c0_i32_1 = arith.constant 0 : i32
    return %c0_i32, %c0_i32_0 : i32, i32
  }
  func.func @transform_3(%arg0: i32) -> (i32, i32) {
    %c0_i32 = arith.constant 0 : i32
    %c0_i32_0 = arith.constant 0 : i32
    %c0_i32_1 = arith.constant 0 : i32
    return %c0_i32, %c0_i32_0 : i32, i32
  }
  func.func @transform_4(%arg0: i32) -> (i32, i32) {
    %c0_i32 = arith.constant 0 : i32
    %c0_i32_0 = arith.constant 0 : i32
    %c0_i32_1 = arith.constant 0 : i32
    return %c0_i32, %c0_i32_0 : i32, i32
  }
  func.func @transform_5(%arg0: i32) -> (i32, i32) {
    %c0_i32 = arith.constant 0 : i32
    %c0_i32_0 = arith.constant 0 : i32
    %c0_i32_1 = arith.constant 0 : i32
    return %c0_i32, %c0_i32_0 : i32, i32
  }
  func.func @transform_6(%arg0: i32) -> (i32, i32) {
    %c0_i32 = arith.constant 0 : i32
    %c0_i32_0 = arith.constant 0 : i32
    %c0_i32_1 = arith.constant 0 : i32
    return %c0_i32, %c0_i32_0 : i32, i32
  }
  func.func @transform_7(%arg0: i32) -> (i32, i32) {
    %c0_i32 = arith.constant 0 : i32
    %c0_i32_0 = arith.constant 0 : i32
    %c0_i32_1 = arith.constant 0 : i32
    return %c0_i32, %c0_i32_0 : i32, i32
  }
  func.func @transform_8(%arg0: i32) -> (i32, i32) {
    %c0_i32 = arith.constant 0 : i32
    %c0_i32_0 = arith.constant 0 : i32
    %c0_i32_1 = arith.constant 0 : i32
    return %c0_i32, %c0_i32_0 : i32, i32
  }
  func.func @transform_9(%arg0: i32) -> (i32, i32) {
    %c0_i32 = arith.constant 0 : i32
    %c0_i32_0 = arith.constant 0 : i32
    %c0_i32_1 = arith.constant 0 : i32
    return %c0_i32, %c0_i32_0 : i32, i32
  }
  func.func @transform_10(%arg0: i32) -> (i32, i32) {
    %c0_i32 = arith.constant 0 : i32
    %c0_i32_0 = arith.constant 0 : i32
    %c0_i32_1 = arith.constant 0 : i32
    return %c0_i32, %c0_i32_0 : i32, i32
  }
  func.func @transform_11(%arg0: i32) -> (i32, i32) {
    %c0_i32 = arith.constant 0 : i32
    %c0_i32_0 = arith.constant 0 : i32
    return %arg0, %c0_i32 : i32, i32
  }
  func.func @transform_12(%arg0: i32) -> (i32, i32) {
    %c0_i32 = arith.constant 0 : i32
    %c0_i32_0 = arith.constant 0 : i32
    return %arg0, %c0_i32 : i32, i32
  }
}

</mosaic_0001>

<llo_original>
// kernel: decoder_forward.1
$region0: #{decoder_forward.1}
  #allocation0 [shape = 'u32[]', space=smem, size = 0x4, offset = 0x4, fixed_abs, tag = 'smem constant byte address 0x4 - core index']
  #allocation1 [shape = 'u32[144,128]{1,0:T(1,128)}', space=vmem, size = 0x12000, scoped, tag = 'internal scratch']
  %s0 = inlined_call_operand.vmem [shape: f32[8,160], index: 0, kind: input, shape index: {}]
  %s1 = inlined_call_operand.vmem [shape: f32[1,10], index: 1, kind: input, shape index: {}]
  %s2 = inlined_call_operand.vmem [shape: f32[1,10], index: 2, kind: input, shape index: {}]
  %s3 = inlined_call_operand.vmem [shape: f32[160,10], index: 3, kind: input, shape index: {}]
  %s4 = inlined_call_operand.vmem [shape: bf16[128,160], index: 4, kind: input, shape index: {}]
  %s5 = inlined_call_operand.vmem [shape: bf16[160,512], index: 5, kind: input, shape index: {}]
  %s6 = inlined_call_operand.vmem [shape: f32[1,512], index: 6, kind: input, shape index: {}]
  %s7 = inlined_call_operand.vmem [shape: bf16[512,1024], index: 7, kind: input, shape index: {}]
  %s8 = inlined_call_operand.vmem [shape: f32[1,1024], index: 8, kind: input, shape index: {}]
  %s9 = inlined_call_operand.vmem [shape: bf16[1024,256], index: 9, kind: input, shape index: {}]
  %s10 = inlined_call_operand.vmem [shape: f32[1,256], index: 10, kind: input, shape index: {}]
  %s11 = inlined_call_operand.vmem [shape: f32[8,128], index: 11, kind: output, shape index: {0}]
  %s12 = inlined_call_operand.vmem [shape: f32[8,256], index: 12, kind: output, shape index: {1}]
  %13 = xla_tuple %s11, %s12
  %s14 = sld [smem:[#allocation0]]
  $region62: #{decoder_forward.1} parent=0
    _
  %s16 = ssub.s32 1, %s14
  %s17 = scalar_select 0, %s16, %s14
  // Predicated region
  $region2: #{decoder_forward.1} parent=0 // pred_check
    _
  $region3: #{decoder_forward.1} parent=0 // pred_check_branch
    %19 = sbr.rel (0) target = $region5
  $region4: #{decoder_forward.1} parent=0 // pred_region
    _
  $region5: #{decoder_forward.1} parent=0 // pred_fallthru
    _
  // Predicated region
  $region6: #{decoder_forward.1} parent=0 // pred_check
    _
  $region7: #{decoder_forward.1} parent=0 // pred_check_branch
    %21 = sbr.rel (0) target = $region9
  $region8: #{decoder_forward.1} parent=0 // pred_region
    _
  $region9: #{decoder_forward.1} parent=0 // pred_fallthru
    _
  // Predicated region
  $region10: #{decoder_forward.1} parent=0 // pred_check
    _
  $region11: #{decoder_forward.1} parent=0 // pred_check_branch
    %23 = sbr.rel (0) target = $region13
  $region12: #{decoder_forward.1} parent=0 // pred_region
    _
  $region13: #{decoder_forward.1} parent=0 // pred_fallthru
    _
  // Predicated region
  $region14: #{decoder_forward.1} parent=0 // pred_check
    _
  $region15: #{decoder_forward.1} parent=0 // pred_check_branch
    %25 = sbr.rel (0) target = $region17
  $region16: #{decoder_forward.1} parent=0 // pred_region
    _
  $region17: #{decoder_forward.1} parent=0 // pred_fallthru
    _
  // Predicated region
  $region18: #{decoder_forward.1} parent=0 // pred_check
    _
  $region19: #{decoder_forward.1} parent=0 // pred_check_branch
    %27 = sbr.rel (0) target = $region21
  $region20: #{decoder_forward.1} parent=0 // pred_region
    _
  $region21: #{decoder_forward.1} parent=0 // pred_fallthru
    _
  // Predicated region
  $region22: #{decoder_forward.1} parent=0 // pred_check
    _
  $region23: #{decoder_forward.1} parent=0 // pred_check_branch
    %29 = sbr.rel (0) target = $region25
  $region24: #{decoder_forward.1} parent=0 // pred_region
    _
  $region25: #{decoder_forward.1} parent=0 // pred_fallthru
    _
  // Predicated region
  $region26: #{decoder_forward.1} parent=0 // pred_check
    _
  $region27: #{decoder_forward.1} parent=0 // pred_check_branch
    %31 = sbr.rel (0) target = $region29
  $region28: #{decoder_forward.1} parent=0 // pred_region
    _
  $region29: #{decoder_forward.1} parent=0 // pred_fallthru
    _
  // Predicated region
  $region30: #{decoder_forward.1} parent=0 // pred_check
    _
  $region31: #{decoder_forward.1} parent=0 // pred_check_branch
    %33 = sbr.rel (0) target = $region33
  $region32: #{decoder_forward.1} parent=0 // pred_region
    _
  $region33: #{decoder_forward.1} parent=0 // pred_fallthru
    _
  // Predicated region
  $region34: #{decoder_forward.1} parent=0 // pred_check
    _
  $region35: #{decoder_forward.1} parent=0 // pred_check_branch
    %35 = sbr.rel (0) target = $region37
  $region36: #{decoder_forward.1} parent=0 // pred_region
    _
  $region37: #{decoder_forward.1} parent=0 // pred_fallthru
    _
  // Predicated region
  $region38: #{decoder_forward.1} parent=0 // pred_check
    _
  $region39: #{decoder_forward.1} parent=0 // pred_check_branch
    %37 = sbr.rel (0) target = $region41
  $region40: #{decoder_forward.1} parent=0 // pred_region
    _
  $region41: #{decoder_forward.1} parent=0 // pred_fallthru
    _
  // Predicated region
  $region42: #{decoder_forward.1} parent=0 // pred_check
    _
  $region43: #{decoder_forward.1} parent=0 // pred_check_branch
    %39 = sbr.rel (0) target = $region45
  $region44: #{decoder_forward.1} parent=0 // pred_region
    _
  $region45: #{decoder_forward.1} parent=0 // pred_fallthru
    _
  %v41 = vld [vmem:[%s0] sm:$0xff]
  %v42 = vld [vmem:[%s0 + $0x8] sm:$0xff]
  %v43 = vmul.f32 %v41, %v41
  %v44 = vmul.f32 %v42, %v42
  %v45 = vld [vmem:[%s3] sm:$0xff]
  %v46 = vld [vmem:[%s3 + $0x8] sm:$0xff]
  %v47 = vld [vmem:[%s3 + $0x10] sm:$0xff]
  %v48 = vld [vmem:[%s3 + $0x18] sm:$0xff]
  %v49 = vld [vmem:[%s3 + $0x20] sm:$0xff]
  %v50 = vld [vmem:[%s3 + $0x28] sm:$0xff]
  %v51 = vld [vmem:[%s3 + $0x30] sm:$0xff]
  %v52 = vld [vmem:[%s3 + $0x38] sm:$0xff]
  %v53 = vld [vmem:[%s3 + $0x40] sm:$0xff]
  %v54 = vld [vmem:[%s3 + $0x48] sm:$0xff]
  %v55 = vld [vmem:[%s3 + $0x50] sm:$0xff]
  %v56 = vld [vmem:[%s3 + $0x58] sm:$0xff]
  %v57 = vld [vmem:[%s3 + $0x60] sm:$0xff]
  %v58 = vld [vmem:[%s3 + $0x68] sm:$0xff]
  %v59 = vld [vmem:[%s3 + $0x70] sm:$0xff]
  %v60 = vld [vmem:[%s3 + $0x78] sm:$0xff]
  %v61 = vld [vmem:[%s3 + $0x80] sm:$0xff]
  %v62 = vld [vmem:[%s3 + $0x88] sm:$0xff]
  %v63 = vld [vmem:[%s3 + $0x90] sm:$0xff]
  %v64 = vld [vmem:[%s3 + $0x98] sm:$0xff]
  %vm65 = vcmask 261120
  %v67 = vsel %vm65, %v44, 0
  %69 = vmatprep.subr.mxu0 0.0
  %70 = vmatpush1.msra.mxu0 %v45
  %71 = vmatprep.subr.mxu0 0.0
  %72 = vmatpush1.msra.mxu0 %v46
  %73 = vmatprep.subr.mxu0 0.0
  %74 = vmatpush1.msra.mxu0 %v47
  %75 = vmatprep.subr.mxu0 0.0
  %76 = vmatpush1.msra.mxu0 %v48
  %77 = vmatprep.subr.mxu0 0.0
  %78 = vmatpush1.msra.mxu0 %v49
  %79 = vmatprep.subr.mxu0 0.0
  %80 = vmatpush1.msra.mxu0 %v50
  %81 = vmatprep.subr.mxu0 0.0
  %82 = vmatpush1.msra.mxu0 %v51
  %83 = vmatprep.subr.mxu0 0.0
  %84 = vmatpush1.msra.mxu0 %v52
  %85 = vmatprep.subr.mxu0 0.0
  %86 = vmatpush1.msra.mxu0 %v53
  %87 = vmatprep.subr.mxu0 0.0
  %88 = vmatpush1.msra.mxu0 %v54
  %89 = vmatprep.subr.mxu0 0.0
  %90 = vmatpush1.msra.mxu0 %v55
  %91 = vmatprep.subr.mxu0 0.0
  %92 = vmatpush1.msra.mxu0 %v56
  %93 = vmatprep.subr.mxu0 0.0
  %94 = vmatpush1.msra.mxu0 %v57
  %95 = vmatprep.subr.mxu0 0.0
  %96 = vmatpush1.msra.mxu0 %v58
  %97 = vmatprep.subr.mxu0 0.0
  %98 = vmatpush1.msra.mxu0 %v59
  %99 = vmatprep.subr.mxu0 0.0
  %100 = vmatpush1.msra.mxu0 %v60
  %101 = vmatprep.subr.mxu0 0.0
  %102 = vmatpush1.msra.mxu0 %v61
  %103 = vmatprep.subr.mxu0 0.0
  %104 = vmatpush1.msra.mxu0 %v62
  %105 = vmatprep.subr.mxu0 0.0
  %106 = vmatpush1.msra.mxu0 %v63
  %107 = vmatprep.subr.mxu0 0.0
  %108 = vmatpush1.msra.mxu0 %v64
  %109 = vmatprep.subr.mxu0 0.0
  %110 = vmatpush1.msra.mxu0 0.0
  %111 = vmatprep.subr.mxu0 0.0
  %112 = vmatpush1.msra.mxu0 0.0
  %113 = vmatprep.subr.mxu0 0.0
  %114 = vmatpush1.msra.mxu0 0.0
  %115 = vmatprep.subr.mxu0 0.0
  %116 = vmatpush1.msra.mxu0 0.0
  %117 = vmatprep.subr.mxu0 0.0
  %118 = vmatpush1.msra.mxu0 0.0
  %119 = vmatprep.subr.mxu0 0.0
  %120 = vmatpush1.msra.mxu0 0.0
  %121 = vmatprep.subr.mxu0 0.0
  %122 = vmatpush1.msra.mxu0 0.0
  %123 = vmatprep.subr.mxu0 0.0
  %124 = vmatpush1.msra.mxu0 0.0
  %125 = vmatprep.subr.mxu0 0.0
  %126 = vmatpush1.msra.mxu0 0.0
  %127 = vmatprep.subr.mxu0 0.0
  %128 = vmatpush1.msra.mxu0 0.0
  %129 = vmatprep.subr.mxu0 0.0
  %130 = vmatpush1.msra.mxu0 0.0
  %131 = vmatprep.subr.mxu0 0.0
  %132 = vmatpush1.msra.mxu0 0.0
  %133 = vmatprep.mubr.f32.mxu0 %v67
  %134 = vmatmul.mubr.f32.gmra.mrb[0].mxu0 %v43
  %v135 = vpop.f32.mrb[0].mxu0
  %v136 = vadd.f32 0.0, %v135
  %v137 = vpop.f32.mrb[0].mxu0
  %138 = vdwg.mxu0
  %v139 = vrsqrt.pop %v136
  %v140 = vmul.f32 %v136, %v139
  %vm141 = vcmp.eq.f32.partialorder %v136, inf
  %v142 = vsel %vm141, %v136, %v140
  %vm143 = vcmp.eq.f32.partialorder %v136, 0.0
  %v144 = vand.u32 %v136, 2147483648
  %v145 = vsel %vm143, %v144, %v142
  %v146 = vld [vmem:[%s1] sm:$0x1]
  %v148 = vlaneseq
  %v149 = vshrl.u32 %v148, 7
  %v150 = vsub.s32 0, %v149
  %v151 = vrot.slane %v146, %v150
  %v153 = vsub.f32 %v145, %v151
  %v154 = vmul.f32 %v153, 1.442695
  %v155 = vpow.pop %v154
  %v156 = vld [vmem:[%s2] sm:$0x1]
  %v158 = vlaneseq
  %v159 = vshrl.u32 %v158, 7
  %v160 = vsub.s32 0, %v159
  %v161 = vrot.slane %v156, %v160
  %v163 = vmul.f32 %v155, %v161
  %v164 = vlaneseq
  %v165 = vand.u32 %v164, 127
  %vm166 = vcmask 80896
  %v167 = vsel %vm166, %v163, -inf
  %168 = vmax.xlane.f32.xlu0 %v167
  %v169 = vpop.xlane.xlu0 %168
  %vm170 = vcmp.eq.f32.partialorder %v163, %v169
  %v171 = vsel %vm170, %v165, 10
  %v172 = vsel %vm166, %v171, 2147483647
  %v173 = vand.u32 %v172, 65535
  %v174 = vshra.s32 %v172, 16
  %v175 = vcvt.s32.f32 %v173
  %v176 = vcvt.s32.f32 %v174
  %177 = vmin.xlane.f32.xlu0 %v176
  %v178 = vpop.xlane.xlu0 %177
  %vm179 = vcmp.eq.f32.partialorder %v176, %v178
  %v180 = vsel %vm179, %v175, inf
  %181 = vmin.xlane.f32.xlu0 %v180
  %v182 = vpop.xlane.xlu0 %181
  %v183 = vcvt.f32.s32 %v182
  %v184 = vcvt.f32.s32 %v178
  %v185 = vshll.u32 %v184, 16
  %v186 = vadd.s32 %v185, %v183
  %vm187 = vcmp.eq.s32.totalorder %v165, %v186
  %v188 = vsel %vm187, 1, 0
  %v189 = vcvt.s32.f32 %v188
  %190 = vst [vmem:[%s11] sm:$0xff] %v189
  %v191 = vpack.c.bf16 %v189, %v189
  %v192 = vld [vmem:[%s4] sm:$0xff]
  %v193 = vld [vmem:[%s4 + $0x8] sm:$0xff]
  %v194 = vld [vmem:[%s4 + $0x10] sm:$0xff]
  %v195 = vld [vmem:[%s4 + $0x18] sm:$0xff]
  %v196 = vld [vmem:[%s4 + $0x20] sm:$0xff]
  %v197 = vld [vmem:[%s4 + $0x28] sm:$0xff]
  %v198 = vld [vmem:[%s4 + $0x30] sm:$0xff]
  %v199 = vld [vmem:[%s4 + $0x38] sm:$0xff]
  %v200 = vld [vmem:[%s4 + $0x40] sm:$0xff]
  %v201 = vld [vmem:[%s4 + $0x48] sm:$0xff]
  %v202 = vld [vmem:[%s4 + $0x50] sm:$0xff]
  %v203 = vld [vmem:[%s4 + $0x58] sm:$0xff]
  %v204 = vld [vmem:[%s4 + $0x60] sm:$0xff]
  %v205 = vld [vmem:[%s4 + $0x68] sm:$0xff]
  %v206 = vld [vmem:[%s4 + $0x70] sm:$0xff]
  %v207 = vld [vmem:[%s4 + $0x78] sm:$0xff]
  %v224 = vunpack.c.l.b16 %v192
  %v225 = vunpack.c.h.b16 %v192
  %v226 = vunpack.c.l.b16 %v193
  %v227 = vunpack.c.h.b16 %v193
  %v228 = vunpack.c.l.b16 %v194
  %v229 = vunpack.c.h.b16 %v194
  %v230 = vunpack.c.l.b16 %v195
  %v231 = vunpack.c.h.b16 %v195
  %v232 = vunpack.c.l.b16 %v196
  %v233 = vunpack.c.h.b16 %v196
  %v234 = vunpack.c.l.b16 %v197
  %v235 = vunpack.c.h.b16 %v197
  %v236 = vunpack.c.l.b16 %v198
  %v237 = vunpack.c.h.b16 %v198
  %v238 = vunpack.c.l.b16 %v199
  %v239 = vunpack.c.h.b16 %v199
  %v240 = vunpack.c.l.b16 %v200
  %v241 = vunpack.c.h.b16 %v200
  %v242 = vunpack.c.l.b16 %v201
  %v243 = vunpack.c.h.b16 %v201
  %v244 = vunpack.c.l.b16 %v202
  %v245 = vunpack.c.h.b16 %v202
  %v246 = vunpack.c.l.b16 %v203
  %v247 = vunpack.c.h.b16 %v203
  %v248 = vunpack.c.l.b16 %v204
  %v249 = vunpack.c.h.b16 %v204
  %v250 = vunpack.c.l.b16 %v205
  %v251 = vunpack.c.h.b16 %v205
  %v252 = vunpack.c.l.b16 %v206
  %v253 = vunpack.c.h.b16 %v206
  %v254 = vunpack.c.l.b16 %v207
  %v255 = vunpack.c.h.b16 %v207
  %v256 = vpack.c.b16 %v226, %v224
  %v257 = vpack.c.b16 %v227, %v225
  %v258 = vpack.c.b16 %v230, %v228
  %v259 = vpack.c.b16 %v231, %v229
  %v260 = vpack.c.b16 %v234, %v232
  %v261 = vpack.c.b16 %v235, %v233
  %v262 = vpack.c.b16 %v238, %v236
  %v263 = vpack.c.b16 %v239, %v237
  %v264 = vpack.c.b16 %v242, %v240
  %v265 = vpack.c.b16 %v243, %v241
  %v266 = vpack.c.b16 %v246, %v244
  %v267 = vpack.c.b16 %v247, %v245
  %v268 = vpack.c.b16 %v250, %v248
  %v269 = vpack.c.b16 %v251, %v249
  %v270 = vpack.c.b16 %v254, %v252
  %v271 = vpack.c.b16 %v255, %v253
  %288 = vmatprep.subr.bf16.mxu0 %v257
  %289 = vmatpush1.bf16.msra.mxu0 %v256
  %290 = vmatprep.subr.bf16.mxu0 %v259
  %291 = vmatpush1.bf16.msra.mxu0 %v258
  %292 = vmatprep.subr.bf16.mxu0 %v261
  %293 = vmatpush1.bf16.msra.mxu0 %v260
  %294 = vmatprep.subr.bf16.mxu0 %v263
  %295 = vmatpush1.bf16.msra.mxu0 %v262
  %296 = vmatprep.subr.bf16.mxu0 %v265
  %297 = vmatpush1.bf16.msra.mxu0 %v264
  %298 = vmatprep.subr.bf16.mxu0 %v267
  %299 = vmatpush1.bf16.msra.mxu0 %v266
  %300 = vmatprep.subr.bf16.mxu0 %v269
  %301 = vmatpush1.bf16.msra.mxu0 %v268
  %302 = vmatprep.subr.bf16.mxu0 %v271
  %303 = vmatpush1.bf16.msra.mxu0 %v270
  %304 = vmatprep.subr.bf16.mxu0 0
  %305 = vmatpush1.bf16.msra.mxu0 0
  %306 = vmatprep.subr.bf16.mxu0 0
  %307 = vmatpush1.bf16.msra.mxu0 0
  %308 = vmatprep.subr.bf16.mxu0 0
  %309 = vmatpush1.bf16.msra.mxu0 0
  %310 = vmatprep.subr.bf16.mxu0 0
  %311 = vmatpush1.bf16.msra.mxu0 0
  %312 = vmatprep.subr.bf16.mxu0 0
  %313 = vmatpush1.bf16.msra.mxu0 0
  %314 = vmatprep.subr.bf16.mxu0 0
  %315 = vmatpush1.bf16.msra.mxu0 0
  %316 = vmatprep.subr.bf16.mxu0 0
  %317 = vmatpush1.bf16.msra.mxu0 0
  %318 = vmatprep.subr.bf16.mxu0 0
  %319 = vmatpush1.bf16.msra.mxu0 0
  %320 = vmatprep.mubr.bf16.mxu0 0
  %321 = vmatmul.mubr.bf16.gmra.mrb[0].mxu0 %v191
  %v322 = vpop.f32.mrb[0].mxu0
  %v323 = vadd.f32 0.0, %v322
  %v324 = vpop.f32.mrb[0].mxu0
  %v325 = vadd.f32 0.0, %v324
  %v326 = vpop.f32.mrb[0].mxu0
  %v327 = vpop.f32.mrb[0].mxu0
  %328 = vdwg.mxu0
  %v329 = vmul.f32 %v41, %v323
  %v330 = vmul.f32 %v42, %v325
  %v331 = vpack.c.bf16 %v329, %v329
  %v332 = vpack.c.bf16 %v330, %v330
  %v333 = vld [vmem:[%s5] sm:$0xff]
  %v334 = vld [vmem:[%s5 + $0x8] sm:$0xff]
  %v335 = vld [vmem:[%s5 + $0x10] sm:$0xff]
  %v336 = vld [vmem:[%s5 + $0x18] sm:$0xff]
  %v337 = vld [vmem:[%s5 + $0x20] sm:$0xff]
  %v338 = vld [vmem:[%s5 + $0x28] sm:$0xff]
  %v339 = vld [vmem:[%s5 + $0x30] sm:$0xff]
  %v340 = vld [vmem:[%s5 + $0x38] sm:$0xff]
  %v341 = vld [vmem:[%s5 + $0x40] sm:$0xff]
  %v342 = vld [vmem:[%s5 + $0x48] sm:$0xff]
  %v343 = vld [vmem:[%s5 + $0x50] sm:$0xff]
  %v344 = vld [vmem:[%s5 + $0x58] sm:$0xff]
  %v345 = vld [vmem:[%s5 + $0x60] sm:$0xff]
  %v346 = vld [vmem:[%s5 + $0x68] sm:$0xff]
  %v347 = vld [vmem:[%s5 + $0x70] sm:$0xff]
  %v348 = vld [vmem:[%s5 + $0x78] sm:$0xff]
  %v349 = vld [vmem:[%s5 + $0x80] sm:$0xff]
  %v350 = vld [vmem:[%s5 + $0x88] sm:$0xff]
  %v351 = vld [vmem:[%s5 + $0x90] sm:$0xff]
  %v352 = vld [vmem:[%s5 + $0x98] sm:$0xff]
  %v353 = vld [vmem:[%s5 + $0xa0] sm:$0xff]
  %v354 = vld [vmem:[%s5 + $0xa8] sm:$0xff]
  %v355 = vld [vmem:[%s5 + $0xb0] sm:$0xff]
  %v356 = vld [vmem:[%s5 + $0xb8] sm:$0xff]
  %v357 = vld [vmem:[%s5 + $0xc0] sm:$0xff]
  %v358 = vld [vmem:[%s5 + $0xc8] sm:$0xff]
  %v359 = vld [vmem:[%s5 + $0xd0] sm:$0xff]
  %v360 = vld [vmem:[%s5 + $0xd8] sm:$0xff]
  %v361 = vld [vmem:[%s5 + $0xe0] sm:$0xff]
  %v362 = vld [vmem:[%s5 + $0xe8] sm:$0xff]
  %v363 = vld [vmem:[%s5 + $0xf0] sm:$0xff]
  %v364 = vld [vmem:[%s5 + $0xf8] sm:$0xff]
  %v365 = vld [vmem:[%s5 + $0x100] sm:$0xff]
  %v366 = vld [vmem:[%s5 + $0x108] sm:$0xff]
  %v367 = vld [vmem:[%s5 + $0x110] sm:$0xff]
  %v368 = vld [vmem:[%s5 + $0x118] sm:$0xff]
  %v369 = vld [vmem:[%s5 + $0x120] sm:$0xff]
  %v370 = vld [vmem:[%s5 + $0x128] sm:$0xff]
  %v371 = vld [vmem:[%s5 + $0x130] sm:$0xff]
  %v372 = vld [vmem:[%s5 + $0x138] sm:$0xff]
  %v373 = vld [vmem:[%s6] sm:$0xf]
  %v375 = vlaneseq
  %v376 = vshrl.u32 %v375, 7
  %v377 = vsub.s32 0, %v376
  %v378 = vrot.slane %v373, %v377
  %v379 = vlaneseq
  %v380 = vshrl.u32 %v379, 7
  %v381 = vsub.s32 1, %v380
  %v382 = vrot.slane %v373, %v381
  %v383 = vlaneseq
  %v384 = vshrl.u32 %v383, 7
  %v385 = vsub.s32 2, %v384
  %v386 = vrot.slane %v373, %v385
  %v387 = vlaneseq
  %v388 = vshrl.u32 %v387, 7
  %v389 = vsub.s32 3, %v388
  %v390 = vrot.slane %v373, %v389
  %v435 = vunpack.c.l.b16 %v333
  %v436 = vunpack.c.h.b16 %v333
  %v437 = vunpack.c.l.b16 %v334
  %v438 = vunpack.c.h.b16 %v334
  %v439 = vunpack.c.l.b16 %v335
  %v440 = vunpack.c.h.b16 %v335
  %v441 = vunpack.c.l.b16 %v336
  %v442 = vunpack.c.h.b16 %v336
  %v443 = vunpack.c.l.b16 %v337
  %v444 = vunpack.c.h.b16 %v337
  %v445 = vunpack.c.l.b16 %v338
  %v446 = vunpack.c.h.b16 %v338
  %v447 = vunpack.c.l.b16 %v339
  %v448 = vunpack.c.h.b16 %v339
  %v449 = vunpack.c.l.b16 %v340
  %v450 = vunpack.c.h.b16 %v340
  %v451 = vunpack.c.l.b16 %v341
  %v452 = vunpack.c.h.b16 %v341
  %v453 = vunpack.c.l.b16 %v342
  %v454 = vunpack.c.h.b16 %v342
  %v455 = vunpack.c.l.b16 %v343
  %v456 = vunpack.c.h.b16 %v343
  %v457 = vunpack.c.l.b16 %v344
  %v458 = vunpack.c.h.b16 %v344
  %v459 = vunpack.c.l.b16 %v345
  %v460 = vunpack.c.h.b16 %v345
  %v461 = vunpack.c.l.b16 %v346
  %v462 = vunpack.c.h.b16 %v346
  %v463 = vunpack.c.l.b16 %v347
  %v464 = vunpack.c.h.b16 %v347
  %v465 = vunpack.c.l.b16 %v348
  %v466 = vunpack.c.h.b16 %v348
  %v467 = vunpack.c.l.b16 %v349
  %v468 = vunpack.c.h.b16 %v349
  %v469 = vunpack.c.l.b16 %v350
  %v470 = vunpack.c.h.b16 %v350
  %v471 = vunpack.c.l.b16 %v351
  %v472 = vunpack.c.h.b16 %v351
  %v473 = vunpack.c.l.b16 %v352
  %v474 = vunpack.c.h.b16 %v352
  %v475 = vunpack.c.l.b16 %v353
  %v476 = vunpack.c.h.b16 %v353
  %v477 = vunpack.c.l.b16 %v354
  %v478 = vunpack.c.h.b16 %v354
  %v479 = vunpack.c.l.b16 %v355
  %v480 = vunpack.c.h.b16 %v355
  %v481 = vunpack.c.l.b16 %v356
  %v482 = vunpack.c.h.b16 %v356
  %v483 = vunpack.c.l.b16 %v357
  %v484 = vunpack.c.h.b16 %v357
  %v485 = vunpack.c.l.b16 %v358
  %v486 = vunpack.c.h.b16 %v358
  %v487 = vunpack.c.l.b16 %v359
  %v488 = vunpack.c.h.b16 %v359
  %v489 = vunpack.c.l.b16 %v360
  %v490 = vunpack.c.h.b16 %v360
  %v491 = vunpack.c.l.b16 %v361
  %v492 = vunpack.c.h.b16 %v361
  %v493 = vunpack.c.l.b16 %v362
  %v494 = vunpack.c.h.b16 %v362
  %v495 = vunpack.c.l.b16 %v363
  %v496 = vunpack.c.h.b16 %v363
  %v497 = vunpack.c.l.b16 %v364
  %v498 = vunpack.c.h.b16 %v364
  %v499 = vunpack.c.l.b16 %v365
  %v500 = vunpack.c.h.b16 %v365
  %v501 = vunpack.c.l.b16 %v366
  %v502 = vunpack.c.h.b16 %v366
  %v503 = vunpack.c.l.b16 %v367
  %v504 = vunpack.c.h.b16 %v367
  %v505 = vunpack.c.l.b16 %v368
  %v506 = vunpack.c.h.b16 %v368
  %v507 = vunpack.c.l.b16 %v369
  %v508 = vunpack.c.h.b16 %v369
  %v509 = vunpack.c.l.b16 %v370
  %v510 = vunpack.c.h.b16 %v370
  %v511 = vunpack.c.l.b16 %v371
  %v512 = vunpack.c.h.b16 %v371
  %v513 = vunpack.c.l.b16 %v372
  %v514 = vunpack.c.h.b16 %v372
  %v515 = vpack.c.b16 %v439, %v435
  %v516 = vpack.c.b16 %v440, %v436
  %v517 = vpack.c.b16 %v441, %v437
  %v518 = vpack.c.b16 %v442, %v438
  %v519 = vpack.c.b16 %v447, %v443
  %v520 = vpack.c.b16 %v448, %v444
  %v521 = vpack.c.b16 %v449, %v445
  %v522 = vpack.c.b16 %v450, %v446
  %v523 = vpack.c.b16 %v455, %v451
  %v524 = vpack.c.b16 %v456, %v452
  %v525 = vpack.c.b16 %v457, %v453
  %v526 = vpack.c.b16 %v458, %v454
  %v527 = vpack.c.b16 %v463, %v459
  %v528 = vpack.c.b16 %v464, %v460
  %v529 = vpack.c.b16 %v465, %v461
  %v530 = vpack.c.b16 %v466, %v462
  %v531 = vpack.c.b16 %v471, %v467
  %v532 = vpack.c.b16 %v472, %v468
  %v533 = vpack.c.b16 %v473, %v469
  %v534 = vpack.c.b16 %v474, %v470
  %v535 = vpack.c.b16 %v479, %v475
  %v536 = vpack.c.b16 %v480, %v476
  %v537 = vpack.c.b16 %v481, %v477
  %v538 = vpack.c.b16 %v482, %v478
  %v539 = vpack.c.b16 %v487, %v483
  %v540 = vpack.c.b16 %v488, %v484
  %v541 = vpack.c.b16 %v489, %v485
  %v542 = vpack.c.b16 %v490, %v486
  %v543 = vpack.c.b16 %v495, %v491
  %v544 = vpack.c.b16 %v496, %v492
  %v545 = vpack.c.b16 %v497, %v493
  %v546 = vpack.c.b16 %v498, %v494
  %v547 = vpack.c.b16 %v503, %v499
  %v548 = vpack.c.b16 %v504, %v500
  %v549 = vpack.c.b16 %v505, %v501
  %v550 = vpack.c.b16 %v506, %v502
  %v551 = vpack.c.b16 %v511, %v507
  %v552 = vpack.c.b16 %v512, %v508
  %v553 = vpack.c.b16 %v513, %v509
  %v554 = vpack.c.b16 %v514, %v510
  %v596 = vsel %vm65, %v332, 0
  %598 = vmatprep.subr.bf16.mxu0 %v516
  %599 = vmatpush1.bf16.msra.mxu0 %v515
  %600 = vmatprep.subr.bf16.mxu0 %v520
  %601 = vmatpush1.bf16.msra.mxu0 %v519
  %602 = vmatprep.subr.bf16.mxu0 %v524
  %603 = vmatpush1.bf16.msra.mxu0 %v523
  %604 = vmatprep.subr.bf16.mxu0 %v528
  %605 = vmatpush1.bf16.msra.mxu0 %v527
  %606 = vmatprep.subr.bf16.mxu0 %v532
  %607 = vmatpush1.bf16.msra.mxu0 %v531
  %608 = vmatprep.subr.bf16.mxu0 %v536
  %609 = vmatpush1.bf16.msra.mxu0 %v535
  %610 = vmatprep.subr.bf16.mxu0 %v540
  %611 = vmatpush1.bf16.msra.mxu0 %v539
  %612 = vmatprep.subr.bf16.mxu0 %v544
  %613 = vmatpush1.bf16.msra.mxu0 %v543
  %614 = vmatprep.subr.bf16.mxu0 %v548
  %615 = vmatpush1.bf16.msra.mxu0 %v547
  %616 = vmatprep.subr.bf16.mxu0 %v552
  %617 = vmatpush1.bf16.msra.mxu0 %v551
  %618 = vmatprep.subr.bf16.mxu0 0
  %619 = vmatpush1.bf16.msra.mxu0 0
  %620 = vmatprep.subr.bf16.mxu0 0
  %621 = vmatpush1.bf16.msra.mxu0 0
  %622 = vmatprep.subr.bf16.mxu0 0
  %623 = vmatpush1.bf16.msra.mxu0 0
  %624 = vmatprep.subr.bf16.mxu0 0
  %625 = vmatpush1.bf16.msra.mxu0 0
  %626 = vmatprep.subr.bf16.mxu0 0
  %627 = vmatpush1.bf16.msra.mxu0 0
  %628 = vmatprep.subr.bf16.mxu0 0
  %629 = vmatpush1.bf16.msra.mxu0 0
  %630 = vmatprep.mubr.bf16.mxu0 %v596
  %631 = vmatmul.mubr.bf16.gmra.mrb[0].mxu0 %v331
  %v632 = vpop.f32.mrb[0].mxu0
  %v633 = vadd.f32 %v378, %v632
  %v634 = vpop.f32.mrb[0].mxu0
  %v635 = vadd.f32 %v382, %v634
  %v636 = vpop.f32.mrb[0].mxu0
  %v637 = vpop.f32.mrb[0].mxu0
  %638 = vdwg.mxu0
  %639 = vmatprep.subr.bf16.mxu0 %v518
  %640 = vmatpush1.bf16.msra.mxu0 %v517
  %641 = vmatprep.subr.bf16.mxu0 %v522
  %642 = vmatpush1.bf16.msra.mxu0 %v521
  %643 = vmatprep.subr.bf16.mxu0 %v526
  %644 = vmatpush1.bf16.msra.mxu0 %v525
  %645 = vmatprep.subr.bf16.mxu0 %v530
  %646 = vmatpush1.bf16.msra.mxu0 %v529
  %647 = vmatprep.subr.bf16.mxu0 %v534
  %648 = vmatpush1.bf16.msra.mxu0 %v533
  %649 = vmatprep.subr.bf16.mxu0 %v538
  %650 = vmatpush1.bf16.msra.mxu0 %v537
  %651 = vmatprep.subr.bf16.mxu0 %v542
  %652 = vmatpush1.bf16.msra.mxu0 %v541
  %653 = vmatprep.subr.bf16.mxu0 %v546
  %654 = vmatpush1.bf16.msra.mxu0 %v545
  %655 = vmatprep.subr.bf16.mxu0 %v550
  %656 = vmatpush1.bf16.msra.mxu0 %v549
  %657 = vmatprep.subr.bf16.mxu0 %v554
  %658 = vmatpush1.bf16.msra.mxu0 %v553
  %659 = vmatprep.subr.bf16.mxu0 0
  %660 = vmatpush1.bf16.msra.mxu0 0
  %661 = vmatprep.subr.bf16.mxu0 0
  %662 = vmatpush1.bf16.msra.mxu0 0
  %663 = vmatprep.subr.bf16.mxu0 0
  %664 = vmatpush1.bf16.msra.mxu0 0
  %665 = vmatprep.subr.bf16.mxu0 0
  %666 = vmatpush1.bf16.msra.mxu0 0
  %667 = vmatprep.subr.bf16.mxu0 0
  %668 = vmatpush1.bf16.msra.mxu0 0
  %669 = vmatprep.subr.bf16.mxu0 0
  %670 = vmatpush1.bf16.msra.mxu0 0
  %671 = vmatprep.mubr.bf16.mxu0 %v596
  %672 = vmatmul.mubr.bf16.gmra.mrb[0].mxu0 %v331
  %v673 = vpop.f32.mrb[0].mxu0
  %v674 = vadd.f32 %v386, %v673
  %v675 = vpop.f32.mrb[0].mxu0
  %v676 = vadd.f32 %v390, %v675
  %v677 = vpop.f32.mrb[0].mxu0
  %v678 = vpop.f32.mrb[0].mxu0
  %679 = vdwg.mxu0
  %v680 = vmax.f32 %v633, 0.0
  %v681 = vmax.f32 %v635, 0.0
  %v682 = vmax.f32 %v674, 0.0
  %v683 = vmax.f32 %v676, 0.0
  %v684 = vpack.c.bf16 %v680, %v680
  %v685 = vpack.c.bf16 %v681, %v681
  %v686 = vpack.c.bf16 %v682, %v682
  %v687 = vpack.c.bf16 %v683, %v683
  %v688 = vld [vmem:[%s7] sm:$0xff]
  %v689 = vld [vmem:[%s7 + $0x8] sm:$0xff]
  %v690 = vld [vmem:[%s7 + $0x10] sm:$0xff]
  %v691 = vld [vmem:[%s7 + $0x18] sm:$0xff]
  %v692 = vld [vmem:[%s7 + $0x20] sm:$0xff]
  %v693 = vld [vmem:[%s7 + $0x28] sm:$0xff]
  %v694 = vld [vmem:[%s7 + $0x30] sm:$0xff]
  %v695 = vld [vmem:[%s7 + $0x38] sm:$0xff]
  %v696 = vld [vmem:[%s7 + $0x40] sm:$0xff]
  %v697 = vld [vmem:[%s7 + $0x48] sm:$0xff]
  %v698 = vld [vmem:[%s7 + $0x50] sm:$0xff]
  %v699 = vld [vmem:[%s7 + $0x58] sm:$0xff]
  %v700 = vld [vmem:[%s7 + $0x60] sm:$0xff]
  %v701 = vld [vmem:[%s7 + $0x68] sm:$0xff]
  %v702 = vld [vmem:[%s7 + $0x70] sm:$0xff]
  %v703 = vld [vmem:[%s7 + $0x78] sm:$0xff]
  %v704 = vld [vmem:[%s7 + $0x80] sm:$0xff]
  %v705 = vld [vmem:[%s7 + $0x88] sm:$0xff]
  %v706 = vld [vmem:[%s7 + $0x90] sm:$0xff]
  %v707 = vld [vmem:[%s7 + $0x98] sm:$0xff]
  %v708 = vld [vmem:[%s7 + $0xa0] sm:$0xff]
  %v709 = vld [vmem:[%s7 + $0xa8] sm:$0xff]
  %v710 = vld [vmem:[%s7 + $0xb0] sm:$0xff]
  %v711 = vld [vmem:[%s7 + $0xb8] sm:$0xff]
  %v712 = vld [vmem:[%s7 + $0xc0] sm:$0xff]
  %v713 = vld [vmem:[%s7 + $0xc8] sm:$0xff]
  %v714 = vld [vmem:[%s7 + $0xd0] sm:$0xff]
  %v715 = vld [vmem:[%s7 + $0xd8] sm:$0xff]
  %v716 = vld [vmem:[%s7 + $0xe0] sm:$0xff]
  %v717 = vld [vmem:[%s7 + $0xe8] sm:$0xff]
  %v718 = vld [vmem:[%s7 + $0xf0] sm:$0xff]
  %v719 = vld [vmem:[%s7 + $0xf8] sm:$0xff]
  %v720 = vld [vmem:[%s7 + $0x100] sm:$0xff]
  %v721 = vld [vmem:[%s7 + $0x108] sm:$0xff]
  %v722 = vld [vmem:[%s7 + $0x110] sm:$0xff]
  %v723 = vld [vmem:[%s7 + $0x118] sm:$0xff]
  %v724 = vld [vmem:[%s7 + $0x120] sm:$0xff]
  %v725 = vld [vmem:[%s7 + $0x128] sm:$0xff]
  %v726 = vld [vmem:[%s7 + $0x130] sm:$0xff]
  %v727 = vld [vmem:[%s7 + $0x138] sm:$0xff]
  %v728 = vld [vmem:[%s7 + $0x140] sm:$0xff]
  %v729 = vld [vmem:[%s7 + $0x148] sm:$0xff]
  %v730 = vld [vmem:[%s7 + $0x150] sm:$0xff]
  %v731 = vld [vmem:[%s7 + $0x158] sm:$0xff]
  %v732 = vld [vmem:[%s7 + $0x160] sm:$0xff]
  %v733 = vld [vmem:[%s7 + $0x168] sm:$0xff]
  %v734 = vld [vmem:[%s7 + $0x170] sm:$0xff]
  %v735 = vld [vmem:[%s7 + $0x178] sm:$0xff]
  %v736 = vld [vmem:[%s7 + $0x180] sm:$0xff]
  %v737 = vld [vmem:[%s7 + $0x188] sm:$0xff]
  %v738 = vld [vmem:[%s7 + $0x190] sm:$0xff]
  %v739 = vld [vmem:[%s7 + $0x198] sm:$0xff]
  %v740 = vld [vmem:[%s7 + $0x1a0] sm:$0xff]
  %v741 = vld [vmem:[%s7 + $0x1a8] sm:$0xff]
  %v742 = vld [vmem:[%s7 + $0x1b0] sm:$0xff]
  %v743 = vld [vmem:[%s7 + $0x1b8] sm:$0xff]
  %v744 = vld [vmem:[%s7 + $0x1c0] sm:$0xff]
  %v745 = vld [vmem:[%s7 + $0x1c8] sm:$0xff]
  %v746 = vld [vmem:[%s7 + $0x1d0] sm:$0xff]
  %v747 = vld [vmem:[%s7 + $0x1d8] sm:$0xff]
  %v748 = vld [vmem:[%s7 + $0x1e0] sm:$0xff]
  %v749 = vld [vmem:[%s7 + $0x1e8] sm:$0xff]
  %v750 = vld [vmem:[%s7 + $0x1f0] sm:$0xff]
  %v751 = vld [vmem:[%s7 + $0x1f8] sm:$0xff]
  %v752 = vld [vmem:[%s7 + $0x200] sm:$0xff]
  %v753 = vld [vmem:[%s7 + $0x208] sm:$0xff]
  %v754 = vld [vmem:[%s7 + $0x210] sm:$0xff]
  %v755 = vld [vmem:[%s7 + $0x218] sm:$0xff]
  %v756 = vld [vmem:[%s7 + $0x220] sm:$0xff]
  %v757 = vld [vmem:[%s7 + $0x228] sm:$0xff]
  %v758 = vld [vmem:[%s7 + $0x230] sm:$0xff]
  %v759 = vld [vmem:[%s7 + $0x238] sm:$0xff]
  %v760 = vld [vmem:[%s7 + $0x240] sm:$0xff]
  %v761 = vld [vmem:[%s7 + $0x248] sm:$0xff]
  %v762 = vld [vmem:[%s7 + $0x250] sm:$0xff]
  %v763 = vld [vmem:[%s7 + $0x258] sm:$0xff]
  %v764 = vld [vmem:[%s7 + $0x260] sm:$0xff]
  %v765 = vld [vmem:[%s7 + $0x268] sm:$0xff]
  %v766 = vld [vmem:[%s7 + $0x270] sm:$0xff]
  %v767 = vld [vmem:[%s7 + $0x278] sm:$0xff]
  %v768 = vld [vmem:[%s7 + $0x280] sm:$0xff]
  %v769 = vld [vmem:[%s7 + $0x288] sm:$0xff]
  %v770 = vld [vmem:[%s7 + $0x290] sm:$0xff]
  %v771 = vld [vmem:[%s7 + $0x298] sm:$0xff]
  %v772 = vld [vmem:[%s7 + $0x2a0] sm:$0xff]
  %v773 = vld [vmem:[%s7 + $0x2a8] sm:$0xff]
  %v774 = vld [vmem:[%s7 + $0x2b0] sm:$0xff]
  %v775 = vld [vmem:[%s7 + $0x2b8] sm:$0xff]
  %v776 = vld [vmem:[%s7 + $0x2c0] sm:$0xff]
  %v777 = vld [vmem:[%s7 + $0x2c8] sm:$0xff]
  %v778 = vld [vmem:[%s7 + $0x2d0] sm:$0xff]
  %v779 = vld [vmem:[%s7 + $0x2d8] sm:$0xff]
  %v780 = vld [vmem:[%s7 + $0x2e0] sm:$0xff]
  %v781 = vld [vmem:[%s7 + $0x2e8] sm:$0xff]
  %v782 = vld [vmem:[%s7 + $0x2f0] sm:$0xff]
  %v783 = vld [vmem:[%s7 + $0x2f8] sm:$0xff]
  %v784 = vld [vmem:[%s7 + $0x300] sm:$0xff]
  %v785 = vld [vmem:[%s7 + $0x308] sm:$0xff]
  %v786 = vld [vmem:[%s7 + $0x310] sm:$0xff]
  %v787 = vld [vmem:[%s7 + $0x318] sm:$0xff]
  %v788 = vld [vmem:[%s7 + $0x320] sm:$0xff]
  %v789 = vld [vmem:[%s7 + $0x328] sm:$0xff]
  %v790 = vld [vmem:[%s7 + $0x330] sm:$0xff]
  %v791 = vld [vmem:[%s7 + $0x338] sm:$0xff]
  %v792 = vld [vmem:[%s7 + $0x340] sm:$0xff]
  %v793 = vld [vmem:[%s7 + $0x348] sm:$0xff]
  %v794 = vld [vmem:[%s7 + $0x350] sm:$0xff]
  %v795 = vld [vmem:[%s7 + $0x358] sm:$0xff]
  %v796 = vld [vmem:[%s7 + $0x360] sm:$0xff]
  %v797 = vld [vmem:[%s7 + $0x368] sm:$0xff]
  %v798 = vld [vmem:[%s7 + $0x370] sm:$0xff]
  %v799 = vld [vmem:[%s7 + $0x378] sm:$0xff]
  %v800 = vld [vmem:[%s7 + $0x380] sm:$0xff]
  %v801 = vld [vmem:[%s7 + $0x388] sm:$0xff]
  %v802 = vld [vmem:[%s7 + $0x390] sm:$0xff]
  %v803 = vld [vmem:[%s7 + $0x398] sm:$0xff]
  %v804 = vld [vmem:[%s7 + $0x3a0] sm:$0xff]
  %v805 = vld [vmem:[%s7 + $0x3a8] sm:$0xff]
  %v806 = vld [vmem:[%s7 + $0x3b0] sm:$0xff]
  %v807 = vld [vmem:[%s7 + $0x3b8] sm:$0xff]
  %v808 = vld [vmem:[%s7 + $0x3c0] sm:$0xff]
  %v809 = vld [vmem:[%s7 + $0x3c8] sm:$0xff]
  %v810 = vld [vmem:[%s7 + $0x3d0] sm:$0xff]
  %v811 = vld [vmem:[%s7 + $0x3d8] sm:$0xff]
  %v812 = vld [vmem:[%s7 + $0x3e0] sm:$0xff]
  %v813 = vld [vmem:[%s7 + $0x3e8] sm:$0xff]
  %v814 = vld [vmem:[%s7 + $0x3f0] sm:$0xff]
  %v815 = vld [vmem:[%s7 + $0x3f8] sm:$0xff]
  %v816 = vld [vmem:[%s7 + $0x400] sm:$0xff]
  %v817 = vld [vmem:[%s7 + $0x408] sm:$0xff]
  %v818 = vld [vmem:[%s7 + $0x410] sm:$0xff]
  %v819 = vld [vmem:[%s7 + $0x418] sm:$0xff]
  %v820 = vld [vmem:[%s7 + $0x420] sm:$0xff]
  %v821 = vld [vmem:[%s7 + $0x428] sm:$0xff]
  %v822 = vld [vmem:[%s7 + $0x430] sm:$0xff]
  %v823 = vld [vmem:[%s7 + $0x438] sm:$0xff]
  %v824 = vld [vmem:[%s7 + $0x440] sm:$0xff]
  %v825 = vld [vmem:[%s7 + $0x448] sm:$0xff]
  %v826 = vld [vmem:[%s7 + $0x450] sm:$0xff]
  %v827 = vld [vmem:[%s7 + $0x458] sm:$0xff]
  %v828 = vld [vmem:[%s7 + $0x460] sm:$0xff]
  %v829 = vld [vmem:[%s7 + $0x468] sm:$0xff]
  %v830 = vld [vmem:[%s7 + $0x470] sm:$0xff]
  %v831 = vld [vmem:[%s7 + $0x478] sm:$0xff]
  %v832 = vld [vmem:[%s7 + $0x480] sm:$0xff]
  %v833 = vld [vmem:[%s7 + $0x488] sm:$0xff]
  %v834 = vld [vmem:[%s7 + $0x490] sm:$0xff]
  %v835 = vld [vmem:[%s7 + $0x498] sm:$0xff]
  %v836 = vld [vmem:[%s7 + $0x4a0] sm:$0xff]
  %v837 = vld [vmem:[%s7 + $0x4a8] sm:$0xff]
  %v838 = vld [vmem:[%s7 + $0x4b0] sm:$0xff]
  %v839 = vld [vmem:[%s7 + $0x4b8] sm:$0xff]
  %v840 = vld [vmem:[%s7 + $0x4c0] sm:$0xff]
  %v841 = vld [vmem:[%s7 + $0x4c8] sm:$0xff]
  %v842 = vld [vmem:[%s7 + $0x4d0] sm:$0xff]
  %v843 = vld [vmem:[%s7 + $0x4d8] sm:$0xff]
  %v844 = vld [vmem:[%s7 + $0x4e0] sm:$0xff]
  %v845 = vld [vmem:[%s7 + $0x4e8] sm:$0xff]
  %v846 = vld [vmem:[%s7 + $0x4f0] sm:$0xff]
  %v847 = vld [vmem:[%s7 + $0x4f8] sm:$0xff]
  %v848 = vld [vmem:[%s7 + $0x500] sm:$0xff]
  %v849 = vld [vmem:[%s7 + $0x508] sm:$0xff]
  %v850 = vld [vmem:[%s7 + $0x510] sm:$0xff]
  %v851 = vld [vmem:[%s7 + $0x518] sm:$0xff]
  %v852 = vld [vmem:[%s7 + $0x520] sm:$0xff]
  %v853 = vld [vmem:[%s7 + $0x528] sm:$0xff]
  %v854 = vld [vmem:[%s7 + $0x530] sm:$0xff]
  %v855 = vld [vmem:[%s7 + $0x538] sm:$0xff]
  %v856 = vld [vmem:[%s7 + $0x540] sm:$0xff]
  %v857 = vld [vmem:[%s7 + $0x548] sm:$0xff]
  %v858 = vld [vmem:[%s7 + $0x550] sm:$0xff]
  %v859 = vld [vmem:[%s7 + $0x558] sm:$0xff]
  %v860 = vld [vmem:[%s7 + $0x560] sm:$0xff]
  %v861 = vld [vmem:[%s7 + $0x568] sm:$0xff]
  %v862 = vld [vmem:[%s7 + $0x570] sm:$0xff]
  %v863 = vld [vmem:[%s7 + $0x578] sm:$0xff]
  %v864 = vld [vmem:[%s7 + $0x580] sm:$0xff]
  %v865 = vld [vmem:[%s7 + $0x588] sm:$0xff]
  %v866 = vld [vmem:[%s7 + $0x590] sm:$0xff]
  %v867 = vld [vmem:[%s7 + $0x598] sm:$0xff]
  %v868 = vld [vmem:[%s7 + $0x5a0] sm:$0xff]
  %v869 = vld [vmem:[%s7 + $0x5a8] sm:$0xff]
  %v870 = vld [vmem:[%s7 + $0x5b0] sm:$0xff]
  %v871 = vld [vmem:[%s7 + $0x5b8] sm:$0xff]
  %v872 = vld [vmem:[%s7 + $0x5c0] sm:$0xff]
  %v873 = vld [vmem:[%s7 + $0x5c8] sm:$0xff]
  %v874 = vld [vmem:[%s7 + $0x5d0] sm:$0xff]
  %v875 = vld [vmem:[%s7 + $0x5d8] sm:$0xff]
  %v876 = vld [vmem:[%s7 + $0x5e0] sm:$0xff]
  %v877 = vld [vmem:[%s7 + $0x5e8] sm:$0xff]
  %v878 = vld [vmem:[%s7 + $0x5f0] sm:$0xff]
  %v879 = vld [vmem:[%s7 + $0x5f8] sm:$0xff]
  %v880 = vld [vmem:[%s7 + $0x600] sm:$0xff]
  %v881 = vld [vmem:[%s7 + $0x608] sm:$0xff]
  %v882 = vld [vmem:[%s7 + $0x610] sm:$0xff]
  %v883 = vld [vmem:[%s7 + $0x618] sm:$0xff]
  %v884 = vld [vmem:[%s7 + $0x620] sm:$0xff]
  %v885 = vld [vmem:[%s7 + $0x628] sm:$0xff]
  %v886 = vld [vmem:[%s7 + $0x630] sm:$0xff]
  %v887 = vld [vmem:[%s7 + $0x638] sm:$0xff]
  %v888 = vld [vmem:[%s7 + $0x640] sm:$0xff]
  %v889 = vld [vmem:[%s7 + $0x648] sm:$0xff]
  %v890 = vld [vmem:[%s7 + $0x650] sm:$0xff]
  %v891 = vld [vmem:[%s7 + $0x658] sm:$0xff]
  %v892 = vld [vmem:[%s7 + $0x660] sm:$0xff]
  %v893 = vld [vmem:[%s7 + $0x668] sm:$0xff]
  %v894 = vld [vmem:[%s7 + $0x670] sm:$0xff]
  %v895 = vld [vmem:[%s7 + $0x678] sm:$0xff]
  %v896 = vld [vmem:[%s7 + $0x680] sm:$0xff]
  %v897 = vld [vmem:[%s7 + $0x688] sm:$0xff]
  %v898 = vld [vmem:[%s7 + $0x690] sm:$0xff]
  %v899 = vld [vmem:[%s7 + $0x698] sm:$0xff]
  %v900 = vld [vmem:[%s7 + $0x6a0] sm:$0xff]
  %v901 = vld [vmem:[%s7 + $0x6a8] sm:$0xff]
  %v902 = vld [vmem:[%s7 + $0x6b0] sm:$0xff]
  %v903 = vld [vmem:[%s7 + $0x6b8] sm:$0xff]
  %v904 = vld [vmem:[%s7 + $0x6c0] sm:$0xff]
  %v905 = vld [vmem:[%s7 + $0x6c8] sm:$0xff]
  %v906 = vld [vmem:[%s7 + $0x6d0] sm:$0xff]
  %v907 = vld [vmem:[%s7 + $0x6d8] sm:$0xff]
  %v908 = vld [vmem:[%s7 + $0x6e0] sm:$0xff]
  %v909 = vld [vmem:[%s7 + $0x6e8] sm:$0xff]
  %v910 = vld [vmem:[%s7 + $0x6f0] sm:$0xff]
  %v911 = vld [vmem:[%s7 + $0x6f8] sm:$0xff]
  %v912 = vld [vmem:[%s7 + $0x700] sm:$0xff]
  %v913 = vld [vmem:[%s7 + $0x708] sm:$0xff]
  %v914 = vld [vmem:[%s7 + $0x710] sm:$0xff]
  %v915 = vld [vmem:[%s7 + $0x718] sm:$0xff]
  %v916 = vld [vmem:[%s7 + $0x720] sm:$0xff]
  %v917 = vld [vmem:[%s7 + $0x728] sm:$0xff]
  %v918 = vld [vmem:[%s7 + $0x730] sm:$0xff]
  %v919 = vld [vmem:[%s7 + $0x738] sm:$0xff]
  %v920 = vld [vmem:[%s7 + $0x740] sm:$0xff]
  %v921 = vld [vmem:[%s7 + $0x748] sm:$0xff]
  %v922 = vld [vmem:[%s7 + $0x750] sm:$0xff]
  %v923 = vld [vmem:[%s7 + $0x758] sm:$0xff]
  %v924 = vld [vmem:[%s7 + $0x760] sm:$0xff]
  %v925 = vld [vmem:[%s7 + $0x768] sm:$0xff]
  %v926 = vld [vmem:[%s7 + $0x770] sm:$0xff]
  %v927 = vld [vmem:[%s7 + $0x778] sm:$0xff]
  %v928 = vld [vmem:[%s7 + $0x780] sm:$0xff]
  %v929 = vld [vmem:[%s7 + $0x788] sm:$0xff]
  %v930 = vld [vmem:[%s7 + $0x790] sm:$0xff]
  %v931 = vld [vmem:[%s7 + $0x798] sm:$0xff]
  %v932 = vld [vmem:[%s7 + $0x7a0] sm:$0xff]
  %v933 = vld [vmem:[%s7 + $0x7a8] sm:$0xff]
  %v934 = vld [vmem:[%s7 + $0x7b0] sm:$0xff]
  %v935 = vld [vmem:[%s7 + $0x7b8] sm:$0xff]
  %v936 = vld [vmem:[%s7 + $0x7c0] sm:$0xff]
  %v937 = vld [vmem:[%s7 + $0x7c8] sm:$0xff]
  %v938 = vld [vmem:[%s7 + $0x7d0] sm:$0xff]
  %v939 = vld [vmem:[%s7 + $0x7d8] sm:$0xff]
  %v940 = vld [vmem:[%s7 + $0x7e0] sm:$0xff]
  %v941 = vld [vmem:[%s7 + $0x7e8] sm:$0xff]
  %v942 = vld [vmem:[%s7 + $0x7f0] sm:$0xff]
  %v943 = vld [vmem:[%s7 + $0x7f8] sm:$0xff]
  %v944 = vld [vmem:[%s8] sm:$0xff]
  %v946 = vlaneseq
  %v947 = vshrl.u32 %v946, 7
  %v948 = vsub.s32 0, %v947
  %v949 = vrot.slane %v944, %v948
  %v950 = vlaneseq
  %v951 = vshrl.u32 %v950, 7
  %v952 = vsub.s32 1, %v951
  %v953 = vrot.slane %v944, %v952
  %v954 = vlaneseq
  %v955 = vshrl.u32 %v954, 7
  %v956 = vsub.s32 2, %v955
  %v957 = vrot.slane %v944, %v956
  %v958 = vlaneseq
  %v959 = vshrl.u32 %v958, 7
  %v960 = vsub.s32 3, %v959
  %v961 = vrot.slane %v944, %v960
  %v962 = vlaneseq
  %v963 = vshrl.u32 %v962, 7
  %v964 = vsub.s32 4, %v963
  %v965 = vrot.slane %v944, %v964
  %v966 = vlaneseq
  %v967 = vshrl.u32 %v966, 7
  %v968 = vsub.s32 5, %v967
  %v969 = vrot.slane %v944, %v968
  %v970 = vlaneseq
  %v971 = vshrl.u32 %v970, 7
  %v972 = vsub.s32 6, %v971
  %v973 = vrot.slane %v944, %v972
  %v974 = vlaneseq
  %v975 = vshrl.u32 %v974, 7
  %v976 = vsub.s32 7, %v975
  %v977 = vrot.slane %v944, %v976
  %v1242 = vunpack.c.l.b16 %v688
  %v1243 = vunpack.c.h.b16 %v688
  %v1244 = vunpack.c.l.b16 %v689
  %v1245 = vunpack.c.h.b16 %v689
  %v1246 = vunpack.c.l.b16 %v690
  %v1247 = vunpack.c.h.b16 %v690
  %v1248 = vunpack.c.l.b16 %v691
  %v1249 = vunpack.c.h.b16 %v691
  %v1250 = vunpack.c.l.b16 %v692
  %v1251 = vunpack.c.h.b16 %v692
  %v1252 = vunpack.c.l.b16 %v693
  %v1253 = vunpack.c.h.b16 %v693
  %v1254 = vunpack.c.l.b16 %v694
  %v1255 = vunpack.c.h.b16 %v694
  %v1256 = vunpack.c.l.b16 %v695
  %v1257 = vunpack.c.h.b16 %v695
  %v1258 = vunpack.c.l.b16 %v696
  %v1259 = vunpack.c.h.b16 %v696
  %v1260 = vunpack.c.l.b16 %v697
  %v1261 = vunpack.c.h.b16 %v697
  %v1262 = vunpack.c.l.b16 %v698
  %v1263 = vunpack.c.h.b16 %v698
  %v1264 = vunpack.c.l.b16 %v699
  %v1265 = vunpack.c.h.b16 %v699
  %v1266 = vunpack.c.l.b16 %v700
  %v1267 = vunpack.c.h.b16 %v700
  %v1268 = vunpack.c.l.b16 %v701
  %v1269 = vunpack.c.h.b16 %v701
  %v1270 = vunpack.c.l.b16 %v702
  %v1271 = vunpack.c.h.b16 %v702
  %v1272 = vunpack.c.l.b16 %v703
  %v1273 = vunpack.c.h.b16 %v703
  %v1274 = vunpack.c.l.b16 %v704
  %v1275 = vunpack.c.h.b16 %v704
  %v1276 = vunpack.c.l.b16 %v705
  %v1277 = vunpack.c.h.b16 %v705
  %v1278 = vunpack.c.l.b16 %v706
  %v1279 = vunpack.c.h.b16 %v706
  %v1280 = vunpack.c.l.b16 %v707
  %v1281 = vunpack.c.h.b16 %v707
  %v1282 = vunpack.c.l.b16 %v708
  %v1283 = vunpack.c.h.b16 %v708
  %v1284 = vunpack.c.l.b16 %v709
  %v1285 = vunpack.c.h.b16 %v709
  %v1286 = vunpack.c.l.b16 %v710
  %v1287 = vunpack.c.h.b16 %v710
  %v1288 = vunpack.c.l.b16 %v711
  %v1289 = vunpack.c.h.b16 %v711
  %v1290 = vunpack.c.l.b16 %v712
  %v1291 = vunpack.c.h.b16 %v712
  %v1292 = vunpack.c.l.b16 %v713
  %v1293 = vunpack.c.h.b16 %v713
  %v1294 = vunpack.c.l.b16 %v714
  %v1295 = vunpack.c.h.b16 %v714
  %v1296 = vunpack.c.l.b16 %v715
  %v1297 = vunpack.c.h.b16 %v715
  %v1298 = vunpack.c.l.b16 %v716
  %v1299 = vunpack.c.h.b16 %v716
  %v1300 = vunpack.c.l.b16 %v717
  %v1301 = vunpack.c.h.b16 %v717
  %v1302 = vunpack.c.l.b16 %v718
  %v1303 = vunpack.c.h.b16 %v718
  %v1304 = vunpack.c.l.b16 %v719
  %v1305 = vunpack.c.h.b16 %v719
  %v1306 = vunpack.c.l.b16 %v720
  %v1307 = vunpack.c.h.b16 %v720
  %v1308 = vunpack.c.l.b16 %v721
  %v1309 = vunpack.c.h.b16 %v721
  %v1310 = vunpack.c.l.b16 %v722
  %v1311 = vunpack.c.h.b16 %v722
  %v1312 = vunpack.c.l.b16 %v723
  %v1313 = vunpack.c.h.b16 %v723
  %v1314 = vunpack.c.l.b16 %v724
  %v1315 = vunpack.c.h.b16 %v724
  %v1316 = vunpack.c.l.b16 %v725
  %v1317 = vunpack.c.h.b16 %v725
  %v1318 = vunpack.c.l.b16 %v726
  %v1319 = vunpack.c.h.b16 %v726
  %v1320 = vunpack.c.l.b16 %v727
  %v1321 = vunpack.c.h.b16 %v727
  %v1322 = vunpack.c.l.b16 %v728
  %v1323 = vunpack.c.h.b16 %v728
  %v1324 = vunpack.c.l.b16 %v729
  %v1325 = vunpack.c.h.b16 %v729
  %v1326 = vunpack.c.l.b16 %v730
  %v1327 = vunpack.c.h.b16 %v730
  %v1328 = vunpack.c.l.b16 %v731
  %v1329 = vunpack.c.h.b16 %v731
  %v1330 = vunpack.c.l.b16 %v732
  %v1331 = vunpack.c.h.b16 %v732
  %v1332 = vunpack.c.l.b16 %v733
  %v1333 = vunpack.c.h.b16 %v733
  %v1334 = vunpack.c.l.b16 %v734
  %v1335 = vunpack.c.h.b16 %v734
  %v1336 = vunpack.c.l.b16 %v735
  %v1337 = vunpack.c.h.b16 %v735
  %v1338 = vunpack.c.l.b16 %v736
  %v1339 = vunpack.c.h.b16 %v736
  %v1340 = vunpack.c.l.b16 %v737
  %v1341 = vunpack.c.h.b16 %v737
  %v1342 = vunpack.c.l.b16 %v738
  %v1343 = vunpack.c.h.b16 %v738
  %v1344 = vunpack.c.l.b16 %v739
  %v1345 = vunpack.c.h.b16 %v739
  %v1346 = vunpack.c.l.b16 %v740
  %v1347 = vunpack.c.h.b16 %v740
  %v1348 = vunpack.c.l.b16 %v741
  %v1349 = vunpack.c.h.b16 %v741
  %v1350 = vunpack.c.l.b16 %v742
  %v1351 = vunpack.c.h.b16 %v742
  %v1352 = vunpack.c.l.b16 %v743
  %v1353 = vunpack.c.h.b16 %v743
  %v1354 = vunpack.c.l.b16 %v744
  %v1355 = vunpack.c.h.b16 %v744
  %v1356 = vunpack.c.l.b16 %v745
  %v1357 = vunpack.c.h.b16 %v745
  %v1358 = vunpack.c.l.b16 %v746
  %v1359 = vunpack.c.h.b16 %v746
  %v1360 = vunpack.c.l.b16 %v747
  %v1361 = vunpack.c.h.b16 %v747
  %v1362 = vunpack.c.l.b16 %v748
  %v1363 = vunpack.c.h.b16 %v748
  %v1364 = vunpack.c.l.b16 %v749
  %v1365 = vunpack.c.h.b16 %v749
  %v1366 = vunpack.c.l.b16 %v750
  %v1367 = vunpack.c.h.b16 %v750
  %v1368 = vunpack.c.l.b16 %v751
  %v1369 = vunpack.c.h.b16 %v751
  %v1370 = vunpack.c.l.b16 %v752
  %v1371 = vunpack.c.h.b16 %v752
  %v1372 = vunpack.c.l.b16 %v753
  %v1373 = vunpack.c.h.b16 %v753
  %v1374 = vunpack.c.l.b16 %v754
  %v1375 = vunpack.c.h.b16 %v754
  %v1376 = vunpack.c.l.b16 %v755
  %v1377 = vunpack.c.h.b16 %v755
  %v1378 = vunpack.c.l.b16 %v756
  %v1379 = vunpack.c.h.b16 %v756
  %v1380 = vunpack.c.l.b16 %v757
  %v1381 = vunpack.c.h.b16 %v757
  %v1382 = vunpack.c.l.b16 %v758
  %v1383 = vunpack.c.h.b16 %v758
  %v1384 = vunpack.c.l.b16 %v759
  %v1385 = vunpack.c.h.b16 %v759
  %v1386 = vunpack.c.l.b16 %v760
  %v1387 = vunpack.c.h.b16 %v760
  %v1388 = vunpack.c.l.b16 %v761
  %v1389 = vunpack.c.h.b16 %v761
  %v1390 = vunpack.c.l.b16 %v762
  %v1391 = vunpack.c.h.b16 %v762
  %v1392 = vunpack.c.l.b16 %v763
  %v1393 = vunpack.c.h.b16 %v763
  %v1394 = vunpack.c.l.b16 %v764
  %v1395 = vunpack.c.h.b16 %v764
  %v1396 = vunpack.c.l.b16 %v765
  %v1397 = vunpack.c.h.b16 %v765
  %v1398 = vunpack.c.l.b16 %v766
  %v1399 = vunpack.c.h.b16 %v766
  %v1400 = vunpack.c.l.b16 %v767
  %v1401 = vunpack.c.h.b16 %v767
  %v1402 = vunpack.c.l.b16 %v768
  %v1403 = vunpack.c.h.b16 %v768
  %v1404 = vunpack.c.l.b16 %v769
  %v1405 = vunpack.c.h.b16 %v769
  %v1406 = vunpack.c.l.b16 %v770
  %v1407 = vunpack.c.h.b16 %v770
  %v1408 = vunpack.c.l.b16 %v771
  %v1409 = vunpack.c.h.b16 %v771
  %v1410 = vunpack.c.l.b16 %v772
  %v1411 = vunpack.c.h.b16 %v772
  %v1412 = vunpack.c.l.b16 %v773
  %v1413 = vunpack.c.h.b16 %v773
  %v1414 = vunpack.c.l.b16 %v774
  %v1415 = vunpack.c.h.b16 %v774
  %v1416 = vunpack.c.l.b16 %v775
  %v1417 = vunpack.c.h.b16 %v775
  %v1418 = vunpack.c.l.b16 %v776
  %v1419 = vunpack.c.h.b16 %v776
  %v1420 = vunpack.c.l.b16 %v777
  %v1421 = vunpack.c.h.b16 %v777
  %v1422 = vunpack.c.l.b16 %v778
  %v1423 = vunpack.c.h.b16 %v778
  %v1424 = vunpack.c.l.b16 %v779
  %v1425 = vunpack.c.h.b16 %v779
  %v1426 = vunpack.c.l.b16 %v780
  %v1427 = vunpack.c.h.b16 %v780
  %v1428 = vunpack.c.l.b16 %v781
  %v1429 = vunpack.c.h.b16 %v781
  %v1430 = vunpack.c.l.b16 %v782
  %v1431 = vunpack.c.h.b16 %v782
  %v1432 = vunpack.c.l.b16 %v783
  %v1433 = vunpack.c.h.b16 %v783
  %v1434 = vunpack.c.l.b16 %v784
  %v1435 = vunpack.c.h.b16 %v784
  %v1436 = vunpack.c.l.b16 %v785
  %v1437 = vunpack.c.h.b16 %v785
  %v1438 = vunpack.c.l.b16 %v786
  %v1439 = vunpack.c.h.b16 %v786
  %v1440 = vunpack.c.l.b16 %v787
  %v1441 = vunpack.c.h.b16 %v787
  %v1442 = vunpack.c.l.b16 %v788
  %v1443 = vunpack.c.h.b16 %v788
  %v1444 = vunpack.c.l.b16 %v789
  %v1445 = vunpack.c.h.b16 %v789
  %v1446 = vunpack.c.l.b16 %v790
  %v1447 = vunpack.c.h.b16 %v790
  %v1448 = vunpack.c.l.b16 %v791
  %v1449 = vunpack.c.h.b16 %v791
  %v1450 = vunpack.c.l.b16 %v792
  %v1451 = vunpack.c.h.b16 %v792
  %v1452 = vunpack.c.l.b16 %v793
  %v1453 = vunpack.c.h.b16 %v793
  %v1454 = vunpack.c.l.b16 %v794
  %v1455 = vunpack.c.h.b16 %v794
  %v1456 = vunpack.c.l.b16 %v795
  %v1457 = vunpack.c.h.b16 %v795
  %v1458 = vunpack.c.l.b16 %v796
  %v1459 = vunpack.c.h.b16 %v796
  %v1460 = vunpack.c.l.b16 %v797
  %v1461 = vunpack.c.h.b16 %v797
  %v1462 = vunpack.c.l.b16 %v798
  %v1463 = vunpack.c.h.b16 %v798
  %v1464 = vunpack.c.l.b16 %v799
  %v1465 = vunpack.c.h.b16 %v799
  %v1466 = vunpack.c.l.b16 %v800
  %v1467 = vunpack.c.h.b16 %v800
  %v1468 = vunpack.c.l.b16 %v801
  %v1469 = vunpack.c.h.b16 %v801
  %v1470 = vunpack.c.l.b16 %v802
  %v1471 = vunpack.c.h.b16 %v802
  %v1472 = vunpack.c.l.b16 %v803
  %v1473 = vunpack.c.h.b16 %v803
  %v1474 = vunpack.c.l.b16 %v804
  %v1475 = vunpack.c.h.b16 %v804
  %v1476 = vunpack.c.l.b16 %v805
  %v1477 = vunpack.c.h.b16 %v805
  %v1478 = vunpack.c.l.b16 %v806
  %v1479 = vunpack.c.h.b16 %v806
  %v1480 = vunpack.c.l.b16 %v807
  %v1481 = vunpack.c.h.b16 %v807
  %v1482 = vunpack.c.l.b16 %v808
  %v1483 = vunpack.c.h.b16 %v808
  %v1484 = vunpack.c.l.b16 %v809
  %v1485 = vunpack.c.h.b16 %v809
  %v1486 = vunpack.c.l.b16 %v810
  %v1487 = vunpack.c.h.b16 %v810
  %v1488 = vunpack.c.l.b16 %v811
  %v1489 = vunpack.c.h.b16 %v811
  %v1490 = vunpack.c.l.b16 %v812
  %v1491 = vunpack.c.h.b16 %v812
  %v1492 = vunpack.c.l.b16 %v813
  %v1493 = vunpack.c.h.b16 %v813
  %v1494 = vunpack.c.l.b16 %v814
  %v1495 = vunpack.c.h.b16 %v814
  %v1496 = vunpack.c.l.b16 %v815
  %v1497 = vunpack.c.h.b16 %v815
  %v1498 = vunpack.c.l.b16 %v816
  %v1499 = vunpack.c.h.b16 %v816
  %v1500 = vunpack.c.l.b16 %v817
  %v1501 = vunpack.c.h.b16 %v817
  %v1502 = vunpack.c.l.b16 %v818
  %v1503 = vunpack.c.h.b16 %v818
  %v1504 = vunpack.c.l.b16 %v819
  %v1505 = vunpack.c.h.b16 %v819
  %v1506 = vunpack.c.l.b16 %v820
  %v1507 = vunpack.c.h.b16 %v820
  %v1508 = vunpack.c.l.b16 %v821
  %v1509 = vunpack.c.h.b16 %v821
  %v1510 = vunpack.c.l.b16 %v822
  %v1511 = vunpack.c.h.b16 %v822
  %v1512 = vunpack.c.l.b16 %v823
  %v1513 = vunpack.c.h.b16 %v823
  %v1514 = vunpack.c.l.b16 %v824
  %v1515 = vunpack.c.h.b16 %v824
  %v1516 = vunpack.c.l.b16 %v825
  %v1517 = vunpack.c.h.b16 %v825
  %v1518 = vunpack.c.l.b16 %v826
  %v1519 = vunpack.c.h.b16 %v826
  %v1520 = vunpack.c.l.b16 %v827
  %v1521 = vunpack.c.h.b16 %v827
  %v1522 = vunpack.c.l.b16 %v828
  %v1523 = vunpack.c.h.b16 %v828
  %v1524 = vunpack.c.l.b16 %v829
  %v1525 = vunpack.c.h.b16 %v829
  %v1526 = vunpack.c.l.b16 %v830
  %v1527 = vunpack.c.h.b16 %v830
  %v1528 = vunpack.c.l.b16 %v831
  %v1529 = vunpack.c.h.b16 %v831
  %v1530 = vunpack.c.l.b16 %v832
  %v1531 = vunpack.c.h.b16 %v832
  %v1532 = vunpack.c.l.b16 %v833
  %v1533 = vunpack.c.h.b16 %v833
  %v1534 = vunpack.c.l.b16 %v834
  %v1535 = vunpack.c.h.b16 %v834
  %v1536 = vunpack.c.l.b16 %v835
  %v1537 = vunpack.c.h.b16 %v835
  %v1538 = vunpack.c.l.b16 %v836
  %v1539 = vunpack.c.h.b16 %v836
  %v1540 = vunpack.c.l.b16 %v837
  %v1541 = vunpack.c.h.b16 %v837
  %v1542 = vunpack.c.l.b16 %v838
  %v1543 = vunpack.c.h.b16 %v838
  %v1544 = vunpack.c.l.b16 %v839
  %v1545 = vunpack.c.h.b16 %v839
  %v1546 = vunpack.c.l.b16 %v840
  %v1547 = vunpack.c.h.b16 %v840
  %v1548 = vunpack.c.l.b16 %v841
  %v1549 = vunpack.c.h.b16 %v841
  %v1550 = vunpack.c.l.b16 %v842
  %v1551 = vunpack.c.h.b16 %v842
  %v1552 = vunpack.c.l.b16 %v843
  %v1553 = vunpack.c.h.b16 %v843
  %v1554 = vunpack.c.l.b16 %v844
  %v1555 = vunpack.c.h.b16 %v844
  %v1556 = vunpack.c.l.b16 %v845
  %v1557 = vunpack.c.h.b16 %v845
  %v1558 = vunpack.c.l.b16 %v846
  %v1559 = vunpack.c.h.b16 %v846
  %v1560 = vunpack.c.l.b16 %v847
  %v1561 = vunpack.c.h.b16 %v847
  %v1562 = vunpack.c.l.b16 %v848
  %v1563 = vunpack.c.h.b16 %v848
  %v1564 = vunpack.c.l.b16 %v849
  %v1565 = vunpack.c.h.b16 %v849
  %v1566 = vunpack.c.l.b16 %v850
  %v1567 = vunpack.c.h.b16 %v850
  %v1568 = vunpack.c.l.b16 %v851
  %v1569 = vunpack.c.h.b16 %v851
  %v1570 = vunpack.c.l.b16 %v852
  %v1571 = vunpack.c.h.b16 %v852
  %v1572 = vunpack.c.l.b16 %v853
  %v1573 = vunpack.c.h.b16 %v853
  %v1574 = vunpack.c.l.b16 %v854
  %v1575 = vunpack.c.h.b16 %v854
  %v1576 = vunpack.c.l.b16 %v855
  %v1577 = vunpack.c.h.b16 %v855
  %v1578 = vunpack.c.l.b16 %v856
  %v1579 = vunpack.c.h.b16 %v856
  %v1580 = vunpack.c.l.b16 %v857
  %v1581 = vunpack.c.h.b16 %v857
  %v1582 = vunpack.c.l.b16 %v858
  %v1583 = vunpack.c.h.b16 %v858
  %v1584 = vunpack.c.l.b16 %v859
  %v1585 = vunpack.c.h.b16 %v859
  %v1586 = vunpack.c.l.b16 %v860
  %v1587 = vunpack.c.h.b16 %v860
  %v1588 = vunpack.c.l.b16 %v861
  %v1589 = vunpack.c.h.b16 %v861
  %v1590 = vunpack.c.l.b16 %v862
  %v1591 = vunpack.c.h.b16 %v862
  %v1592 = vunpack.c.l.b16 %v863
  %v1593 = vunpack.c.h.b16 %v863
  %v1594 = vunpack.c.l.b16 %v864
  %v1595 = vunpack.c.h.b16 %v864
  %v1596 = vunpack.c.l.b16 %v865
  %v1597 = vunpack.c.h.b16 %v865
  %v1598 = vunpack.c.l.b16 %v866
  %v1599 = vunpack.c.h.b16 %v866
  %v1600 = vunpack.c.l.b16 %v867
  %v1601 = vunpack.c.h.b16 %v867
  %v1602 = vunpack.c.l.b16 %v868
  %v1603 = vunpack.c.h.b16 %v868
  %v1604 = vunpack.c.l.b16 %v869
  %v1605 = vunpack.c.h.b16 %v869
  %v1606 = vunpack.c.l.b16 %v870
  %v1607 = vunpack.c.h.b16 %v870
  %v1608 = vunpack.c.l.b16 %v871
  %v1609 = vunpack.c.h.b16 %v871
  %v1610 = vunpack.c.l.b16 %v872
  %v1611 = vunpack.c.h.b16 %v872
  %v1612 = vunpack.c.l.b16 %v873
  %v1613 = vunpack.c.h.b16 %v873
  %v1614 = vunpack.c.l.b16 %v874
  %v1615 = vunpack.c.h.b16 %v874
  %v1616 = vunpack.c.l.b16 %v875
  %v1617 = vunpack.c.h.b16 %v875
  %v1618 = vunpack.c.l.b16 %v876
  %v1619 = vunpack.c.h.b16 %v876
  %v1620 = vunpack.c.l.b16 %v877
  %v1621 = vunpack.c.h.b16 %v877
  %v1622 = vunpack.c.l.b16 %v878
  %v1623 = vunpack.c.h.b16 %v878
  %v1624 = vunpack.c.l.b16 %v879
  %v1625 = vunpack.c.h.b16 %v879
  %v1626 = vunpack.c.l.b16 %v880
  %v1627 = vunpack.c.h.b16 %v880
  %v1628 = vunpack.c.l.b16 %v881
  %v1629 = vunpack.c.h.b16 %v881
  %v1630 = vunpack.c.l.b16 %v882
  %v1631 = vunpack.c.h.b16 %v882
  %v1632 = vunpack.c.l.b16 %v883
  %v1633 = vunpack.c.h.b16 %v883
  %v1634 = vunpack.c.l.b16 %v884
  %v1635 = vunpack.c.h.b16 %v884
  %v1636 = vunpack.c.l.b16 %v885
  %v1637 = vunpack.c.h.b16 %v885
  %v1638 = vunpack.c.l.b16 %v886
  %v1639 = vunpack.c.h.b16 %v886
  %v1640 = vunpack.c.l.b16 %v887
  %v1641 = vunpack.c.h.b16 %v887
  %v1642 = vunpack.c.l.b16 %v888
  %v1643 = vunpack.c.h.b16 %v888
  %v1644 = vunpack.c.l.b16 %v889
  %v1645 = vunpack.c.h.b16 %v889
  %v1646 = vunpack.c.l.b16 %v890
  %v1647 = vunpack.c.h.b16 %v890
  %v1648 = vunpack.c.l.b16 %v891
  %v1649 = vunpack.c.h.b16 %v891
  %v1650 = vunpack.c.l.b16 %v892
  %v1651 = vunpack.c.h.b16 %v892
  %v1652 = vunpack.c.l.b16 %v893
  %v1653 = vunpack.c.h.b16 %v893
  %v1654 = vunpack.c.l.b16 %v894
  %v1655 = vunpack.c.h.b16 %v894
  %v1656 = vunpack.c.l.b16 %v895
  %v1657 = vunpack.c.h.b16 %v895
  %v1658 = vunpack.c.l.b16 %v896
  %v1659 = vunpack.c.h.b16 %v896
  %v1660 = vunpack.c.l.b16 %v897
  %v1661 = vunpack.c.h.b16 %v897
  %v1662 = vunpack.c.l.b16 %v898
  %v1663 = vunpack.c.h.b16 %v898
  %v1664 = vunpack.c.l.b16 %v899
  %v1665 = vunpack.c.h.b16 %v899
  %v1666 = vunpack.c.l.b16 %v900
  %v1667 = vunpack.c.h.b16 %v900
  %v1668 = vunpack.c.l.b16 %v901
  %v1669 = vunpack.c.h.b16 %v901
  %v1670 = vunpack.c.l.b16 %v902
  %v1671 = vunpack.c.h.b16 %v902
  %v1672 = vunpack.c.l.b16 %v903
  %v1673 = vunpack.c.h.b16 %v903
  %v1674 = vunpack.c.l.b16 %v904
  %v1675 = vunpack.c.h.b16 %v904
  %v1676 = vunpack.c.l.b16 %v905
  %v1677 = vunpack.c.h.b16 %v905
  %v1678 = vunpack.c.l.b16 %v906
  %v1679 = vunpack.c.h.b16 %v906
  %v1680 = vunpack.c.l.b16 %v907
  %v1681 = vunpack.c.h.b16 %v907
  %v1682 = vunpack.c.l.b16 %v908
  %v1683 = vunpack.c.h.b16 %v908
  %v1684 = vunpack.c.l.b16 %v909
  %v1685 = vunpack.c.h.b16 %v909
  %v1686 = vunpack.c.l.b16 %v910
  %v1687 = vunpack.c.h.b16 %v910
  %v1688 = vunpack.c.l.b16 %v911
  %v1689 = vunpack.c.h.b16 %v911
  %v1690 = vunpack.c.l.b16 %v912
  %v1691 = vunpack.c.h.b16 %v912
  %v1692 = vunpack.c.l.b16 %v913
  %v1693 = vunpack.c.h.b16 %v913
  %v1694 = vunpack.c.l.b16 %v914
  %v1695 = vunpack.c.h.b16 %v914
  %v1696 = vunpack.c.l.b16 %v915
  %v1697 = vunpack.c.h.b16 %v915
  %v1698 = vunpack.c.l.b16 %v916
  %v1699 = vunpack.c.h.b16 %v916
  %v1700 = vunpack.c.l.b16 %v917
  %v1701 = vunpack.c.h.b16 %v917
  %v1702 = vunpack.c.l.b16 %v918
  %v1703 = vunpack.c.h.b16 %v918
  %v1704 = vunpack.c.l.b16 %v919
  %v1705 = vunpack.c.h.b16 %v919
  %v1706 = vunpack.c.l.b16 %v920
  %v1707 = vunpack.c.h.b16 %v920
  %v1708 = vunpack.c.l.b16 %v921
  %v1709 = vunpack.c.h.b16 %v921
  %v1710 = vunpack.c.l.b16 %v922
  %v1711 = vunpack.c.h.b16 %v922
  %v1712 = vunpack.c.l.b16 %v923
  %v1713 = vunpack.c.h.b16 %v923
  %v1714 = vunpack.c.l.b16 %v924
  %v1715 = vunpack.c.h.b16 %v924
  %v1716 = vunpack.c.l.b16 %v925
  %v1717 = vunpack.c.h.b16 %v925
  %v1718 = vunpack.c.l.b16 %v926
  %v1719 = vunpack.c.h.b16 %v926
  %v1720 = vunpack.c.l.b16 %v927
  %v1721 = vunpack.c.h.b16 %v927
  %v1722 = vunpack.c.l.b16 %v928
  %v1723 = vunpack.c.h.b16 %v928
  %v1724 = vunpack.c.l.b16 %v929
  %v1725 = vunpack.c.h.b16 %v929
  %v1726 = vunpack.c.l.b16 %v930
  %v1727 = vunpack.c.h.b16 %v930
  %v1728 = vunpack.c.l.b16 %v931
  %v1729 = vunpack.c.h.b16 %v931
  %v1730 = vunpack.c.l.b16 %v932
  %v1731 = vunpack.c.h.b16 %v932
  %v1732 = vunpack.c.l.b16 %v933
  %v1733 = vunpack.c.h.b16 %v933
  %v1734 = vunpack.c.l.b16 %v934
  %v1735 = vunpack.c.h.b16 %v934
  %v1736 = vunpack.c.l.b16 %v935
  %v1737 = vunpack.c.h.b16 %v935
  %v1738 = vunpack.c.l.b16 %v936
  %v1739 = vunpack.c.h.b16 %v936
  %v1740 = vunpack.c.l.b16 %v937
  %v1741 = vunpack.c.h.b16 %v937
  %v1742 = vunpack.c.l.b16 %v938
  %v1743 = vunpack.c.h.b16 %v938
  %v1744 = vunpack.c.l.b16 %v939
  %v1745 = vunpack.c.h.b16 %v939
  %v1746 = vunpack.c.l.b16 %v940
  %v1747 = vunpack.c.h.b16 %v940
  %v1748 = vunpack.c.l.b16 %v941
  %v1749 = vunpack.c.h.b16 %v941
  %v1750 = vunpack.c.l.b16 %v942
  %v1751 = vunpack.c.h.b16 %v942
  %v1752 = vunpack.c.l.b16 %v943
  %v1753 = vunpack.c.h.b16 %v943
  %v1754 = vpack.c.b16 %v1250, %v1242
  %v1755 = vpack.c.b16 %v1251, %v1243
  %v1756 = vpack.c.b16 %v1252, %v1244
  %v1757 = vpack.c.b16 %v1253, %v1245
  %v1758 = vpack.c.b16 %v1254, %v1246
  %v1759 = vpack.c.b16 %v1255, %v1247
  %v1760 = vpack.c.b16 %v1256, %v1248
  %v1761 = vpack.c.b16 %v1257, %v1249
  %v1762 = vpack.c.b16 %v1266, %v1258
  %v1763 = vpack.c.b16 %v1267, %v1259
  %v1764 = vpack.c.b16 %v1268, %v1260
  %v1765 = vpack.c.b16 %v1269, %v1261
  %v1766 = vpack.c.b16 %v1270, %v1262
  %v1767 = vpack.c.b16 %v1271, %v1263
  %v1768 = vpack.c.b16 %v1272, %v1264
  %v1769 = vpack.c.b16 %v1273, %v1265
  %v1770 = vpack.c.b16 %v1282, %v1274
  %v1771 = vpack.c.b16 %v1283, %v1275
  %v1772 = vpack.c.b16 %v1284, %v1276
  %v1773 = vpack.c.b16 %v1285, %v1277
  %v1774 = vpack.c.b16 %v1286, %v1278
  %v1775 = vpack.c.b16 %v1287, %v1279
  %v1776 = vpack.c.b16 %v1288, %v1280
  %v1777 = vpack.c.b16 %v1289, %v1281
  %v1778 = vpack.c.b16 %v1298, %v1290
  %v1779 = vpack.c.b16 %v1299, %v1291
  %v1780 = vpack.c.b16 %v1300, %v1292
  %v1781 = vpack.c.b16 %v1301, %v1293
  %v1782 = vpack.c.b16 %v1302, %v1294
  %v1783 = vpack.c.b16 %v1303, %v1295
  %v1784 = vpack.c.b16 %v1304, %v1296
  %v1785 = vpack.c.b16 %v1305, %v1297
  %v1786 = vpack.c.b16 %v1314, %v1306
  %v1787 = vpack.c.b16 %v1315, %v1307
  %v1788 = vpack.c.b16 %v1316, %v1308
  %v1789 = vpack.c.b16 %v1317, %v1309
  %v1790 = vpack.c.b16 %v1318, %v1310
  %v1791 = vpack.c.b16 %v1319, %v1311
  %v1792 = vpack.c.b16 %v1320, %v1312
  %v1793 = vpack.c.b16 %v1321, %v1313
  %v1794 = vpack.c.b16 %v1330, %v1322
  %v1795 = vpack.c.b16 %v1331, %v1323
  %v1796 = vpack.c.b16 %v1332, %v1324
  %v1797 = vpack.c.b16 %v1333, %v1325
  %v1798 = vpack.c.b16 %v1334, %v1326
  %v1799 = vpack.c.b16 %v1335, %v1327
  %v1800 = vpack.c.b16 %v1336, %v1328
  %v1801 = vpack.c.b16 %v1337, %v1329
  %v1802 = vpack.c.b16 %v1346, %v1338
  %v1803 = vpack.c.b16 %v1347, %v1339
  %v1804 = vpack.c.b16 %v1348, %v1340
  %v1805 = vpack.c.b16 %v1349, %v1341
  %v1806 = vpack.c.b16 %v1350, %v1342
  %v1807 = vpack.c.b16 %v1351, %v1343
  %v1808 = vpack.c.b16 %v1352, %v1344
  %v1809 = vpack.c.b16 %v1353, %v1345
  %v1810 = vpack.c.b16 %v1362, %v1354
  %v1811 = vpack.c.b16 %v1363, %v1355
  %v1812 = vpack.c.b16 %v1364, %v1356
  %v1813 = vpack.c.b16 %v1365, %v1357
  %v1814 = vpack.c.b16 %v1366, %v1358
  %v1815 = vpack.c.b16 %v1367, %v1359
  %v1816 = vpack.c.b16 %v1368, %v1360
  %v1817 = vpack.c.b16 %v1369, %v1361
  %v1818 = vpack.c.b16 %v1378, %v1370
  %v1819 = vpack.c.b16 %v1379, %v1371
  %v1820 = vpack.c.b16 %v1380, %v1372
  %v1821 = vpack.c.b16 %v1381, %v1373
  %v1822 = vpack.c.b16 %v1382, %v1374
  %v1823 = vpack.c.b16 %v1383, %v1375
  %v1824 = vpack.c.b16 %v1384, %v1376
  %v1825 = vpack.c.b16 %v1385, %v1377
  %v1826 = vpack.c.b16 %v1394, %v1386
  %v1827 = vpack.c.b16 %v1395, %v1387
  %v1828 = vpack.c.b16 %v1396, %v1388
  %v1829 = vpack.c.b16 %v1397, %v1389
  %v1830 = vpack.c.b16 %v1398, %v1390
  %v1831 = vpack.c.b16 %v1399, %v1391
  %v1832 = vpack.c.b16 %v1400, %v1392
  %v1833 = vpack.c.b16 %v1401, %v1393
  %v1834 = vpack.c.b16 %v1410, %v1402
  %v1835 = vpack.c.b16 %v1411, %v1403
  %v1836 = vpack.c.b16 %v1412, %v1404
  %v1837 = vpack.c.b16 %v1413, %v1405
  %v1838 = vpack.c.b16 %v1414, %v1406
  %v1839 = vpack.c.b16 %v1415, %v1407
  %v1840 = vpack.c.b16 %v1416, %v1408
  %v1841 = vpack.c.b16 %v1417, %v1409
  %v1842 = vpack.c.b16 %v1426, %v1418
  %v1843 = vpack.c.b16 %v1427, %v1419
  %v1844 = vpack.c.b16 %v1428, %v1420
  %v1845 = vpack.c.b16 %v1429, %v1421
  %v1846 = vpack.c.b16 %v1430, %v1422
  %v1847 = vpack.c.b16 %v1431, %v1423
  %v1848 = vpack.c.b16 %v1432, %v1424
  %v1849 = vpack.c.b16 %v1433, %v1425
  %v1850 = vpack.c.b16 %v1442, %v1434
  %v1851 = vpack.c.b16 %v1443, %v1435
  %v1852 = vpack.c.b16 %v1444, %v1436
  %v1853 = vpack.c.b16 %v1445, %v1437
  %v1854 = vpack.c.b16 %v1446, %v1438
  %v1855 = vpack.c.b16 %v1447, %v1439
  %v1856 = vpack.c.b16 %v1448, %v1440
  %v1857 = vpack.c.b16 %v1449, %v1441
  %v1858 = vpack.c.b16 %v1458, %v1450
  %v1859 = vpack.c.b16 %v1459, %v1451
  %v1860 = vpack.c.b16 %v1460, %v1452
  %v1861 = vpack.c.b16 %v1461, %v1453
  %v1862 = vpack.c.b16 %v1462, %v1454
  %v1863 = vpack.c.b16 %v1463, %v1455
  %v1864 = vpack.c.b16 %v1464, %v1456
  %v1865 = vpack.c.b16 %v1465, %v1457
  %v1866 = vpack.c.b16 %v1474, %v1466
  %v1867 = vpack.c.b16 %v1475, %v1467
  %v1868 = vpack.c.b16 %v1476, %v1468
  %v1869 = vpack.c.b16 %v1477, %v1469
  %v1870 = vpack.c.b16 %v1478, %v1470
  %v1871 = vpack.c.b16 %v1479, %v1471
  %v1872 = vpack.c.b16 %v1480, %v1472
  %v1873 = vpack.c.b16 %v1481, %v1473
  %v1874 = vpack.c.b16 %v1490, %v1482
  %v1875 = vpack.c.b16 %v1491, %v1483
  %v1876 = vpack.c.b16 %v1492, %v1484
  %v1877 = vpack.c.b16 %v1493, %v1485
  %v1878 = vpack.c.b16 %v1494, %v1486
  %v1879 = vpack.c.b16 %v1495, %v1487
  %v1880 = vpack.c.b16 %v1496, %v1488
  %v1881 = vpack.c.b16 %v1497, %v1489
  %v1882 = vpack.c.b16 %v1506, %v1498
  %v1883 = vpack.c.b16 %v1507, %v1499
  %v1884 = vpack.c.b16 %v1508, %v1500
  %v1885 = vpack.c.b16 %v1509, %v1501
  %v1886 = vpack.c.b16 %v1510, %v1502
  %v1887 = vpack.c.b16 %v1511, %v1503
  %v1888 = vpack.c.b16 %v1512, %v1504
  %v1889 = vpack.c.b16 %v1513, %v1505
  %v1890 = vpack.c.b16 %v1522, %v1514
  %v1891 = vpack.c.b16 %v1523, %v1515
  %v1892 = vpack.c.b16 %v1524, %v1516
  %v1893 = vpack.c.b16 %v1525, %v1517
  %v1894 = vpack.c.b16 %v1526, %v1518
  %v1895 = vpack.c.b16 %v1527, %v1519
  %v1896 = vpack.c.b16 %v1528, %v1520
  %v1897 = vpack.c.b16 %v1529, %v1521
  %v1898 = vpack.c.b16 %v1538, %v1530
  %v1899 = vpack.c.b16 %v1539, %v1531
  %v1900 = vpack.c.b16 %v1540, %v1532
  %v1901 = vpack.c.b16 %v1541, %v1533
  %v1902 = vpack.c.b16 %v1542, %v1534
  %v1903 = vpack.c.b16 %v1543, %v1535
  %v1904 = vpack.c.b16 %v1544, %v1536
  %v1905 = vpack.c.b16 %v1545, %v1537
  %v1906 = vpack.c.b16 %v1554, %v1546
  %v1907 = vpack.c.b16 %v1555, %v1547
  %v1908 = vpack.c.b16 %v1556, %v1548
  %v1909 = vpack.c.b16 %v1557, %v1549
  %v1910 = vpack.c.b16 %v1558, %v1550
  %v1911 = vpack.c.b16 %v1559, %v1551
  %v1912 = vpack.c.b16 %v1560, %v1552
  %v1913 = vpack.c.b16 %v1561, %v1553
  %v1914 = vpack.c.b16 %v1570, %v1562
  %v1915 = vpack.c.b16 %v1571, %v1563
  %v1916 = vpack.c.b16 %v1572, %v1564
  %v1917 = vpack.c.b16 %v1573, %v1565
  %v1918 = vpack.c.b16 %v1574, %v1566
  %v1919 = vpack.c.b16 %v1575, %v1567
  %v1920 = vpack.c.b16 %v1576, %v1568
  %v1921 = vpack.c.b16 %v1577, %v1569
  %v1922 = vpack.c.b16 %v1586, %v1578
  %v1923 = vpack.c.b16 %v1587, %v1579
  %v1924 = vpack.c.b16 %v1588, %v1580
  %v1925 = vpack.c.b16 %v1589, %v1581
  %v1926 = vpack.c.b16 %v1590, %v1582
  %v1927 = vpack.c.b16 %v1591, %v1583
  %v1928 = vpack.c.b16 %v1592, %v1584
  %v1929 = vpack.c.b16 %v1593, %v1585
  %v1930 = vpack.c.b16 %v1602, %v1594
  %v1931 = vpack.c.b16 %v1603, %v1595
  %v1932 = vpack.c.b16 %v1604, %v1596
  %v1933 = vpack.c.b16 %v1605, %v1597
  %v1934 = vpack.c.b16 %v1606, %v1598
  %v1935 = vpack.c.b16 %v1607, %v1599
  %v1936 = vpack.c.b16 %v1608, %v1600
  %v1937 = vpack.c.b16 %v1609, %v1601
  %v1938 = vpack.c.b16 %v1618, %v1610
  %v1939 = vpack.c.b16 %v1619, %v1611
  %v1940 = vpack.c.b16 %v1620, %v1612
  %v1941 = vpack.c.b16 %v1621, %v1613
  %v1942 = vpack.c.b16 %v1622, %v1614
  %v1943 = vpack.c.b16 %v1623, %v1615
  %v1944 = vpack.c.b16 %v1624, %v1616
  %v1945 = vpack.c.b16 %v1625, %v1617
  %v1946 = vpack.c.b16 %v1634, %v1626
  %v1947 = vpack.c.b16 %v1635, %v1627
  %v1948 = vpack.c.b16 %v1636, %v1628
  %v1949 = vpack.c.b16 %v1637, %v1629
  %v1950 = vpack.c.b16 %v1638, %v1630
  %v1951 = vpack.c.b16 %v1639, %v1631
  %v1952 = vpack.c.b16 %v1640, %v1632
  %v1953 = vpack.c.b16 %v1641, %v1633
  %v1954 = vpack.c.b16 %v1650, %v1642
  %v1955 = vpack.c.b16 %v1651, %v1643
  %v1956 = vpack.c.b16 %v1652, %v1644
  %v1957 = vpack.c.b16 %v1653, %v1645
  %v1958 = vpack.c.b16 %v1654, %v1646
  %v1959 = vpack.c.b16 %v1655, %v1647
  %v1960 = vpack.c.b16 %v1656, %v1648
  %v1961 = vpack.c.b16 %v1657, %v1649
  %v1962 = vpack.c.b16 %v1666, %v1658
  %v1963 = vpack.c.b16 %v1667, %v1659
  %v1964 = vpack.c.b16 %v1668, %v1660
  %v1965 = vpack.c.b16 %v1669, %v1661
  %v1966 = vpack.c.b16 %v1670, %v1662
  %v1967 = vpack.c.b16 %v1671, %v1663
  %v1968 = vpack.c.b16 %v1672, %v1664
  %v1969 = vpack.c.b16 %v1673, %v1665
  %v1970 = vpack.c.b16 %v1682, %v1674
  %v1971 = vpack.c.b16 %v1683, %v1675
  %v1972 = vpack.c.b16 %v1684, %v1676
  %v1973 = vpack.c.b16 %v1685, %v1677
  %v1974 = vpack.c.b16 %v1686, %v1678
  %v1975 = vpack.c.b16 %v1687, %v1679
  %v1976 = vpack.c.b16 %v1688, %v1680
  %v1977 = vpack.c.b16 %v1689, %v1681
  %v1978 = vpack.c.b16 %v1698, %v1690
  %v1979 = vpack.c.b16 %v1699, %v1691
  %v1980 = vpack.c.b16 %v1700, %v1692
  %v1981 = vpack.c.b16 %v1701, %v1693
  %v1982 = vpack.c.b16 %v1702, %v1694
  %v1983 = vpack.c.b16 %v1703, %v1695
  %v1984 = vpack.c.b16 %v1704, %v1696
  %v1985 = vpack.c.b16 %v1705, %v1697
  %v1986 = vpack.c.b16 %v1714, %v1706
  %v1987 = vpack.c.b16 %v1715, %v1707
  %v1988 = vpack.c.b16 %v1716, %v1708
  %v1989 = vpack.c.b16 %v1717, %v1709
  %v1990 = vpack.c.b16 %v1718, %v1710
  %v1991 = vpack.c.b16 %v1719, %v1711
  %v1992 = vpack.c.b16 %v1720, %v1712
  %v1993 = vpack.c.b16 %v1721, %v1713
  %v1994 = vpack.c.b16 %v1730, %v1722
  %v1995 = vpack.c.b16 %v1731, %v1723
  %v1996 = vpack.c.b16 %v1732, %v1724
  %v1997 = vpack.c.b16 %v1733, %v1725
  %v1998 = vpack.c.b16 %v1734, %v1726
  %v1999 = vpack.c.b16 %v1735, %v1727
  %v2000 = vpack.c.b16 %v1736, %v1728
  %v2001 = vpack.c.b16 %v1737, %v1729
  %v2002 = vpack.c.b16 %v1746, %v1738
  %v2003 = vpack.c.b16 %v1747, %v1739
  %v2004 = vpack.c.b16 %v1748, %v1740
  %v2005 = vpack.c.b16 %v1749, %v1741
  %v2006 = vpack.c.b16 %v1750, %v1742
  %v2007 = vpack.c.b16 %v1751, %v1743
  %v2008 = vpack.c.b16 %v1752, %v1744
  %v2009 = vpack.c.b16 %v1753, %v1745
  %2266 = vmatprep.subr.bf16.mxu0 %v1755
  %2267 = vmatpush1.bf16.msra.mxu0 %v1754
  %2268 = vmatprep.subr.bf16.mxu0 %v1763
  %2269 = vmatpush1.bf16.msra.mxu0 %v1762
  %2270 = vmatprep.subr.bf16.mxu0 %v1771
  %2271 = vmatpush1.bf16.msra.mxu0 %v1770
  %2272 = vmatprep.subr.bf16.mxu0 %v1779
  %2273 = vmatpush1.bf16.msra.mxu0 %v1778
  %2274 = vmatprep.subr.bf16.mxu0 %v1787
  %2275 = vmatpush1.bf16.msra.mxu0 %v1786
  %2276 = vmatprep.subr.bf16.mxu0 %v1795
  %2277 = vmatpush1.bf16.msra.mxu0 %v1794
  %2278 = vmatprep.subr.bf16.mxu0 %v1803
  %2279 = vmatpush1.bf16.msra.mxu0 %v1802
  %2280 = vmatprep.subr.bf16.mxu0 %v1811
  %2281 = vmatpush1.bf16.msra.mxu0 %v1810
  %2282 = vmatprep.subr.bf16.mxu0 %v1819
  %2283 = vmatpush1.bf16.msra.mxu0 %v1818
  %2284 = vmatprep.subr.bf16.mxu0 %v1827
  %2285 = vmatpush1.bf16.msra.mxu0 %v1826
  %2286 = vmatprep.subr.bf16.mxu0 %v1835
  %2287 = vmatpush1.bf16.msra.mxu0 %v1834
  %2288 = vmatprep.subr.bf16.mxu0 %v1843
  %2289 = vmatpush1.bf16.msra.mxu0 %v1842
  %2290 = vmatprep.subr.bf16.mxu0 %v1851
  %2291 = vmatpush1.bf16.msra.mxu0 %v1850
  %2292 = vmatprep.subr.bf16.mxu0 %v1859
  %2293 = vmatpush1.bf16.msra.mxu0 %v1858
  %2294 = vmatprep.subr.bf16.mxu0 %v1867
  %2295 = vmatpush1.bf16.msra.mxu0 %v1866
  %2296 = vmatprep.subr.bf16.mxu0 %v1875
  %2297 = vmatpush1.bf16.msra.mxu0 %v1874
  %2298 = vmatprep.mubr.bf16.mxu0 %v685
  %2299 = vmatmul.mubr.bf16.gmra.mrb[0].mxu0 %v684
  %v2300 = vpop.f32.mrb[0].mxu0
  %v2301 = vadd.f32 %v949, %v2300
  %v2302 = vpop.f32.mrb[0].mxu0
  %v2303 = vadd.f32 %v953, %v2302
  %v2304 = vpop.f32.mrb[0].mxu0
  %v2305 = vpop.f32.mrb[0].mxu0
  %2306 = vdwg.mxu0
  %2307 = vmatprep.subr.bf16.mxu0 %v1883
  %2308 = vmatpush1.bf16.msra.mxu0 %v1882
  %2309 = vmatprep.subr.bf16.mxu0 %v1891
  %2310 = vmatpush1.bf16.msra.mxu0 %v1890
  %2311 = vmatprep.subr.bf16.mxu0 %v1899
  %2312 = vmatpush1.bf16.msra.mxu0 %v1898
  %2313 = vmatprep.subr.bf16.mxu0 %v1907
  %2314 = vmatpush1.bf16.msra.mxu0 %v1906
  %2315 = vmatprep.subr.bf16.mxu0 %v1915
  %2316 = vmatpush1.bf16.msra.mxu0 %v1914
  %2317 = vmatprep.subr.bf16.mxu0 %v1923
  %2318 = vmatpush1.bf16.msra.mxu0 %v1922
  %2319 = vmatprep.subr.bf16.mxu0 %v1931
  %2320 = vmatpush1.bf16.msra.mxu0 %v1930
  %2321 = vmatprep.subr.bf16.mxu0 %v1939
  %2322 = vmatpush1.bf16.msra.mxu0 %v1938
  %2323 = vmatprep.subr.bf16.mxu0 %v1947
  %2324 = vmatpush1.bf16.msra.mxu0 %v1946
  %2325 = vmatprep.subr.bf16.mxu0 %v1955
  %2326 = vmatpush1.bf16.msra.mxu0 %v1954
  %2327 = vmatprep.subr.bf16.mxu0 %v1963
  %2328 = vmatpush1.bf16.msra.mxu0 %v1962
  %2329 = vmatprep.subr.bf16.mxu0 %v1971
  %2330 = vmatpush1.bf16.msra.mxu0 %v1970
  %2331 = vmatprep.subr.bf16.mxu0 %v1979
  %2332 = vmatpush1.bf16.msra.mxu0 %v1978
  %2333 = vmatprep.subr.bf16.mxu0 %v1987
  %2334 = vmatpush1.bf16.msra.mxu0 %v1986
  %2335 = vmatprep.subr.bf16.mxu0 %v1995
  %2336 = vmatpush1.bf16.msra.mxu0 %v1994
  %2337 = vmatprep.subr.bf16.mxu0 %v2003
  %2338 = vmatpush1.bf16.msra.mxu0 %v2002
  %2339 = vmatprep.mubr.bf16.mxu0 %v687
  %2340 = vmatmul.mubr.bf16.gmra.mrb[0].mxu0 %v686
  %v2341 = vpop.f32.mrb[0].mxu0
  %v2342 = vadd.f32 %v2301, %v2341
  %v2343 = vpop.f32.mrb[0].mxu0
  %v2344 = vadd.f32 %v2303, %v2343
  %v2345 = vpop.f32.mrb[0].mxu0
  %v2346 = vpop.f32.mrb[0].mxu0
  %2347 = vdwg.mxu0
  %2348 = vmatprep.subr.bf16.mxu0 %v1757
  %2349 = vmatpush1.bf16.msra.mxu0 %v1756
  %2350 = vmatprep.subr.bf16.mxu0 %v1765
  %2351 = vmatpush1.bf16.msra.mxu0 %v1764
  %2352 = vmatprep.subr.bf16.mxu0 %v1773
  %2353 = vmatpush1.bf16.msra.mxu0 %v1772
  %2354 = vmatprep.subr.bf16.mxu0 %v1781
  %2355 = vmatpush1.bf16.msra.mxu0 %v1780
  %2356 = vmatprep.subr.bf16.mxu0 %v1789
  %2357 = vmatpush1.bf16.msra.mxu0 %v1788
  %2358 = vmatprep.subr.bf16.mxu0 %v1797
  %2359 = vmatpush1.bf16.msra.mxu0 %v1796
  %2360 = vmatprep.subr.bf16.mxu0 %v1805
  %2361 = vmatpush1.bf16.msra.mxu0 %v1804
  %2362 = vmatprep.subr.bf16.mxu0 %v1813
  %2363 = vmatpush1.bf16.msra.mxu0 %v1812
  %2364 = vmatprep.subr.bf16.mxu0 %v1821
  %2365 = vmatpush1.bf16.msra.mxu0 %v1820
  %2366 = vmatprep.subr.bf16.mxu0 %v1829
  %2367 = vmatpush1.bf16.msra.mxu0 %v1828
  %2368 = vmatprep.subr.bf16.mxu0 %v1837
  %2369 = vmatpush1.bf16.msra.mxu0 %v1836
  %2370 = vmatprep.subr.bf16.mxu0 %v1845
  %2371 = vmatpush1.bf16.msra.mxu0 %v1844
  %2372 = vmatprep.subr.bf16.mxu0 %v1853
  %2373 = vmatpush1.bf16.msra.mxu0 %v1852
  %2374 = vmatprep.subr.bf16.mxu0 %v1861
  %2375 = vmatpush1.bf16.msra.mxu0 %v1860
  %2376 = vmatprep.subr.bf16.mxu0 %v1869
  %2377 = vmatpush1.bf16.msra.mxu0 %v1868
  %2378 = vmatprep.subr.bf16.mxu0 %v1877
  %2379 = vmatpush1.bf16.msra.mxu0 %v1876
  %2380 = vmatprep.mubr.bf16.mxu0 %v685
  %2381 = vmatmul.mubr.bf16.gmra.mrb[0].mxu0 %v684
  %v2382 = vpop.f32.mrb[0].mxu0
  %v2383 = vadd.f32 %v957, %v2382
  %v2384 = vpop.f32.mrb[0].mxu0
  %v2385 = vadd.f32 %v961, %v2384
  %v2386 = vpop.f32.mrb[0].mxu0
  %v2387 = vpop.f32.mrb[0].mxu0
  %2388 = vdwg.mxu0
  %2389 = vmatprep.subr.bf16.mxu0 %v1885
  %2390 = vmatpush1.bf16.msra.mxu0 %v1884
  %2391 = vmatprep.subr.bf16.mxu0 %v1893
  %2392 = vmatpush1.bf16.msra.mxu0 %v1892
  %2393 = vmatprep.subr.bf16.mxu0 %v1901
  %2394 = vmatpush1.bf16.msra.mxu0 %v1900
  %2395 = vmatprep.subr.bf16.mxu0 %v1909
  %2396 = vmatpush1.bf16.msra.mxu0 %v1908
  %2397 = vmatprep.subr.bf16.mxu0 %v1917
  %2398 = vmatpush1.bf16.msra.mxu0 %v1916
  %2399 = vmatprep.subr.bf16.mxu0 %v1925
  %2400 = vmatpush1.bf16.msra.mxu0 %v1924
  %2401 = vmatprep.subr.bf16.mxu0 %v1933
  %2402 = vmatpush1.bf16.msra.mxu0 %v1932
  %2403 = vmatprep.subr.bf16.mxu0 %v1941
  %2404 = vmatpush1.bf16.msra.mxu0 %v1940
  %2405 = vmatprep.subr.bf16.mxu0 %v1949
  %2406 = vmatpush1.bf16.msra.mxu0 %v1948
  %2407 = vmatprep.subr.bf16.mxu0 %v1957
  %2408 = vmatpush1.bf16.msra.mxu0 %v1956
  %2409 = vmatprep.subr.bf16.mxu0 %v1965
  %2410 = vmatpush1.bf16.msra.mxu0 %v1964
  %2411 = vmatprep.subr.bf16.mxu0 %v1973
  %2412 = vmatpush1.bf16.msra.mxu0 %v1972
  %2413 = vmatprep.subr.bf16.mxu0 %v1981
  %2414 = vmatpush1.bf16.msra.mxu0 %v1980
  %2415 = vmatprep.subr.bf16.mxu0 %v1989
  %2416 = vmatpush1.bf16.msra.mxu0 %v1988
  %2417 = vmatprep.subr.bf16.mxu0 %v1997
  %2418 = vmatpush1.bf16.msra.mxu0 %v1996
  %2419 = vmatprep.subr.bf16.mxu0 %v2005
  %2420 = vmatpush1.bf16.msra.mxu0 %v2004
  %2421 = vmatprep.mubr.bf16.mxu0 %v687
  %2422 = vmatmul.mubr.bf16.gmra.mrb[0].mxu0 %v686
  %v2423 = vpop.f32.mrb[0].mxu0
  %v2424 = vadd.f32 %v2383, %v2423
  %v2425 = vpop.f32.mrb[0].mxu0
  %v2426 = vadd.f32 %v2385, %v2425
  %v2427 = vpop.f32.mrb[0].mxu0
  %v2428 = vpop.f32.mrb[0].mxu0
  %2429 = vdwg.mxu0
  %2430 = vmatprep.subr.bf16.mxu0 %v1759
  %2431 = vmatpush1.bf16.msra.mxu0 %v1758
  %2432 = vmatprep.subr.bf16.mxu0 %v1767
  %2433 = vmatpush1.bf16.msra.mxu0 %v1766
  %2434 = vmatprep.subr.bf16.mxu0 %v1775
  %2435 = vmatpush1.bf16.msra.mxu0 %v1774
  %2436 = vmatprep.subr.bf16.mxu0 %v1783
  %2437 = vmatpush1.bf16.msra.mxu0 %v1782
  %2438 = vmatprep.subr.bf16.mxu0 %v1791
  %2439 = vmatpush1.bf16.msra.mxu0 %v1790
  %2440 = vmatprep.subr.bf16.mxu0 %v1799
  %2441 = vmatpush1.bf16.msra.mxu0 %v1798
  %2442 = vmatprep.subr.bf16.mxu0 %v1807
  %2443 = vmatpush1.bf16.msra.mxu0 %v1806
  %2444 = vmatprep.subr.bf16.mxu0 %v1815
  %2445 = vmatpush1.bf16.msra.mxu0 %v1814
  %2446 = vmatprep.subr.bf16.mxu0 %v1823
  %2447 = vmatpush1.bf16.msra.mxu0 %v1822
  %2448 = vmatprep.subr.bf16.mxu0 %v1831
  %2449 = vmatpush1.bf16.msra.mxu0 %v1830
  %2450 = vmatprep.subr.bf16.mxu0 %v1839
  %2451 = vmatpush1.bf16.msra.mxu0 %v1838
  %2452 = vmatprep.subr.bf16.mxu0 %v1847
  %2453 = vmatpush1.bf16.msra.mxu0 %v1846
  %2454 = vmatprep.subr.bf16.mxu0 %v1855
  %2455 = vmatpush1.bf16.msra.mxu0 %v1854
  %2456 = vmatprep.subr.bf16.mxu0 %v1863
  %2457 = vmatpush1.bf16.msra.mxu0 %v1862
  %2458 = vmatprep.subr.bf16.mxu0 %v1871
  %2459 = vmatpush1.bf16.msra.mxu0 %v1870
  %2460 = vmatprep.subr.bf16.mxu0 %v1879
  %2461 = vmatpush1.bf16.msra.mxu0 %v1878
  %2462 = vmatprep.mubr.bf16.mxu0 %v685
  %2463 = vmatmul.mubr.bf16.gmra.mrb[0].mxu0 %v684
  %v2464 = vpop.f32.mrb[0].mxu0
  %v2465 = vadd.f32 %v965, %v2464
  %v2466 = vpop.f32.mrb[0].mxu0
  %v2467 = vadd.f32 %v969, %v2466
  %v2468 = vpop.f32.mrb[0].mxu0
  %v2469 = vpop.f32.mrb[0].mxu0
  %2470 = vdwg.mxu0
  %2471 = vmatprep.subr.bf16.mxu0 %v1887
  %2472 = vmatpush1.bf16.msra.mxu0 %v1886
  %2473 = vmatprep.subr.bf16.mxu0 %v1895
  %2474 = vmatpush1.bf16.msra.mxu0 %v1894
  %2475 = vmatprep.subr.bf16.mxu0 %v1903
  %2476 = vmatpush1.bf16.msra.mxu0 %v1902
  %2477 = vmatprep.subr.bf16.mxu0 %v1911
  %2478 = vmatpush1.bf16.msra.mxu0 %v1910
  %2479 = vmatprep.subr.bf16.mxu0 %v1919
  %2480 = vmatpush1.bf16.msra.mxu0 %v1918
  %2481 = vmatprep.subr.bf16.mxu0 %v1927
  %2482 = vmatpush1.bf16.msra.mxu0 %v1926
  %2483 = vmatprep.subr.bf16.mxu0 %v1935
  %2484 = vmatpush1.bf16.msra.mxu0 %v1934
  %2485 = vmatprep.subr.bf16.mxu0 %v1943
  %2486 = vmatpush1.bf16.msra.mxu0 %v1942
  %2487 = vmatprep.subr.bf16.mxu0 %v1951
  %2488 = vmatpush1.bf16.msra.mxu0 %v1950
  %2489 = vmatprep.subr.bf16.mxu0 %v1959
  %2490 = vmatpush1.bf16.msra.mxu0 %v1958
  %2491 = vmatprep.subr.bf16.mxu0 %v1967
  %2492 = vmatpush1.bf16.msra.mxu0 %v1966
  %2493 = vmatprep.subr.bf16.mxu0 %v1975
  %2494 = vmatpush1.bf16.msra.mxu0 %v1974
  %2495 = vmatprep.subr.bf16.mxu0 %v1983
  %2496 = vmatpush1.bf16.msra.mxu0 %v1982
  %2497 = vmatprep.subr.bf16.mxu0 %v1991
  %2498 = vmatpush1.bf16.msra.mxu0 %v1990
  %2499 = vmatprep.subr.bf16.mxu0 %v1999
  %2500 = vmatpush1.bf16.msra.mxu0 %v1998
  %2501 = vmatprep.subr.bf16.mxu0 %v2007
  %2502 = vmatpush1.bf16.msra.mxu0 %v2006
  %2503 = vmatprep.mubr.bf16.mxu0 %v687
  %2504 = vmatmul.mubr.bf16.gmra.mrb[0].mxu0 %v686
  %v2505 = vpop.f32.mrb[0].mxu0
  %v2506 = vadd.f32 %v2465, %v2505
  %v2507 = vpop.f32.mrb[0].mxu0
  %v2508 = vadd.f32 %v2467, %v2507
  %v2509 = vpop.f32.mrb[0].mxu0
  %v2510 = vpop.f32.mrb[0].mxu0
  %2511 = vdwg.mxu0
  %2512 = vmatprep.subr.bf16.mxu0 %v1761
  %2513 = vmatpush1.bf16.msra.mxu0 %v1760
  %2514 = vmatprep.subr.bf16.mxu0 %v1769
  %2515 = vmatpush1.bf16.msra.mxu0 %v1768
  %2516 = vmatprep.subr.bf16.mxu0 %v1777
  %2517 = vmatpush1.bf16.msra.mxu0 %v1776
  %2518 = vmatprep.subr.bf16.mxu0 %v1785
  %2519 = vmatpush1.bf16.msra.mxu0 %v1784
  %2520 = vmatprep.subr.bf16.mxu0 %v1793
  %2521 = vmatpush1.bf16.msra.mxu0 %v1792
  %2522 = vmatprep.subr.bf16.mxu0 %v1801
  %2523 = vmatpush1.bf16.msra.mxu0 %v1800
  %2524 = vmatprep.subr.bf16.mxu0 %v1809
  %2525 = vmatpush1.bf16.msra.mxu0 %v1808
  %2526 = vmatprep.subr.bf16.mxu0 %v1817
  %2527 = vmatpush1.bf16.msra.mxu0 %v1816
  %2528 = vmatprep.subr.bf16.mxu0 %v1825
  %2529 = vmatpush1.bf16.msra.mxu0 %v1824
  %2530 = vmatprep.subr.bf16.mxu0 %v1833
  %2531 = vmatpush1.bf16.msra.mxu0 %v1832
  %2532 = vmatprep.subr.bf16.mxu0 %v1841
  %2533 = vmatpush1.bf16.msra.mxu0 %v1840
  %2534 = vmatprep.subr.bf16.mxu0 %v1849
  %2535 = vmatpush1.bf16.msra.mxu0 %v1848
  %2536 = vmatprep.subr.bf16.mxu0 %v1857
  %2537 = vmatpush1.bf16.msra.mxu0 %v1856
  %2538 = vmatprep.subr.bf16.mxu0 %v1865
  %2539 = vmatpush1.bf16.msra.mxu0 %v1864
  %2540 = vmatprep.subr.bf16.mxu0 %v1873
  %2541 = vmatpush1.bf16.msra.mxu0 %v1872
  %2542 = vmatprep.subr.bf16.mxu0 %v1881
  %2543 = vmatpush1.bf16.msra.mxu0 %v1880
  %2544 = vmatprep.mubr.bf16.mxu0 %v685
  %2545 = vmatmul.mubr.bf16.gmra.mrb[0].mxu0 %v684
  %v2546 = vpop.f32.mrb[0].mxu0
  %v2547 = vadd.f32 %v973, %v2546
  %v2548 = vpop.f32.mrb[0].mxu0
  %v2549 = vadd.f32 %v977, %v2548
  %v2550 = vpop.f32.mrb[0].mxu0
  %v2551 = vpop.f32.mrb[0].mxu0
  %2552 = vdwg.mxu0
  %2553 = vmatprep.subr.bf16.mxu0 %v1889
  %2554 = vmatpush1.bf16.msra.mxu0 %v1888
  %2555 = vmatprep.subr.bf16.mxu0 %v1897
  %2556 = vmatpush1.bf16.msra.mxu0 %v1896
  %2557 = vmatprep.subr.bf16.mxu0 %v1905
  %2558 = vmatpush1.bf16.msra.mxu0 %v1904
  %2559 = vmatprep.subr.bf16.mxu0 %v1913
  %2560 = vmatpush1.bf16.msra.mxu0 %v1912
  %2561 = vmatprep.subr.bf16.mxu0 %v1921
  %2562 = vmatpush1.bf16.msra.mxu0 %v1920
  %2563 = vmatprep.subr.bf16.mxu0 %v1929
  %2564 = vmatpush1.bf16.msra.mxu0 %v1928
  %2565 = vmatprep.subr.bf16.mxu0 %v1937
  %2566 = vmatpush1.bf16.msra.mxu0 %v1936
  %2567 = vmatprep.subr.bf16.mxu0 %v1945
  %2568 = vmatpush1.bf16.msra.mxu0 %v1944
  %2569 = vmatprep.subr.bf16.mxu0 %v1953
  %2570 = vmatpush1.bf16.msra.mxu0 %v1952
  %2571 = vmatprep.subr.bf16.mxu0 %v1961
  %2572 = vmatpush1.bf16.msra.mxu0 %v1960
  %2573 = vmatprep.subr.bf16.mxu0 %v1969
  %2574 = vmatpush1.bf16.msra.mxu0 %v1968
  %2575 = vmatprep.subr.bf16.mxu0 %v1977
  %2576 = vmatpush1.bf16.msra.mxu0 %v1976
  %2577 = vmatprep.subr.bf16.mxu0 %v1985
  %2578 = vmatpush1.bf16.msra.mxu0 %v1984
  %2579 = vmatprep.subr.bf16.mxu0 %v1993
  %2580 = vmatpush1.bf16.msra.mxu0 %v1992
  %2581 = vmatprep.subr.bf16.mxu0 %v2001
  %2582 = vmatpush1.bf16.msra.mxu0 %v2000
  %2583 = vmatprep.subr.bf16.mxu0 %v2009
  %2584 = vmatpush1.bf16.msra.mxu0 %v2008
  %2585 = vmatprep.mubr.bf16.mxu0 %v687
  %2586 = vmatmul.mubr.bf16.gmra.mrb[0].mxu0 %v686
  %v2587 = vpop.f32.mrb[0].mxu0
  %v2588 = vadd.f32 %v2547, %v2587
  %v2589 = vpop.f32.mrb[0].mxu0
  %v2590 = vadd.f32 %v2549, %v2589
  %v2591 = vpop.f32.mrb[0].mxu0
  %v2592 = vpop.f32.mrb[0].mxu0
  %2593 = vdwg.mxu0
  %v2594 = vmax.f32 %v2342, 0.0
  %v2595 = vmax.f32 %v2344, 0.0
  %v2596 = vmax.f32 %v2424, 0.0
  %v2597 = vmax.f32 %v2426, 0.0
  %v2598 = vmax.f32 %v2506, 0.0
  %v2599 = vmax.f32 %v2508, 0.0
  %v2600 = vmax.f32 %v2588, 0.0
  %v2601 = vmax.f32 %v2590, 0.0
  %v2602 = vpack.c.bf16 %v2594, %v2594
  %v2603 = vpack.c.bf16 %v2595, %v2595
  %v2604 = vpack.c.bf16 %v2596, %v2596
  %v2605 = vpack.c.bf16 %v2597, %v2597
  %v2606 = vpack.c.bf16 %v2598, %v2598
  %v2607 = vpack.c.bf16 %v2599, %v2599
  %v2608 = vpack.c.bf16 %v2600, %v2600
  %v2609 = vpack.c.bf16 %v2601, %v2601
  %v2610 = vld [vmem:[%s9] sm:$0xff]
  %v2611 = vld [vmem:[%s9 + $0x8] sm:$0xff]
  %v2612 = vld [vmem:[%s9 + $0x10] sm:$0xff]
  %v2613 = vld [vmem:[%s9 + $0x18] sm:$0xff]
  %v2614 = vld [vmem:[%s9 + $0x20] sm:$0xff]
  %v2615 = vld [vmem:[%s9 + $0x28] sm:$0xff]
  %v2616 = vld [vmem:[%s9 + $0x30] sm:$0xff]
  %v2617 = vld [vmem:[%s9 + $0x38] sm:$0xff]
  %v2618 = vld [vmem:[%s9 + $0x40] sm:$0xff]
  %v2619 = vld [vmem:[%s9 + $0x48] sm:$0xff]
  %v2620 = vld [vmem:[%s9 + $0x50] sm:$0xff]
  %v2621 = vld [vmem:[%s9 + $0x58] sm:$0xff]
  %v2622 = vld [vmem:[%s9 + $0x60] sm:$0xff]
  %v2623 = vld [vmem:[%s9 + $0x68] sm:$0xff]
  %v2624 = vld [vmem:[%s9 + $0x70] sm:$0xff]
  %v2625 = vld [vmem:[%s9 + $0x78] sm:$0xff]
  %v2626 = vld [vmem:[%s9 + $0x80] sm:$0xff]
  %v2627 = vld [vmem:[%s9 + $0x88] sm:$0xff]
  %v2628 = vld [vmem:[%s9 + $0x90] sm:$0xff]
  %v2629 = vld [vmem:[%s9 + $0x98] sm:$0xff]
  %v2630 = vld [vmem:[%s9 + $0xa0] sm:$0xff]
  %v2631 = vld [vmem:[%s9 + $0xa8] sm:$0xff]
  %v2632 = vld [vmem:[%s9 + $0xb0] sm:$0xff]
  %v2633 = vld [vmem:[%s9 + $0xb8] sm:$0xff]
  %v2634 = vld [vmem:[%s9 + $0xc0] sm:$0xff]
  %v2635 = vld [vmem:[%s9 + $0xc8] sm:$0xff]
  %v2636 = vld [vmem:[%s9 + $0xd0] sm:$0xff]
  %v2637 = vld [vmem:[%s9 + $0xd8] sm:$0xff]
  %v2638 = vld [vmem:[%s9 + $0xe0] sm:$0xff]
  %v2639 = vld [vmem:[%s9 + $0xe8] sm:$0xff]
  %v2640 = vld [vmem:[%s9 + $0xf0] sm:$0xff]
  %v2641 = vld [vmem:[%s9 + $0xf8] sm:$0xff]
  %v2642 = vld [vmem:[%s9 + $0x100] sm:$0xff]
  %v2643 = vld [vmem:[%s9 + $0x108] sm:$0xff]
  %v2644 = vld [vmem:[%s9 + $0x110] sm:$0xff]
  %v2645 = vld [vmem:[%s9 + $0x118] sm:$0xff]
  %v2646 = vld [vmem:[%s9 + $0x120] sm:$0xff]
  %v2647 = vld [vmem:[%s9 + $0x128] sm:$0xff]
  %v2648 = vld [vmem:[%s9 + $0x130] sm:$0xff]
  %v2649 = vld [vmem:[%s9 + $0x138] sm:$0xff]
  %v2650 = vld [vmem:[%s9 + $0x140] sm:$0xff]
  %v2651 = vld [vmem:[%s9 + $0x148] sm:$0xff]
  %v2652 = vld [vmem:[%s9 + $0x150] sm:$0xff]
  %v2653 = vld [vmem:[%s9 + $0x158] sm:$0xff]
  %v2654 = vld [vmem:[%s9 + $0x160] sm:$0xff]
  %v2655 = vld [vmem:[%s9 + $0x168] sm:$0xff]
  %v2656 = vld [vmem:[%s9 + $0x170] sm:$0xff]
  %v2657 = vld [vmem:[%s9 + $0x178] sm:$0xff]
  %v2658 = vld [vmem:[%s9 + $0x180] sm:$0xff]
  %v2659 = vld [vmem:[%s9 + $0x188] sm:$0xff]
  %v2660 = vld [vmem:[%s9 + $0x190] sm:$0xff]
  %v2661 = vld [vmem:[%s9 + $0x198] sm:$0xff]
  %v2662 = vld [vmem:[%s9 + $0x1a0] sm:$0xff]
  %v2663 = vld [vmem:[%s9 + $0x1a8] sm:$0xff]
  %v2664 = vld [vmem:[%s9 + $0x1b0] sm:$0xff]
  %v2665 = vld [vmem:[%s9 + $0x1b8] sm:$0xff]
  %v2666 = vld [vmem:[%s9 + $0x1c0] sm:$0xff]
  %v2667 = vld [vmem:[%s9 + $0x1c8] sm:$0xff]
  %v2668 = vld [vmem:[%s9 + $0x1d0] sm:$0xff]
  %v2669 = vld [vmem:[%s9 + $0x1d8] sm:$0xff]
  %v2670 = vld [vmem:[%s9 + $0x1e0] sm:$0xff]
  %v2671 = vld [vmem:[%s9 + $0x1e8] sm:$0xff]
  %v2672 = vld [vmem:[%s9 + $0x1f0] sm:$0xff]
  %v2673 = vld [vmem:[%s9 + $0x1f8] sm:$0xff]
  %v2674 = vld [vmem:[%s9 + $0x200] sm:$0xff]
  %v2675 = vld [vmem:[%s9 + $0x208] sm:$0xff]
  %v2676 = vld [vmem:[%s9 + $0x210] sm:$0xff]
  %v2677 = vld [vmem:[%s9 + $0x218] sm:$0xff]
  %v2678 = vld [vmem:[%s9 + $0x220] sm:$0xff]
  %v2679 = vld [vmem:[%s9 + $0x228] sm:$0xff]
  %v2680 = vld [vmem:[%s9 + $0x230] sm:$0xff]
  %v2681 = vld [vmem:[%s9 + $0x238] sm:$0xff]
  %v2682 = vld [vmem:[%s9 + $0x240] sm:$0xff]
  %v2683 = vld [vmem:[%s9 + $0x248] sm:$0xff]
  %v2684 = vld [vmem:[%s9 + $0x250] sm:$0xff]
  %v2685 = vld [vmem:[%s9 + $0x258] sm:$0xff]
  %v2686 = vld [vmem:[%s9 + $0x260] sm:$0xff]
  %v2687 = vld [vmem:[%s9 + $0x268] sm:$0xff]
  %v2688 = vld [vmem:[%s9 + $0x270] sm:$0xff]
  %v2689 = vld [vmem:[%s9 + $0x278] sm:$0xff]
  %v2690 = vld [vmem:[%s9 + $0x280] sm:$0xff]
  %v2691 = vld [vmem:[%s9 + $0x288] sm:$0xff]
  %v2692 = vld [vmem:[%s9 + $0x290] sm:$0xff]
  %v2693 = vld [vmem:[%s9 + $0x298] sm:$0xff]
  %v2694 = vld [vmem:[%s9 + $0x2a0] sm:$0xff]
  %v2695 = vld [vmem:[%s9 + $0x2a8] sm:$0xff]
  %v2696 = vld [vmem:[%s9 + $0x2b0] sm:$0xff]
  %v2697 = vld [vmem:[%s9 + $0x2b8] sm:$0xff]
  %v2698 = vld [vmem:[%s9 + $0x2c0] sm:$0xff]
  %v2699 = vld [vmem:[%s9 + $0x2c8] sm:$0xff]
  %v2700 = vld [vmem:[%s9 + $0x2d0] sm:$0xff]
  %v2701 = vld [vmem:[%s9 + $0x2d8] sm:$0xff]
  %v2702 = vld [vmem:[%s9 + $0x2e0] sm:$0xff]
  %v2703 = vld [vmem:[%s9 + $0x2e8] sm:$0xff]
  %v2704 = vld [vmem:[%s9 + $0x2f0] sm:$0xff]
  %v2705 = vld [vmem:[%s9 + $0x2f8] sm:$0xff]
  %v2706 = vld [vmem:[%s9 + $0x300] sm:$0xff]
  %v2707 = vld [vmem:[%s9 + $0x308] sm:$0xff]
  %v2708 = vld [vmem:[%s9 + $0x310] sm:$0xff]
  %v2709 = vld [vmem:[%s9 + $0x318] sm:$0xff]
  %v2710 = vld [vmem:[%s9 + $0x320] sm:$0xff]
  %v2711 = vld [vmem:[%s9 + $0x328] sm:$0xff]
  %v2712 = vld [vmem:[%s9 + $0x330] sm:$0xff]
  %v2713 = vld [vmem:[%s9 + $0x338] sm:$0xff]
  %v2714 = vld [vmem:[%s9 + $0x340] sm:$0xff]
  %v2715 = vld [vmem:[%s9 + $0x348] sm:$0xff]
  %v2716 = vld [vmem:[%s9 + $0x350] sm:$0xff]
  %v2717 = vld [vmem:[%s9 + $0x358] sm:$0xff]
  %v2718 = vld [vmem:[%s9 + $0x360] sm:$0xff]
  %v2719 = vld [vmem:[%s9 + $0x368] sm:$0xff]
  %v2720 = vld [vmem:[%s9 + $0x370] sm:$0xff]
  %v2721 = vld [vmem:[%s9 + $0x378] sm:$0xff]
  %v2722 = vld [vmem:[%s9 + $0x380] sm:$0xff]
  %v2723 = vld [vmem:[%s9 + $0x388] sm:$0xff]
  %v2724 = vld [vmem:[%s9 + $0x390] sm:$0xff]
  %v2725 = vld [vmem:[%s9 + $0x398] sm:$0xff]
  %v2726 = vld [vmem:[%s9 + $0x3a0] sm:$0xff]
  %v2727 = vld [vmem:[%s9 + $0x3a8] sm:$0xff]
  %v2728 = vld [vmem:[%s9 + $0x3b0] sm:$0xff]
  %v2729 = vld [vmem:[%s9 + $0x3b8] sm:$0xff]
  %v2730 = vld [vmem:[%s9 + $0x3c0] sm:$0xff]
  %v2731 = vld [vmem:[%s9 + $0x3c8] sm:$0xff]
  %v2732 = vld [vmem:[%s9 + $0x3d0] sm:$0xff]
  %v2733 = vld [vmem:[%s9 + $0x3d8] sm:$0xff]
  %v2734 = vld [vmem:[%s9 + $0x3e0] sm:$0xff]
  %v2735 = vld [vmem:[%s9 + $0x3e8] sm:$0xff]
  %v2736 = vld [vmem:[%s9 + $0x3f0] sm:$0xff]
  %v2737 = vld [vmem:[%s9 + $0x3f8] sm:$0xff]
  %v2738 = vld [vmem:[%s10] sm:$0x3]
  %v2740 = vlaneseq
  %v2741 = vshrl.u32 %v2740, 7
  %v2742 = vsub.s32 0, %v2741
  %v2743 = vrot.slane %v2738, %v2742
  %v2744 = vlaneseq
  %v2745 = vshrl.u32 %v2744, 7
  %v2746 = vsub.s32 1, %v2745
  %v2747 = vrot.slane %v2738, %v2746
  %v2878 = vunpack.c.l.b16 %v2610
  %v2879 = vunpack.c.h.b16 %v2610
  %v2880 = vunpack.c.l.b16 %v2611
  %v2881 = vunpack.c.h.b16 %v2611
  %v2882 = vunpack.c.l.b16 %v2612
  %v2883 = vunpack.c.h.b16 %v2612
  %v2884 = vunpack.c.l.b16 %v2613
  %v2885 = vunpack.c.h.b16 %v2613
  %v2886 = vunpack.c.l.b16 %v2614
  %v2887 = vunpack.c.h.b16 %v2614
  %v2888 = vunpack.c.l.b16 %v2615
  %v2889 = vunpack.c.h.b16 %v2615
  %v2890 = vunpack.c.l.b16 %v2616
  %v2891 = vunpack.c.h.b16 %v2616
  %v2892 = vunpack.c.l.b16 %v2617
  %v2893 = vunpack.c.h.b16 %v2617
  %v2894 = vunpack.c.l.b16 %v2618
  %v2895 = vunpack.c.h.b16 %v2618
  %v2896 = vunpack.c.l.b16 %v2619
  %v2897 = vunpack.c.h.b16 %v2619
  %v2898 = vunpack.c.l.b16 %v2620
  %v2899 = vunpack.c.h.b16 %v2620
  %v2900 = vunpack.c.l.b16 %v2621
  %v2901 = vunpack.c.h.b16 %v2621
  %v2902 = vunpack.c.l.b16 %v2622
  %v2903 = vunpack.c.h.b16 %v2622
  %v2904 = vunpack.c.l.b16 %v2623
  %v2905 = vunpack.c.h.b16 %v2623
  %v2906 = vunpack.c.l.b16 %v2624
  %v2907 = vunpack.c.h.b16 %v2624
  %v2908 = vunpack.c.l.b16 %v2625
  %v2909 = vunpack.c.h.b16 %v2625
  %v2910 = vunpack.c.l.b16 %v2626
  %v2911 = vunpack.c.h.b16 %v2626
  %v2912 = vunpack.c.l.b16 %v2627
  %v2913 = vunpack.c.h.b16 %v2627
  %v2914 = vunpack.c.l.b16 %v2628
  %v2915 = vunpack.c.h.b16 %v2628
  %v2916 = vunpack.c.l.b16 %v2629
  %v2917 = vunpack.c.h.b16 %v2629
  %v2918 = vunpack.c.l.b16 %v2630
  %v2919 = vunpack.c.h.b16 %v2630
  %v2920 = vunpack.c.l.b16 %v2631
  %v2921 = vunpack.c.h.b16 %v2631
  %v2922 = vunpack.c.l.b16 %v2632
  %v2923 = vunpack.c.h.b16 %v2632
  %v2924 = vunpack.c.l.b16 %v2633
  %v2925 = vunpack.c.h.b16 %v2633
  %v2926 = vunpack.c.l.b16 %v2634
  %v2927 = vunpack.c.h.b16 %v2634
  %v2928 = vunpack.c.l.b16 %v2635
  %v2929 = vunpack.c.h.b16 %v2635
  %v2930 = vunpack.c.l.b16 %v2636
  %v2931 = vunpack.c.h.b16 %v2636
  %v2932 = vunpack.c.l.b16 %v2637
  %v2933 = vunpack.c.h.b16 %v2637
  %v2934 = vunpack.c.l.b16 %v2638
  %v2935 = vunpack.c.h.b16 %v2638
  %v2936 = vunpack.c.l.b16 %v2639
  %v2937 = vunpack.c.h.b16 %v2639
  %v2938 = vunpack.c.l.b16 %v2640
  %v2939 = vunpack.c.h.b16 %v2640
  %v2940 = vunpack.c.l.b16 %v2641
  %v2941 = vunpack.c.h.b16 %v2641
  %v2942 = vunpack.c.l.b16 %v2642
  %v2943 = vunpack.c.h.b16 %v2642
  %v2944 = vunpack.c.l.b16 %v2643
  %v2945 = vunpack.c.h.b16 %v2643
  %v2946 = vunpack.c.l.b16 %v2644
  %v2947 = vunpack.c.h.b16 %v2644
  %v2948 = vunpack.c.l.b16 %v2645
  %v2949 = vunpack.c.h.b16 %v2645
  %v2950 = vunpack.c.l.b16 %v2646
  %v2951 = vunpack.c.h.b16 %v2646
  %v2952 = vunpack.c.l.b16 %v2647
  %v2953 = vunpack.c.h.b16 %v2647
  %v2954 = vunpack.c.l.b16 %v2648
  %v2955 = vunpack.c.h.b16 %v2648
  %v2956 = vunpack.c.l.b16 %v2649
  %v2957 = vunpack.c.h.b16 %v2649
  %v2958 = vunpack.c.l.b16 %v2650
  %v2959 = vunpack.c.h.b16 %v2650
  %v2960 = vunpack.c.l.b16 %v2651
  %v2961 = vunpack.c.h.b16 %v2651
  %v2962 = vunpack.c.l.b16 %v2652
  %v2963 = vunpack.c.h.b16 %v2652
  %v2964 = vunpack.c.l.b16 %v2653
  %v2965 = vunpack.c.h.b16 %v2653
  %v2966 = vunpack.c.l.b16 %v2654
  %v2967 = vunpack.c.h.b16 %v2654
  %v2968 = vunpack.c.l.b16 %v2655
  %v2969 = vunpack.c.h.b16 %v2655
  %v2970 = vunpack.c.l.b16 %v2656
  %v2971 = vunpack.c.h.b16 %v2656
  %v2972 = vunpack.c.l.b16 %v2657
  %v2973 = vunpack.c.h.b16 %v2657
  %v2974 = vunpack.c.l.b16 %v2658
  %v2975 = vunpack.c.h.b16 %v2658
  %v2976 = vunpack.c.l.b16 %v2659
  %v2977 = vunpack.c.h.b16 %v2659
  %v2978 = vunpack.c.l.b16 %v2660
  %v2979 = vunpack.c.h.b16 %v2660
  %v2980 = vunpack.c.l.b16 %v2661
  %v2981 = vunpack.c.h.b16 %v2661
  %v2982 = vunpack.c.l.b16 %v2662
  %v2983 = vunpack.c.h.b16 %v2662
  %v2984 = vunpack.c.l.b16 %v2663
  %v2985 = vunpack.c.h.b16 %v2663
  %v2986 = vunpack.c.l.b16 %v2664
  %v2987 = vunpack.c.h.b16 %v2664
  %v2988 = vunpack.c.l.b16 %v2665
  %v2989 = vunpack.c.h.b16 %v2665
  %v2990 = vunpack.c.l.b16 %v2666
  %v2991 = vunpack.c.h.b16 %v2666
  %v2992 = vunpack.c.l.b16 %v2667
  %v2993 = vunpack.c.h.b16 %v2667
  %v2994 = vunpack.c.l.b16 %v2668
  %v2995 = vunpack.c.h.b16 %v2668
  %v2996 = vunpack.c.l.b16 %v2669
  %v2997 = vunpack.c.h.b16 %v2669
  %v2998 = vunpack.c.l.b16 %v2670
  %v2999 = vunpack.c.h.b16 %v2670
  %v3000 = vunpack.c.l.b16 %v2671
  %v3001 = vunpack.c.h.b16 %v2671
  %v3002 = vunpack.c.l.b16 %v2672
  %v3003 = vunpack.c.h.b16 %v2672
  %v3004 = vunpack.c.l.b16 %v2673
  %v3005 = vunpack.c.h.b16 %v2673
  %v3006 = vunpack.c.l.b16 %v2674
  %v3007 = vunpack.c.h.b16 %v2674
  %v3008 = vunpack.c.l.b16 %v2675
  %v3009 = vunpack.c.h.b16 %v2675
  %v3010 = vunpack.c.l.b16 %v2676
  %v3011 = vunpack.c.h.b16 %v2676
  %v3012 = vunpack.c.l.b16 %v2677
  %v3013 = vunpack.c.h.b16 %v2677
  %v3014 = vunpack.c.l.b16 %v2678
  %v3015 = vunpack.c.h.b16 %v2678
  %v3016 = vunpack.c.l.b16 %v2679
  %v3017 = vunpack.c.h.b16 %v2679
  %v3018 = vunpack.c.l.b16 %v2680
  %v3019 = vunpack.c.h.b16 %v2680
  %v3020 = vunpack.c.l.b16 %v2681
  %v3021 = vunpack.c.h.b16 %v2681
  %v3022 = vunpack.c.l.b16 %v2682
  %v3023 = vunpack.c.h.b16 %v2682
  %v3024 = vunpack.c.l.b16 %v2683
  %v3025 = vunpack.c.h.b16 %v2683
  %v3026 = vunpack.c.l.b16 %v2684
  %v3027 = vunpack.c.h.b16 %v2684
  %v3028 = vunpack.c.l.b16 %v2685
  %v3029 = vunpack.c.h.b16 %v2685
  %v3030 = vunpack.c.l.b16 %v2686
  %v3031 = vunpack.c.h.b16 %v2686
  %v3032 = vunpack.c.l.b16 %v2687
  %v3033 = vunpack.c.h.b16 %v2687
  %v3034 = vunpack.c.l.b16 %v2688
  %v3035 = vunpack.c.h.b16 %v2688
  %v3036 = vunpack.c.l.b16 %v2689
  %v3037 = vunpack.c.h.b16 %v2689
  %v3038 = vunpack.c.l.b16 %v2690
  %v3039 = vunpack.c.h.b16 %v2690
  %v3040 = vunpack.c.l.b16 %v2691
  %v3041 = vunpack.c.h.b16 %v2691
  %v3042 = vunpack.c.l.b16 %v2692
  %v3043 = vunpack.c.h.b16 %v2692
  %v3044 = vunpack.c.l.b16 %v2693
  %v3045 = vunpack.c.h.b16 %v2693
  %v3046 = vunpack.c.l.b16 %v2694
  %v3047 = vunpack.c.h.b16 %v2694
  %v3048 = vunpack.c.l.b16 %v2695
  %v3049 = vunpack.c.h.b16 %v2695
  %v3050 = vunpack.c.l.b16 %v2696
  %v3051 = vunpack.c.h.b16 %v2696
  %v3052 = vunpack.c.l.b16 %v2697
  %v3053 = vunpack.c.h.b16 %v2697
  %v3054 = vunpack.c.l.b16 %v2698
  %v3055 = vunpack.c.h.b16 %v2698
  %v3056 = vunpack.c.l.b16 %v2699
  %v3057 = vunpack.c.h.b16 %v2699
  %v3058 = vunpack.c.l.b16 %v2700
  %v3059 = vunpack.c.h.b16 %v2700
  %v3060 = vunpack.c.l.b16 %v2701
  %v3061 = vunpack.c.h.b16 %v2701
  %v3062 = vunpack.c.l.b16 %v2702
  %v3063 = vunpack.c.h.b16 %v2702
  %v3064 = vunpack.c.l.b16 %v2703
  %v3065 = vunpack.c.h.b16 %v2703
  %v3066 = vunpack.c.l.b16 %v2704
  %v3067 = vunpack.c.h.b16 %v2704
  %v3068 = vunpack.c.l.b16 %v2705
  %v3069 = vunpack.c.h.b16 %v2705
  %v3070 = vunpack.c.l.b16 %v2706
  %v3071 = vunpack.c.h.b16 %v2706
  %v3072 = vunpack.c.l.b16 %v2707
  %v3073 = vunpack.c.h.b16 %v2707
  %v3074 = vunpack.c.l.b16 %v2708
  %v3075 = vunpack.c.h.b16 %v2708
  %v3076 = vunpack.c.l.b16 %v2709
  %v3077 = vunpack.c.h.b16 %v2709
  %v3078 = vunpack.c.l.b16 %v2710
  %v3079 = vunpack.c.h.b16 %v2710
  %v3080 = vunpack.c.l.b16 %v2711
  %v3081 = vunpack.c.h.b16 %v2711
  %v3082 = vunpack.c.l.b16 %v2712
  %v3083 = vunpack.c.h.b16 %v2712
  %v3084 = vunpack.c.l.b16 %v2713
  %v3085 = vunpack.c.h.b16 %v2713
  %v3086 = vunpack.c.l.b16 %v2714
  %v3087 = vunpack.c.h.b16 %v2714
  %v3088 = vunpack.c.l.b16 %v2715
  %v3089 = vunpack.c.h.b16 %v2715
  %v3090 = vunpack.c.l.b16 %v2716
  %v3091 = vunpack.c.h.b16 %v2716
  %v3092 = vunpack.c.l.b16 %v2717
  %v3093 = vunpack.c.h.b16 %v2717
  %v3094 = vunpack.c.l.b16 %v2718
  %v3095 = vunpack.c.h.b16 %v2718
  %v3096 = vunpack.c.l.b16 %v2719
  %v3097 = vunpack.c.h.b16 %v2719
  %v3098 = vunpack.c.l.b16 %v2720
  %v3099 = vunpack.c.h.b16 %v2720
  %v3100 = vunpack.c.l.b16 %v2721
  %v3101 = vunpack.c.h.b16 %v2721
  %v3102 = vunpack.c.l.b16 %v2722
  %v3103 = vunpack.c.h.b16 %v2722
  %v3104 = vunpack.c.l.b16 %v2723
  %v3105 = vunpack.c.h.b16 %v2723
  %v3106 = vunpack.c.l.b16 %v2724
  %v3107 = vunpack.c.h.b16 %v2724
  %v3108 = vunpack.c.l.b16 %v2725
  %v3109 = vunpack.c.h.b16 %v2725
  %v3110 = vunpack.c.l.b16 %v2726
  %v3111 = vunpack.c.h.b16 %v2726
  %v3112 = vunpack.c.l.b16 %v2727
  %v3113 = vunpack.c.h.b16 %v2727
  %v3114 = vunpack.c.l.b16 %v2728
  %v3115 = vunpack.c.h.b16 %v2728
  %v3116 = vunpack.c.l.b16 %v2729
  %v3117 = vunpack.c.h.b16 %v2729
  %v3118 = vunpack.c.l.b16 %v2730
  %v3119 = vunpack.c.h.b16 %v2730
  %v3120 = vunpack.c.l.b16 %v2731
  %v3121 = vunpack.c.h.b16 %v2731
  %v3122 = vunpack.c.l.b16 %v2732
  %v3123 = vunpack.c.h.b16 %v2732
  %v3124 = vunpack.c.l.b16 %v2733
  %v3125 = vunpack.c.h.b16 %v2733
  %v3126 = vunpack.c.l.b16 %v2734
  %v3127 = vunpack.c.h.b16 %v2734
  %v3128 = vunpack.c.l.b16 %v2735
  %v3129 = vunpack.c.h.b16 %v2735
  %v3130 = vunpack.c.l.b16 %v2736
  %v3131 = vunpack.c.h.b16 %v2736
  %v3132 = vunpack.c.l.b16 %v2737
  %v3133 = vunpack.c.h.b16 %v2737
  %v3134 = vpack.c.b16 %v2880, %v2878
  %v3135 = vpack.c.b16 %v2881, %v2879
  %v3136 = vpack.c.b16 %v2884, %v2882
  %v3137 = vpack.c.b16 %v2885, %v2883
  %v3138 = vpack.c.b16 %v2888, %v2886
  %v3139 = vpack.c.b16 %v2889, %v2887
  %v3140 = vpack.c.b16 %v2892, %v2890
  %v3141 = vpack.c.b16 %v2893, %v2891
  %v3142 = vpack.c.b16 %v2896, %v2894
  %v3143 = vpack.c.b16 %v2897, %v2895
  %v3144 = vpack.c.b16 %v2900, %v2898
  %v3145 = vpack.c.b16 %v2901, %v2899
  %v3146 = vpack.c.b16 %v2904, %v2902
  %v3147 = vpack.c.b16 %v2905, %v2903
  %v3148 = vpack.c.b16 %v2908, %v2906
  %v3149 = vpack.c.b16 %v2909, %v2907
  %v3150 = vpack.c.b16 %v2912, %v2910
  %v3151 = vpack.c.b16 %v2913, %v2911
  %v3152 = vpack.c.b16 %v2916, %v2914
  %v3153 = vpack.c.b16 %v2917, %v2915
  %v3154 = vpack.c.b16 %v2920, %v2918
  %v3155 = vpack.c.b16 %v2921, %v2919
  %v3156 = vpack.c.b16 %v2924, %v2922
  %v3157 = vpack.c.b16 %v2925, %v2923
  %v3158 = vpack.c.b16 %v2928, %v2926
  %v3159 = vpack.c.b16 %v2929, %v2927
  %v3160 = vpack.c.b16 %v2932, %v2930
  %v3161 = vpack.c.b16 %v2933, %v2931
  %v3162 = vpack.c.b16 %v2936, %v2934
  %v3163 = vpack.c.b16 %v2937, %v2935
  %v3164 = vpack.c.b16 %v2940, %v2938
  %v3165 = vpack.c.b16 %v2941, %v2939
  %v3166 = vpack.c.b16 %v2944, %v2942
  %v3167 = vpack.c.b16 %v2945, %v2943
  %v3168 = vpack.c.b16 %v2948, %v2946
  %v3169 = vpack.c.b16 %v2949, %v2947
  %v3170 = vpack.c.b16 %v2952, %v2950
  %v3171 = vpack.c.b16 %v2953, %v2951
  %v3172 = vpack.c.b16 %v2956, %v2954
  %v3173 = vpack.c.b16 %v2957, %v2955
  %v3174 = vpack.c.b16 %v2960, %v2958
  %v3175 = vpack.c.b16 %v2961, %v2959
  %v3176 = vpack.c.b16 %v2964, %v2962
  %v3177 = vpack.c.b16 %v2965, %v2963
  %v3178 = vpack.c.b16 %v2968, %v2966
  %v3179 = vpack.c.b16 %v2969, %v2967
  %v3180 = vpack.c.b16 %v2972, %v2970
  %v3181 = vpack.c.b16 %v2973, %v2971
  %v3182 = vpack.c.b16 %v2976, %v2974
  %v3183 = vpack.c.b16 %v2977, %v2975
  %v3184 = vpack.c.b16 %v2980, %v2978
  %v3185 = vpack.c.b16 %v2981, %v2979
  %v3186 = vpack.c.b16 %v2984, %v2982
  %v3187 = vpack.c.b16 %v2985, %v2983
  %v3188 = vpack.c.b16 %v2988, %v2986
  %v3189 = vpack.c.b16 %v2989, %v2987
  %v3190 = vpack.c.b16 %v2992, %v2990
  %v3191 = vpack.c.b16 %v2993, %v2991
  %v3192 = vpack.c.b16 %v2996, %v2994
  %v3193 = vpack.c.b16 %v2997, %v2995
  %v3194 = vpack.c.b16 %v3000, %v2998
  %v3195 = vpack.c.b16 %v3001, %v2999
  %v3196 = vpack.c.b16 %v3004, %v3002
  %v3197 = vpack.c.b16 %v3005, %v3003
  %v3198 = vpack.c.b16 %v3008, %v3006
  %v3199 = vpack.c.b16 %v3009, %v3007
  %v3200 = vpack.c.b16 %v3012, %v3010
  %v3201 = vpack.c.b16 %v3013, %v3011
  %v3202 = vpack.c.b16 %v3016, %v3014
  %v3203 = vpack.c.b16 %v3017, %v3015
  %v3204 = vpack.c.b16 %v3020, %v3018
  %v3205 = vpack.c.b16 %v3021, %v3019
  %v3206 = vpack.c.b16 %v3024, %v3022
  %v3207 = vpack.c.b16 %v3025, %v3023
  %v3208 = vpack.c.b16 %v3028, %v3026
  %v3209 = vpack.c.b16 %v3029, %v3027
  %v3210 = vpack.c.b16 %v3032, %v3030
  %v3211 = vpack.c.b16 %v3033, %v3031
  %v3212 = vpack.c.b16 %v3036, %v3034
  %v3213 = vpack.c.b16 %v3037, %v3035
  %v3214 = vpack.c.b16 %v3040, %v3038
  %v3215 = vpack.c.b16 %v3041, %v3039
  %v3216 = vpack.c.b16 %v3044, %v3042
  %v3217 = vpack.c.b16 %v3045, %v3043
  %v3218 = vpack.c.b16 %v3048, %v3046
  %v3219 = vpack.c.b16 %v3049, %v3047
  %v3220 = vpack.c.b16 %v3052, %v3050
  %v3221 = vpack.c.b16 %v3053, %v3051
  %v3222 = vpack.c.b16 %v3056, %v3054
  %v3223 = vpack.c.b16 %v3057, %v3055
  %v3224 = vpack.c.b16 %v3060, %v3058
  %v3225 = vpack.c.b16 %v3061, %v3059
  %v3226 = vpack.c.b16 %v3064, %v3062
  %v3227 = vpack.c.b16 %v3065, %v3063
  %v3228 = vpack.c.b16 %v3068, %v3066
  %v3229 = vpack.c.b16 %v3069, %v3067
  %v3230 = vpack.c.b16 %v3072, %v3070
  %v3231 = vpack.c.b16 %v3073, %v3071
  %v3232 = vpack.c.b16 %v3076, %v3074
  %v3233 = vpack.c.b16 %v3077, %v3075
  %v3234 = vpack.c.b16 %v3080, %v3078
  %v3235 = vpack.c.b16 %v3081, %v3079
  %v3236 = vpack.c.b16 %v3084, %v3082
  %v3237 = vpack.c.b16 %v3085, %v3083
  %v3238 = vpack.c.b16 %v3088, %v3086
  %v3239 = vpack.c.b16 %v3089, %v3087
  %v3240 = vpack.c.b16 %v3092, %v3090
  %v3241 = vpack.c.b16 %v3093, %v3091
  %v3242 = vpack.c.b16 %v3096, %v3094
  %v3243 = vpack.c.b16 %v3097, %v3095
  %v3244 = vpack.c.b16 %v3100, %v3098
  %v3245 = vpack.c.b16 %v3101, %v3099
  %v3246 = vpack.c.b16 %v3104, %v3102
  %v3247 = vpack.c.b16 %v3105, %v3103
  %v3248 = vpack.c.b16 %v3108, %v3106
  %v3249 = vpack.c.b16 %v3109, %v3107
  %v3250 = vpack.c.b16 %v3112, %v3110
  %v3251 = vpack.c.b16 %v3113, %v3111
  %v3252 = vpack.c.b16 %v3116, %v3114
  %v3253 = vpack.c.b16 %v3117, %v3115
  %v3254 = vpack.c.b16 %v3120, %v3118
  %v3255 = vpack.c.b16 %v3121, %v3119
  %v3256 = vpack.c.b16 %v3124, %v3122
  %v3257 = vpack.c.b16 %v3125, %v3123
  %v3258 = vpack.c.b16 %v3128, %v3126
  %v3259 = vpack.c.b16 %v3129, %v3127
  %v3260 = vpack.c.b16 %v3132, %v3130
  %v3261 = vpack.c.b16 %v3133, %v3131
  %3390 = vmatprep.subr.bf16.mxu0 %v3135
  %3391 = vmatpush1.bf16.msra.mxu0 %v3134
  %3392 = vmatprep.subr.bf16.mxu0 %v3137
  %3393 = vmatpush1.bf16.msra.mxu0 %v3136
  %3394 = vmatprep.subr.bf16.mxu0 %v3139
  %3395 = vmatpush1.bf16.msra.mxu0 %v3138
  %3396 = vmatprep.subr.bf16.mxu0 %v3141
  %3397 = vmatpush1.bf16.msra.mxu0 %v3140
  %3398 = vmatprep.subr.bf16.mxu0 %v3143
  %3399 = vmatpush1.bf16.msra.mxu0 %v3142
  %3400 = vmatprep.subr.bf16.mxu0 %v3145
  %3401 = vmatpush1.bf16.msra.mxu0 %v3144
  %3402 = vmatprep.subr.bf16.mxu0 %v3147
  %3403 = vmatpush1.bf16.msra.mxu0 %v3146
  %3404 = vmatprep.subr.bf16.mxu0 %v3149
  %3405 = vmatpush1.bf16.msra.mxu0 %v3148
  %3406 = vmatprep.subr.bf16.mxu0 %v3151
  %3407 = vmatpush1.bf16.msra.mxu0 %v3150
  %3408 = vmatprep.subr.bf16.mxu0 %v3153
  %3409 = vmatpush1.bf16.msra.mxu0 %v3152
  %3410 = vmatprep.subr.bf16.mxu0 %v3155
  %3411 = vmatpush1.bf16.msra.mxu0 %v3154
  %3412 = vmatprep.subr.bf16.mxu0 %v3157
  %3413 = vmatpush1.bf16.msra.mxu0 %v3156
  %3414 = vmatprep.subr.bf16.mxu0 %v3159
  %3415 = vmatpush1.bf16.msra.mxu0 %v3158
  %3416 = vmatprep.subr.bf16.mxu0 %v3161
  %3417 = vmatpush1.bf16.msra.mxu0 %v3160
  %3418 = vmatprep.subr.bf16.mxu0 %v3163
  %3419 = vmatpush1.bf16.msra.mxu0 %v3162
  %3420 = vmatprep.subr.bf16.mxu0 %v3165
  %3421 = vmatpush1.bf16.msra.mxu0 %v3164
  %3422 = vmatprep.mubr.bf16.mxu0 %v2603
  %3423 = vmatmul.mubr.bf16.gmra.mrb[0].mxu0 %v2602
  %v3424 = vpop.f32.mrb[0].mxu0
  %v3425 = vadd.f32 %v2743, %v3424
  %v3426 = vpop.f32.mrb[0].mxu0
  %v3427 = vadd.f32 %v2747, %v3426
  %v3428 = vpop.f32.mrb[0].mxu0
  %v3429 = vpop.f32.mrb[0].mxu0
  %3430 = vdwg.mxu0
  %3431 = vmatprep.subr.bf16.mxu0 %v3167
  %3432 = vmatpush1.bf16.msra.mxu0 %v3166
  %3433 = vmatprep.subr.bf16.mxu0 %v3169
  %3434 = vmatpush1.bf16.msra.mxu0 %v3168
  %3435 = vmatprep.subr.bf16.mxu0 %v3171
  %3436 = vmatpush1.bf16.msra.mxu0 %v3170
  %3437 = vmatprep.subr.bf16.mxu0 %v3173
  %3438 = vmatpush1.bf16.msra.mxu0 %v3172
  %3439 = vmatprep.subr.bf16.mxu0 %v3175
  %3440 = vmatpush1.bf16.msra.mxu0 %v3174
  %3441 = vmatprep.subr.bf16.mxu0 %v3177
  %3442 = vmatpush1.bf16.msra.mxu0 %v3176
  %3443 = vmatprep.subr.bf16.mxu0 %v3179
  %3444 = vmatpush1.bf16.msra.mxu0 %v3178
  %3445 = vmatprep.subr.bf16.mxu0 %v3181
  %3446 = vmatpush1.bf16.msra.mxu0 %v3180
  %3447 = vmatprep.subr.bf16.mxu0 %v3183
  %3448 = vmatpush1.bf16.msra.mxu0 %v3182
  %3449 = vmatprep.subr.bf16.mxu0 %v3185
  %3450 = vmatpush1.bf16.msra.mxu0 %v3184
  %3451 = vmatprep.subr.bf16.mxu0 %v3187
  %3452 = vmatpush1.bf16.msra.mxu0 %v3186
  %3453 = vmatprep.subr.bf16.mxu0 %v3189
  %3454 = vmatpush1.bf16.msra.mxu0 %v3188
  %3455 = vmatprep.subr.bf16.mxu0 %v3191
  %3456 = vmatpush1.bf16.msra.mxu0 %v3190
  %3457 = vmatprep.subr.bf16.mxu0 %v3193
  %3458 = vmatpush1.bf16.msra.mxu0 %v3192
  %3459 = vmatprep.subr.bf16.mxu0 %v3195
  %3460 = vmatpush1.bf16.msra.mxu0 %v3194
  %3461 = vmatprep.subr.bf16.mxu0 %v3197
  %3462 = vmatpush1.bf16.msra.mxu0 %v3196
  %3463 = vmatprep.mubr.bf16.mxu0 %v2605
  %3464 = vmatmul.mubr.bf16.gmra.mrb[0].mxu0 %v2604
  %v3465 = vpop.f32.mrb[0].mxu0
  %v3466 = vadd.f32 %v3425, %v3465
  %v3467 = vpop.f32.mrb[0].mxu0
  %v3468 = vadd.f32 %v3427, %v3467
  %v3469 = vpop.f32.mrb[0].mxu0
  %v3470 = vpop.f32.mrb[0].mxu0
  %3471 = vdwg.mxu0
  %3472 = vmatprep.subr.bf16.mxu0 %v3199
  %3473 = vmatpush1.bf16.msra.mxu0 %v3198
  %3474 = vmatprep.subr.bf16.mxu0 %v3201
  %3475 = vmatpush1.bf16.msra.mxu0 %v3200
  %3476 = vmatprep.subr.bf16.mxu0 %v3203
  %3477 = vmatpush1.bf16.msra.mxu0 %v3202
  %3478 = vmatprep.subr.bf16.mxu0 %v3205
  %3479 = vmatpush1.bf16.msra.mxu0 %v3204
  %3480 = vmatprep.subr.bf16.mxu0 %v3207
  %3481 = vmatpush1.bf16.msra.mxu0 %v3206
  %3482 = vmatprep.subr.bf16.mxu0 %v3209
  %3483 = vmatpush1.bf16.msra.mxu0 %v3208
  %3484 = vmatprep.subr.bf16.mxu0 %v3211
  %3485 = vmatpush1.bf16.msra.mxu0 %v3210
  %3486 = vmatprep.subr.bf16.mxu0 %v3213
  %3487 = vmatpush1.bf16.msra.mxu0 %v3212
  %3488 = vmatprep.subr.bf16.mxu0 %v3215
  %3489 = vmatpush1.bf16.msra.mxu0 %v3214
  %3490 = vmatprep.subr.bf16.mxu0 %v3217
  %3491 = vmatpush1.bf16.msra.mxu0 %v3216
  %3492 = vmatprep.subr.bf16.mxu0 %v3219
  %3493 = vmatpush1.bf16.msra.mxu0 %v3218
  %3494 = vmatprep.subr.bf16.mxu0 %v3221
  %3495 = vmatpush1.bf16.msra.mxu0 %v3220
  %3496 = vmatprep.subr.bf16.mxu0 %v3223
  %3497 = vmatpush1.bf16.msra.mxu0 %v3222
  %3498 = vmatprep.subr.bf16.mxu0 %v3225
  %3499 = vmatpush1.bf16.msra.mxu0 %v3224
  %3500 = vmatprep.subr.bf16.mxu0 %v3227
  %3501 = vmatpush1.bf16.msra.mxu0 %v3226
  %3502 = vmatprep.subr.bf16.mxu0 %v3229
  %3503 = vmatpush1.bf16.msra.mxu0 %v3228
  %3504 = vmatprep.mubr.bf16.mxu0 %v2607
  %3505 = vmatmul.mubr.bf16.gmra.mrb[0].mxu0 %v2606
  %v3506 = vpop.f32.mrb[0].mxu0
  %v3507 = vadd.f32 %v3466, %v3506
  %v3508 = vpop.f32.mrb[0].mxu0
  %v3509 = vadd.f32 %v3468, %v3508
  %v3510 = vpop.f32.mrb[0].mxu0
  %v3511 = vpop.f32.mrb[0].mxu0
  %3512 = vdwg.mxu0
  %3513 = vmatprep.subr.bf16.mxu0 %v3231
  %3514 = vmatpush1.bf16.msra.mxu0 %v3230
  %3515 = vmatprep.subr.bf16.mxu0 %v3233
  %3516 = vmatpush1.bf16.msra.mxu0 %v3232
  %3517 = vmatprep.subr.bf16.mxu0 %v3235
  %3518 = vmatpush1.bf16.msra.mxu0 %v3234
  %3519 = vmatprep.subr.bf16.mxu0 %v3237
  %3520 = vmatpush1.bf16.msra.mxu0 %v3236
  %3521 = vmatprep.subr.bf16.mxu0 %v3239
  %3522 = vmatpush1.bf16.msra.mxu0 %v3238
  %3523 = vmatprep.subr.bf16.mxu0 %v3241
  %3524 = vmatpush1.bf16.msra.mxu0 %v3240
  %3525 = vmatprep.subr.bf16.mxu0 %v3243
  %3526 = vmatpush1.bf16.msra.mxu0 %v3242
  %3527 = vmatprep.subr.bf16.mxu0 %v3245
  %3528 = vmatpush1.bf16.msra.mxu0 %v3244
  %3529 = vmatprep.subr.bf16.mxu0 %v3247
  %3530 = vmatpush1.bf16.msra.mxu0 %v3246
  %3531 = vmatprep.subr.bf16.mxu0 %v3249
  %3532 = vmatpush1.bf16.msra.mxu0 %v3248
  %3533 = vmatprep.subr.bf16.mxu0 %v3251
  %3534 = vmatpush1.bf16.msra.mxu0 %v3250
  %3535 = vmatprep.subr.bf16.mxu0 %v3253
  %3536 = vmatpush1.bf16.msra.mxu0 %v3252
  %3537 = vmatprep.subr.bf16.mxu0 %v3255
  %3538 = vmatpush1.bf16.msra.mxu0 %v3254
  %3539 = vmatprep.subr.bf16.mxu0 %v3257
  %3540 = vmatpush1.bf16.msra.mxu0 %v3256
  %3541 = vmatprep.subr.bf16.mxu0 %v3259
  %3542 = vmatpush1.bf16.msra.mxu0 %v3258
  %3543 = vmatprep.subr.bf16.mxu0 %v3261
  %3544 = vmatpush1.bf16.msra.mxu0 %v3260
  %3545 = vmatprep.mubr.bf16.mxu0 %v2609
  %3546 = vmatmul.mubr.bf16.gmra.mrb[0].mxu0 %v2608
  %v3547 = vpop.f32.mrb[0].mxu0
  %v3548 = vadd.f32 %v3507, %v3547
  %v3549 = vpop.f32.mrb[0].mxu0
  %v3550 = vadd.f32 %v3509, %v3549
  %v3551 = vpop.f32.mrb[0].mxu0
  %v3552 = vpop.f32.mrb[0].mxu0
  %3553 = vdwg.mxu0
  %v3554 = vmul.f32 %v3548, 0.5
  %v3555 = vmul.f32 %v3550, 0.5
  %v3556 = vtanh.pop %v3554
  %v3557 = vtanh.pop %v3555
  %v3558 = vmul.f32 %v3556, 0.5
  %v3559 = vmul.f32 %v3557, 0.5
  %v3560 = vadd.f32 %v3558, 0.5
  %v3561 = vadd.f32 %v3559, 0.5
  %3562 = vst [vmem:[%s12] sm:$0xff] %v3560
  %3563 = vst [vmem:[%s12 + $0x8] sm:$0xff] %v3561
  // Predicated region
  $region46: #{decoder_forward.1} parent=0 // pred_check
    _
  $region47: #{decoder_forward.1} parent=0 // pred_check_branch
    %3565 = sbr.rel (0) target = $region49
  $region48: #{decoder_forward.1} parent=0 // pred_region
    _
  $region49: #{decoder_forward.1} parent=0 // pred_fallthru
    _
  // Predicated region
  $region50: #{decoder_forward.1} parent=0 // pred_check
    _
  $region51: #{decoder_forward.1} parent=0 // pred_check_branch
    %3567 = sbr.rel (0) target = $region53
  $region52: #{decoder_forward.1} parent=0 // pred_region
    _
  $region53: #{decoder_forward.1} parent=0 // pred_fallthru
    _
  // Predicated region
  $region54: #{decoder_forward.1} parent=0 // pred_check
    _
  $region55: #{decoder_forward.1} parent=0 // pred_check_branch
    %3569 = sbr.rel (0) target = $region57
  $region56: #{decoder_forward.1} parent=0 // pred_region
    _
  $region57: #{decoder_forward.1} parent=0 // pred_fallthru
    _
  // Predicated region
  $region58: #{decoder_forward.1} parent=0 // pred_check
    _
  $region59: #{decoder_forward.1} parent=0 // pred_check_branch
    %3571 = sbr.rel (0) target = $region61
  $region60: #{decoder_forward.1} parent=0 // pred_region
    _
  $region61: #{decoder_forward.1} parent=0 // pred_fallthru
    _

</llo_original>
